<compile_context>
chip_gen: v5e
topology: v5e:2x2
jax: 0.10.0
libtpu: 0.0.40
codegen_flags: <defaults>
</compile_context>

<pallas_src>
import jax
import jax.numpy as jnp
from jax.experimental import pallas as pl
from jax.experimental.pallas import tpu as pltpu


def _round_up(x, m):
    return ((x + m - 1) // m) * m


def _make_fused_kernel(num_views, proj_dim, tile_rows, batch_rows, mxu_precision):
    """Projection + fused down-projection partials + batched score head."""
    V, D = num_views, proj_dim
    HIGHEST = jax.lax.Precision.HIGHEST

    def kernel(*refs):
        xs = refs[0:V]                               # V x [tm, dim_v]
        wps = refs[V:2 * V]                          # V x [dim_v, D]
        bps = refs[2 * V:3 * V]                      # V x [1, D]     (f32)
        w1_ref, b1_ref, w2_ref, wd_ref = refs[3 * V:3 * V + 4]
        u_ref = refs[3 * V + 4]                      # [tm, V*D]  lane-dense
        score_ref = refs[3 * V + 5]                  # [8, 128]   lane-dense

        w1 = w1_ref[...]
        b1 = b1_ref[...]
        w2 = w2_ref[...]

        p_norm = []
        for v in range(V):
            # Per-view projection on the MXU, f32 accumulation.
            p = jnp.dot(xs[v][...], wps[v][...],
                        preferred_element_type=jnp.float32,
                        precision=mxu_precision) + bps[v][...]

            # Fused down-projection partial u_v = p_v @ Wd_v, computed while
            # p_v is resident; beta is applied after the cross-batch softmax
            # outside the kernel (down = sum_v beta_v * u_v + bd).
            u_v = jnp.dot(p.astype(u_ref.dtype), wd_ref[v * D:(v + 1) * D, :],
                          preferred_element_type=jnp.float32,
                          precision=mxu_precision)
            u_ref[:, v * D:(v + 1) * D] = u_v.astype(u_ref.dtype)

            # F.normalize(p, dim=-1), eps=1e-12, as a single EUP rsqrt.
            sumsq = jnp.sum(p * p, axis=-1, keepdims=True)
            p_norm.append(p * jax.lax.rsqrt(jnp.maximum(sumsq, 1e-24)))

        # Score head batched over views: one [V*tm, D] @ [D, D] matmul
        # (keeps M large so the 256-wide MXU on v6e/v7x is better utilized).
        pn_all = jnp.concatenate(p_norm, axis=0)                 # [V*tm, D]
        h = jnp.tanh(jnp.dot(pn_all, w1, preferred_element_type=jnp.float32,
                             precision=HIGHEST) + b1)
        s_all = jnp.sum(h * w2, axis=-1, keepdims=True)          # [V*tm, 1]

        # Masked per-tile partial sums of the per-view scores, written as ONE
        # lane-dense [8, 128] block (cols 0..V-1 used).  Rows >= batch_rows
        # (8-pad + partial-block overhang) are masked out here so the host
        # side batch mean stays exact.
        row0 = pl.program_id(0) * tile_rows
        rid = jax.lax.broadcasted_iota(jnp.int32, (tile_rows, 1), 0) + row0
        valid = rid < batch_rows
        col = jax.lax.broadcasted_iota(jnp.int32, (8, 128), 1)
        blk = jnp.zeros((8, 128), jnp.float32)
        for v in range(V):
            s_v = jnp.where(valid, s_all[v * tile_rows:(v + 1) * tile_rows, :], 0.0)
            blk = jnp.where(col == v, jnp.sum(s_v), blk)
        score_ref[...] = blk

    return kernel


def attentional_view_aggregator_coeff(outputs, proj_ws, proj_bs, w1, b1, w2,
                                      wd, bd, *, block_rows=512,
                                      dtype=jnp.float32):
    """AttentionalViewAggregator forward, arch_type='coeff'.

    outputs : list of V arrays [B, dim_v]
    proj_ws : list of V arrays [dim_v, D]   (torch Linear weight, transposed)
    proj_bs : list of V arrays [D]
    w1, b1  : [D, D], [D]                   (w_before_mean[0], transposed)
    w2      : [D]                           (w_before_mean[2], Linear(D,1))
    wd, bd  : [V*D, D], [D]                 (down_project, transposed)
    dtype   : jnp.float32 (exact, precision=HIGHEST) or jnp.bfloat16
              (half the HBM traffic; MXU still accumulates in f32)
    returns (down_logits [B, D] f32, coeffs [V] f32)
    """
    V = len(outputs)
    B = outputs[0].shape[0]
    D = proj_ws[0].shape[1]
    dims = [int(x.shape[1]) for x in outputs]

    # Pad rows only to a multiple of 8 sublanes (no-op for typical batches);
    # non-dividing tiles are handled with Pallas partial blocks + in-kernel
    # row masking instead of a full pad-to-tile HBM pass.
    pad8 = _round_up(B, 8)
    tm = min(_round_up(block_rows, 8), pad8)
    if pad8 >= 16 and pl.cdiv(pad8, tm) < 2:
        # Keep >=2 grid tiles so the "parallel" axis can shard across the two
        # TensorCores of a v7x chip.
        tm = _round_up(pl.cdiv(pad8, 2), 8)
    n_tiles = pl.cdiv(pad8, tm)

    def pad_rows(x):
        if x.shape[0] == pad8:
            return x
        return jnp.pad(x, ((0, pad8 - x.shape[0]), (0, 0)))

    xs = [pad_rows(x).astype(dtype) for x in outputs]
    wps = [w.astype(dtype) for w in proj_ws]
    bps = [b.reshape(1, D).astype(jnp.float32) for b in proj_bs]
    w1_ = w1.astype(jnp.float32)
    b1_ = b1.reshape(1, D).astype(jnp.float32)
    w2_ = w2.reshape(1, D).astype(jnp.float32)
    wd_ = wd.astype(dtype)

    f32_inputs = jnp.dtype(dtype) == jnp.dtype(jnp.float32)
    mxu_prec = (jax.lax.Precision.HIGHEST if f32_inputs
                else jax.lax.Precision.DEFAULT)

    def row_spec(bs):                       # advances with the batch tile
        return pl.BlockSpec(bs, lambda i: (i, 0))

    def pin_spec(bs):                       # weights pinned across all tiles
        return pl.BlockSpec(bs, lambda i: (0, 0))

    in_specs = ([row_spec((tm, d)) for d in dims]
                + [pin_spec((d, D)) for d in dims]
                + [pin_spec((1, D)) for _ in range(V)]
                + [pin_spec((D, D)), pin_spec((1, D)), pin_spec((1, D)),
                   pin_spec((V * D, D))])

    out_shape = (jax.ShapeDtypeStruct((pad8, V * D), dtype),
                 jax.ShapeDtypeStruct((n_tiles * 8, 128), jnp.float32))
    out_specs = (row_spec((tm, V * D)),
                 pl.BlockSpec((8, 128), lambda i: (i, 0)))

    u, score_parts = pl.pallas_call(
        _make_fused_kernel(V, D, tm, B, mxu_prec),
        out_shape=out_shape,
        grid=(n_tiles,),
        in_specs=in_specs,
        out_specs=out_specs,
        compiler_params=pltpu.CompilerParams(
            dimension_semantics=("parallel",)),
    )(*xs, *wps, *bps, w1_, b1_, w2_, wd_)

    # Tiny V-wide work with a full-batch dependency: mean of the masked
    # per-tile partial sums, softmax over views, and the beta-weighted sum of
    # the already-down-projected per-view partials.
    w_mean = jnp.sum(score_parts.reshape(n_tiles, 8, 128)[:, 0, :V], axis=0) / B
    beta = jax.nn.softmax(w_mean)                                 # [V]

    u_f32 = u[:B].astype(jnp.float32).reshape(B, V, D)
    down = jnp.sum(beta[None, :, None] * u_f32, axis=1) + bd.astype(jnp.float32)
    return down, beta


def _reference(outputs, proj_ws, proj_bs, w1, b1, w2, wd, bd):
    """Pure-JAX reference of the 'coeff' forward."""
    projs = [x @ w + b for x, w, b in zip(outputs, proj_ws, proj_bs)]
    combined = jnp.stack(projs, axis=1)                          # [B, V, D]
    norm = jnp.sqrt(jnp.sum(combined * combined, axis=-1, keepdims=True))
    tmp = combined / jnp.maximum(norm, 1e-12)
    h = jnp.tanh(jnp.einsum("bvd,de->bve", tmp, w1) + b1)
    s = jnp.einsum("bvd,d->bv", h, w2)                           # [B, V]
    beta = jax.nn.softmax(jnp.mean(s, axis=0))                   # [V]
    logits = beta[None, :, None] * combined
    flat = logits.reshape(combined.shape[0], -1)
    down = flat @ wd + bd
    return down, beta


if __name__ == "__main__":
    jax.config.update("jax_default_matmul_precision", "highest")

    key = jax.random.PRNGKey(0)
    B = 20                       # deliberately not a multiple of the row tile
    dim_list = [256, 192, 128]   # heterogeneous per-view embedding widths
    V = len(dim_list)
    D = min(dim_list)            # projection dim = 128 -> lane-dense outputs

    keys = jax.random.split(key, 3 * V + 4)
    outputs = [jax.random.normal(keys[v], (B, d), dtype=jnp.float32)
               for v, d in enumerate(dim_list)]
    proj_ws = [jax.random.normal(keys[V + v], (d, D), jnp.float32) / jnp.sqrt(d)
               for v, d in enumerate(dim_list)]
    proj_bs = [jax.random.normal(keys[2 * V + v], (D,), jnp.float32) * 0.02
               for v in range(V)]
    w1 = jax.random.normal(keys[3 * V + 0], (D, D), jnp.float32) / jnp.sqrt(D)
    b1 = jnp.zeros((D,), jnp.float32)
    w2 = jax.random.normal(keys[3 * V + 1], (D,), jnp.float32) / jnp.sqrt(D)
    wd = jax.random.normal(keys[3 * V + 2], (V * D, D), jnp.float32) / jnp.sqrt(V * D)
    bd = jax.random.normal(keys[3 * V + 3], (D,), jnp.float32) * 0.02

    down_ref, coeffs_ref = _reference(outputs, proj_ws, proj_bs, w1, b1, w2, wd, bd)

    # 1) f32 path, block_rows=8 exercises the multi-tile (grid=3) pipeline at
    #    these toy shapes; precision=HIGHEST in-kernel -> tight parity.
    down, coeffs = attentional_view_aggregator_coeff(
        outputs, proj_ws, proj_bs, w1, b1, w2, wd, bd,
        block_rows=8, dtype=jnp.float32)
    jax.block_until_ready(down)

    assert down.shape == (B, D) and coeffs.shape == (V,)
    assert jnp.allclose(coeffs, coeffs_ref, atol=1e-4, rtol=1e-4), "coeffs mismatch"
    assert jnp.allclose(down, down_ref, atol=1e-4, rtol=1e-4), "down_logits mismatch"

    # 2) bf16 production-style path (default block_rows; the >=2-tile clamp
    #    plus the 8-row pad gives a partial last block handled in-kernel).
    down_bf, coeffs_bf = attentional_view_aggregator_coeff(
        outputs, proj_ws, proj_bs, w1, b1, w2, wd, bd,
        dtype=jnp.bfloat16)
    jax.block_until_ready(down_bf)

    assert down_bf.shape == (B, D) and coeffs_bf.shape == (V,)
    assert jnp.allclose(coeffs_bf, coeffs_ref, atol=2e-2, rtol=2e-2), "bf16 coeffs mismatch"
    assert jnp.allclose(down_bf, down_ref, atol=5e-2, rtol=5e-2), "bf16 down_logits mismatch"

    print("KERNEL_OK")
</pallas_src>

<mosaic_0001>
module attributes {stable_mosaic.version = 11 : i64} {
  func.func @kernel(%arg0: i32, %arg1: memref<8x256xf32, #tpu.memory_space<vmem>>, %arg2: memref<8x192xf32, #tpu.memory_space<vmem>>, %arg3: memref<8x128xf32, #tpu.memory_space<vmem>>, %arg4: memref<256x128xf32, #tpu.memory_space<vmem>>, %arg5: memref<192x128xf32, #tpu.memory_space<vmem>>, %arg6: memref<128x128xf32, #tpu.memory_space<vmem>>, %arg7: memref<1x128xf32, #tpu.memory_space<vmem>>, %arg8: memref<1x128xf32, #tpu.memory_space<vmem>>, %arg9: memref<1x128xf32, #tpu.memory_space<vmem>>, %arg10: memref<128x128xf32, #tpu.memory_space<vmem>>, %arg11: memref<1x128xf32, #tpu.memory_space<vmem>>, %arg12: memref<1x128xf32, #tpu.memory_space<vmem>>, %arg13: memref<384x128xf32, #tpu.memory_space<vmem>>, %arg14: memref<8x384xf32, #tpu.memory_space<vmem>>, %arg15: memref<8x128xf32, #tpu.memory_space<vmem>>) attributes {dimension_semantics = [#tpu.dimension_semantics<parallel>], iteration_bounds = array<i64: 3>, scalar_prefetch = 0 : i64, scratch_operands = 0 : i64, tpu.core_type = #tpu.core_type<tc>, window_params = [{transform_indices = @transform_0, window_bounds = array<i64: 8, 256>}, {transform_indices = @transform_1, window_bounds = array<i64: 8, 192>}, {transform_indices = @transform_2, window_bounds = array<i64: 8, 128>}, {pipeline_mode = #tpu.pipeline_mode<synchronous>, transform_indices = @transform_3, window_bounds = array<i64: 256, 128>}, {pipeline_mode = #tpu.pipeline_mode<synchronous>, transform_indices = @transform_4, window_bounds = array<i64: 192, 128>}, {pipeline_mode = #tpu.pipeline_mode<synchronous>, transform_indices = @transform_5, window_bounds = array<i64: 128, 128>}, {pipeline_mode = #tpu.pipeline_mode<synchronous>, transform_indices = @transform_6, window_bounds = array<i64: 1, 128>}, {pipeline_mode = #tpu.pipeline_mode<synchronous>, transform_indices = @transform_7, window_bounds = array<i64: 1, 128>}, {pipeline_mode = #tpu.pipeline_mode<synchronous>, transform_indices = @transform_8, window_bounds = array<i64: 1, 128>}, {pipeline_mode = #tpu.pipeline_mode<synchronous>, transform_indices = @transform_9, window_bounds = array<i64: 128, 128>}, {pipeline_mode = #tpu.pipeline_mode<synchronous>, transform_indices = @transform_10, window_bounds = array<i64: 1, 128>}, {pipeline_mode = #tpu.pipeline_mode<synchronous>, transform_indices = @transform_11, window_bounds = array<i64: 1, 128>}, {pipeline_mode = #tpu.pipeline_mode<synchronous>, transform_indices = @transform_12, window_bounds = array<i64: 384, 128>}, {transform_indices = @transform_13, window_bounds = array<i64: 8, 384>}, {transform_indices = @transform_14, window_bounds = array<i64: 8, 128>}]} {
    %c0 = arith.constant 0 : index
    %c0_0 = arith.constant 0 : index
    %0 = vector.load %arg10[%c0, %c0_0] : memref<128x128xf32, #tpu.memory_space<vmem>>, vector<128x128xf32>
    %c0_1 = arith.constant 0 : index
    %c0_2 = arith.constant 0 : index
    %1 = vector.load %arg11[%c0_1, %c0_2] : memref<1x128xf32, #tpu.memory_space<vmem>>, vector<1x128xf32>
    %c0_3 = arith.constant 0 : index
    %c0_4 = arith.constant 0 : index
    %2 = vector.load %arg12[%c0_3, %c0_4] : memref<1x128xf32, #tpu.memory_space<vmem>>, vector<1x128xf32>
    %c0_5 = arith.constant 0 : index
    %c0_6 = arith.constant 0 : index
    %3 = vector.load %arg1[%c0_5, %c0_6] : memref<8x256xf32, #tpu.memory_space<vmem>>, vector<8x256xf32>
    %c0_7 = arith.constant 0 : index
    %c0_8 = arith.constant 0 : index
    %4 = vector.load %arg4[%c0_7, %c0_8] : memref<256x128xf32, #tpu.memory_space<vmem>>, vector<256x128xf32>
    %cst = arith.constant dense<0.000000e+00> : vector<8x128xf32>
    %5 = tpu.matmul %3, %4, %cst {dimension_numbers = #tpu.dot_dimension_numbers<[1], [0], [0], [1], [0, 0, 1, 1], [], []>, precision = #tpu.contract_precision<fp32>} : vector<8x256xf32>, vector<256x128xf32>, vector<8x128xf32> -> vector<8x128xf32>
    %c0_9 = arith.constant 0 : index
    %c0_10 = arith.constant 0 : index
    %6 = vector.load %arg7[%c0_9, %c0_10] : memref<1x128xf32, #tpu.memory_space<vmem>>, vector<1x128xf32>
    %7 = vector.broadcast %6 : vector<1x128xf32> to vector<8x128xf32>
    %8 = arith.addf %5, %7 : vector<8x128xf32>
    %c0_11 = arith.constant 0 : index
    %c0_12 = arith.constant 0 : index
    %9 = vector.load %arg13[%c0_11, %c0_12] : memref<384x128xf32, #tpu.memory_space<vmem>>, vector<128x128xf32>
    %cst_13 = arith.constant dense<0.000000e+00> : vector<8x128xf32>
    %10 = tpu.matmul %8, %9, %cst_13 {dimension_numbers = #tpu.dot_dimension_numbers<[1], [0], [0], [1], [0, 0, 1, 1], [], []>, precision = #tpu.contract_precision<fp32>} : vector<8x128xf32>, vector<128x128xf32>, vector<8x128xf32> -> vector<8x128xf32>
    %c0_14 = arith.constant 0 : index
    %c0_15 = arith.constant 0 : index
    %11 = vector.load %arg14[%c0_14, %c0_15] : memref<8x384xf32, #tpu.memory_space<vmem>>, vector<8x128xf32>
    tpu.vector_store %arg14[%c0_14, %c0_15], %10 {strides = array<i32>} : memref<8x384xf32, #tpu.memory_space<vmem>>, vector<8x128xf32>,
    %12 = arith.mulf %8, %8 : vector<8x128xf32>
    %cst_16 = arith.constant dense<0.000000e+00> : vector<8xf32>
    %13 = vector.multi_reduction <add>, %12, %cst_16 [1] : vector<8x128xf32> to vector<8xf32>
    %14 = vector.shape_cast %13 : vector<8xf32> to vector<8x1xf32>
    %cst_17 = arith.constant 1.000000e-24 : f32
    %15 = vector.broadcast %cst_17 : f32 to vector<8x1xf32>
    %16 = arith.maximumf %14, %15 : vector<8x1xf32>
    %17 = math.rsqrt %16 : vector<8x1xf32>
    %18 = vector.broadcast %17 : vector<8x1xf32> to vector<8x128xf32>
    %19 = arith.mulf %8, %18 : vector<8x128xf32>
    %c0_18 = arith.constant 0 : index
    %c0_19 = arith.constant 0 : index
    %20 = vector.load %arg2[%c0_18, %c0_19] : memref<8x192xf32, #tpu.memory_space<vmem>>, vector<8x192xf32>
    %c0_20 = arith.constant 0 : index
    %c0_21 = arith.constant 0 : index
    %21 = vector.load %arg5[%c0_20, %c0_21] : memref<192x128xf32, #tpu.memory_space<vmem>>, vector<192x128xf32>
    %cst_22 = arith.constant dense<0.000000e+00> : vector<8x128xf32>
    %22 = tpu.matmul %20, %21, %cst_22 {dimension_numbers = #tpu.dot_dimension_numbers<[1], [0], [0], [1], [0, 0, 1, 1], [], []>, precision = #tpu.contract_precision<fp32>} : vector<8x192xf32>, vector<192x128xf32>, vector<8x128xf32> -> vector<8x128xf32>
    %c0_23 = arith.constant 0 : index
    %c0_24 = arith.constant 0 : index
    %23 = vector.load %arg8[%c0_23, %c0_24] : memref<1x128xf32, #tpu.memory_space<vmem>>, vector<1x128xf32>
    %24 = vector.broadcast %23 : vector<1x128xf32> to vector<8x128xf32>
    %25 = arith.addf %22, %24 : vector<8x128xf32>
    %c128 = arith.constant 128 : index
    %c0_25 = arith.constant 0 : index
    %26 = vector.load %arg13[%c128, %c0_25] : memref<384x128xf32, #tpu.memory_space<vmem>>, vector<128x128xf32>
    %cst_26 = arith.constant dense<0.000000e+00> : vector<8x128xf32>
    %27 = tpu.matmul %25, %26, %cst_26 {dimension_numbers = #tpu.dot_dimension_numbers<[1], [0], [0], [1], [0, 0, 1, 1], [], []>, precision = #tpu.contract_precision<fp32>} : vector<8x128xf32>, vector<128x128xf32>, vector<8x128xf32> -> vector<8x128xf32>
    %c0_27 = arith.constant 0 : index
    %c128_28 = arith.constant 128 : index
    %28 = vector.load %arg14[%c0_27, %c128_28] : memref<8x384xf32, #tpu.memory_space<vmem>>, vector<8x128xf32>
    tpu.vector_store %arg14[%c0_27, %c128_28], %27 {strides = array<i32>} : memref<8x384xf32, #tpu.memory_space<vmem>>, vector<8x128xf32>,
    %29 = arith.mulf %25, %25 : vector<8x128xf32>
    %cst_29 = arith.constant dense<0.000000e+00> : vector<8xf32>
    %30 = vector.multi_reduction <add>, %29, %cst_29 [1] : vector<8x128xf32> to vector<8xf32>
    %31 = vector.shape_cast %30 : vector<8xf32> to vector<8x1xf32>
    %cst_30 = arith.constant 1.000000e-24 : f32
    %32 = vector.broadcast %cst_30 : f32 to vector<8x1xf32>
    %33 = arith.maximumf %31, %32 : vector<8x1xf32>
    %34 = math.rsqrt %33 : vector<8x1xf32>
    %35 = vector.broadcast %34 : vector<8x1xf32> to vector<8x128xf32>
    %36 = arith.mulf %25, %35 : vector<8x128xf32>
    %c0_31 = arith.constant 0 : index
    %c0_32 = arith.constant 0 : index
    %37 = vector.load %arg3[%c0_31, %c0_32] : memref<8x128xf32, #tpu.memory_space<vmem>>, vector<8x128xf32>
    %c0_33 = arith.constant 0 : index
    %c0_34 = arith.constant 0 : index
    %38 = vector.load %arg6[%c0_33, %c0_34] : memref<128x128xf32, #tpu.memory_space<vmem>>, vector<128x128xf32>
    %cst_35 = arith.constant dense<0.000000e+00> : vector<8x128xf32>
    %39 = tpu.matmul %37, %38, %cst_35 {dimension_numbers = #tpu.dot_dimension_numbers<[1], [0], [0], [1], [0, 0, 1, 1], [], []>, precision = #tpu.contract_precision<fp32>} : vector<8x128xf32>, vector<128x128xf32>, vector<8x128xf32> -> vector<8x128xf32>
    %c0_36 = arith.constant 0 : index
    %c0_37 = arith.constant 0 : index
    %40 = vector.load %arg9[%c0_36, %c0_37] : memref<1x128xf32, #tpu.memory_space<vmem>>, vector<1x128xf32>
    %41 = vector.broadcast %40 : vector<1x128xf32> to vector<8x128xf32>
    %42 = arith.addf %39, %41 : vector<8x128xf32>
    %c256 = arith.constant 256 : index
    %c0_38 = arith.constant 0 : index
    %43 = vector.load %arg13[%c256, %c0_38] : memref<384x128xf32, #tpu.memory_space<vmem>>, vector<128x128xf32>
    %cst_39 = arith.constant dense<0.000000e+00> : vector<8x128xf32>
    %44 = tpu.matmul %42, %43, %cst_39 {dimension_numbers = #tpu.dot_dimension_numbers<[1], [0], [0], [1], [0, 0, 1, 1], [], []>, precision = #tpu.contract_precision<fp32>} : vector<8x128xf32>, vector<128x128xf32>, vector<8x128xf32> -> vector<8x128xf32>
    %c0_40 = arith.constant 0 : index
    %c256_41 = arith.constant 256 : index
    %45 = vector.load %arg14[%c0_40, %c256_41] : memref<8x384xf32, #tpu.memory_space<vmem>>, vector<8x128xf32>
    tpu.vector_store %arg14[%c0_40, %c256_41], %44 {strides = array<i32>} : memref<8x384xf32, #tpu.memory_space<vmem>>, vector<8x128xf32>,
    %46 = arith.mulf %42, %42 : vector<8x128xf32>
    %cst_42 = arith.constant dense<0.000000e+00> : vector<8xf32>
    %47 = vector.multi_reduction <add>, %46, %cst_42 [1] : vector<8x128xf32> to vector<8xf32>
    %48 = vector.shape_cast %47 : vector<8xf32> to vector<8x1xf32>
    %cst_43 = arith.constant 1.000000e-24 : f32
    %49 = vector.broadcast %cst_43 : f32 to vector<8x1xf32>
    %50 = arith.maximumf %48, %49 : vector<8x1xf32>
    %51 = math.rsqrt %50 : vector<8x1xf32>
    %52 = vector.broadcast %51 : vector<8x1xf32> to vector<8x128xf32>
    %53 = arith.mulf %42, %52 : vector<8x128xf32>
    %54 = tpu.concatenate %19, %36, %53 in 0 : vector<8x128xf32>, vector<8x128xf32>, vector<8x128xf32> -> vector<24x128xf32>
    %cst_44 = arith.constant dense<0.000000e+00> : vector<24x128xf32>
    %55 = tpu.matmul %54, %0, %cst_44 {dimension_numbers = #tpu.dot_dimension_numbers<[1], [0], [0], [1], [0, 0, 1, 1], [], []>, precision = #tpu.contract_precision<fp32>} : vector<24x128xf32>, vector<128x128xf32>, vector<24x128xf32> -> vector<24x128xf32>
    %56 = vector.broadcast %1 : vector<1x128xf32> to vector<24x128xf32>
    %57 = arith.addf %55, %56 : vector<24x128xf32>
    %58 = math.tanh %57 : vector<24x128xf32>
    %59 = vector.broadcast %2 : vector<1x128xf32> to vector<24x128xf32>
    %60 = arith.mulf %58, %59 : vector<24x128xf32>
    %cst_45 = arith.constant dense<0.000000e+00> : vector<24xf32>
    %61 = vector.multi_reduction <add>, %60, %cst_45 [1] : vector<24x128xf32> to vector<24xf32>
    %62 = vector.shape_cast %61 : vector<24xf32> to vector<24x1xf32>
    %c8_i32 = arith.constant 8 : i32
    %63 = arith.muli %arg0, %c8_i32 : i32
    %64 = tpu.iota {dimensions = array<i32: 0>} : vector<8x1xi32>
    %65 = vector.broadcast %63 : i32 to vector<8x1xi32>
    %66 = arith.addi %64, %65 : vector<8x1xi32>
    %c20_i32 = arith.constant 20 : i32
    %67 = vector.broadcast %c20_i32 : i32 to vector<8x1xi32>
    %68 = arith.cmpi slt, %66, %67 : vector<8x1xi32>
    %69 = tpu.iota {dimensions = array<i32: 1>} : vector<8x128xi32>
    %cst_46 = arith.constant 0.000000e+00 : f32
    %70 = vector.broadcast %cst_46 : f32 to vector<8x128xf32>
    %71 = vector.extract_strided_slice %62 {offsets = [0, 0], sizes = [8, 1], strides = [1, 1]} : vector<24x1xf32> to vector<8x1xf32>
    %cst_47 = arith.constant 0.000000e+00 : f32
    %72 = vector.broadcast %cst_47 : f32 to vector<8x1xf32>
    %73 = arith.select %68, %71, %72 : vector<8x1xi1>, vector<8x1xf32>
    %c0_i32 = arith.constant 0 : i32
    %74 = vector.broadcast %c0_i32 : i32 to vector<8x128xi32>
    %75 = arith.cmpi eq, %69, %74 : vector<8x128xi32>
    %76 = vector.shape_cast %73 : vector<8x1xf32> to vector<1x8x1xf32>
    %cst_48 = arith.constant dense<0.000000e+00> : vector<1xf32>
    %77 = vector.multi_reduction <add>, %76, %cst_48 [1, 2] : vector<1x8x1xf32> to vector<1xf32>
    %78 = vector.shape_cast %77 : vector<1xf32> to vector<1x1x1xf32>
    %79 = vector.extract %78[0, 0, 0] : f32 from vector<1x1x1xf32>
    %80 = vector.broadcast %79 : f32 to vector<8x128xf32>
    %81 = arith.select %75, %80, %70 : vector<8x128xi1>, vector<8x128xf32>
    %82 = vector.extract_strided_slice %62 {offsets = [8, 0], sizes = [8, 1], strides = [1, 1]} : vector<24x1xf32> to vector<8x1xf32>
    %cst_49 = arith.constant 0.000000e+00 : f32
    %83 = vector.broadcast %cst_49 : f32 to vector<8x1xf32>
    %84 = arith.select %68, %82, %83 : vector<8x1xi1>, vector<8x1xf32>
    %c1_i32 = arith.constant 1 : i32
    %85 = vector.broadcast %c1_i32 : i32 to vector<8x128xi32>
    %86 = arith.cmpi eq, %69, %85 : vector<8x128xi32>
    %87 = vector.shape_cast %84 : vector<8x1xf32> to vector<1x8x1xf32>
    %cst_50 = arith.constant dense<0.000000e+00> : vector<1xf32>
    %88 = vector.multi_reduction <add>, %87, %cst_50 [1, 2] : vector<1x8x1xf32> to vector<1xf32>
    %89 = vector.shape_cast %88 : vector<1xf32> to vector<1x1x1xf32>
    %90 = vector.extract %89[0, 0, 0] : f32 from vector<1x1x1xf32>
    %91 = vector.broadcast %90 : f32 to vector<8x128xf32>
    %92 = arith.select %86, %91, %81 : vector<8x128xi1>, vector<8x128xf32>
    %93 = vector.extract_strided_slice %62 {offsets = [16, 0], sizes = [8, 1], strides = [1, 1]} : vector<24x1xf32> to vector<8x1xf32>
    %cst_51 = arith.constant 0.000000e+00 : f32
    %94 = vector.broadcast %cst_51 : f32 to vector<8x1xf32>
    %95 = arith.select %68, %93, %94 : vector<8x1xi1>, vector<8x1xf32>
    %c2_i32 = arith.constant 2 : i32
    %96 = vector.broadcast %c2_i32 : i32 to vector<8x128xi32>
    %97 = arith.cmpi eq, %69, %96 : vector<8x128xi32>
    %98 = vector.shape_cast %95 : vector<8x1xf32> to vector<1x8x1xf32>
    %cst_52 = arith.constant dense<0.000000e+00> : vector<1xf32>
    %99 = vector.multi_reduction <add>, %98, %cst_52 [1, 2] : vector<1x8x1xf32> to vector<1xf32>
    %100 = vector.shape_cast %99 : vector<1xf32> to vector<1x1x1xf32>
    %101 = vector.extract %100[0, 0, 0] : f32 from vector<1x1x1xf32>
    %102 = vector.broadcast %101 : f32 to vector<8x128xf32>
    %103 = arith.select %97, %102, %92 : vector<8x128xi1>, vector<8x128xf32>
    %c0_53 = arith.constant 0 : index
    %c0_54 = arith.constant 0 : index
    %104 = vector.load %arg15[%c0_53, %c0_54] : memref<8x128xf32, #tpu.memory_space<vmem>>, vector<8x128xf32>
    tpu.vector_store %arg15[%c0_53, %c0_54], %103 {strides = array<i32>} : memref<8x128xf32, #tpu.memory_space<vmem>>, vector<8x128xf32>,
    return
  }
  func.func @transform_0(%arg0: i32) -> (i32, i32) {
    %c0_i32 = arith.constant 0 : i32
    %c0_i32_0 = arith.constant 0 : i32
    return %arg0, %c0_i32 : i32, i32
  }
  func.func @transform_1(%arg0: i32) -> (i32, i32) {
    %c0_i32 = arith.constant 0 : i32
    %c0_i32_0 = arith.constant 0 : i32
    return %arg0, %c0_i32 : i32, i32
  }
  func.func @transform_2(%arg0: i32) -> (i32, i32) {
    %c0_i32 = arith.constant 0 : i32
    %c0_i32_0 = arith.constant 0 : i32
    return %arg0, %c0_i32 : i32, i32
  }
  func.func @transform_3(%arg0: i32) -> (i32, i32) {
    %c0_i32 = arith.constant 0 : i32
    %c0_i32_0 = arith.constant 0 : i32
    %c0_i32_1 = arith.constant 0 : i32
    return %c0_i32, %c0_i32_0 : i32, i32
  }
  func.func @transform_4(%arg0: i32) -> (i32, i32) {
    %c0_i32 = arith.constant 0 : i32
    %c0_i32_0 = arith.constant 0 : i32
    %c0_i32_1 = arith.constant 0 : i32
    return %c0_i32, %c0_i32_0 : i32, i32
  }
  func.func @transform_5(%arg0: i32) -> (i32, i32) {
    %c0_i32 = arith.constant 0 : i32
    %c0_i32_0 = arith.constant 0 : i32
    %c0_i32_1 = arith.constant 0 : i32
    return %c0_i32, %c0_i32_0 : i32, i32
  }
  func.func @transform_6(%arg0: i32) -> (i32, i32) {
    %c0_i32 = arith.constant 0 : i32
    %c0_i32_0 = arith.constant 0 : i32
    %c0_i32_1 = arith.constant 0 : i32
    return %c0_i32, %c0_i32_0 : i32, i32
  }
  func.func @transform_7(%arg0: i32) -> (i32, i32) {
    %c0_i32 = arith.constant 0 : i32
    %c0_i32_0 = arith.constant 0 : i32
    %c0_i32_1 = arith.constant 0 : i32
    return %c0_i32, %c0_i32_0 : i32, i32
  }
  func.func @transform_8(%arg0: i32) -> (i32, i32) {
    %c0_i32 = arith.constant 0 : i32
    %c0_i32_0 = arith.constant 0 : i32
    %c0_i32_1 = arith.constant 0 : i32
    return %c0_i32, %c0_i32_0 : i32, i32
  }
  func.func @transform_9(%arg0: i32) -> (i32, i32) {
    %c0_i32 = arith.constant 0 : i32
    %c0_i32_0 = arith.constant 0 : i32
    %c0_i32_1 = arith.constant 0 : i32
    return %c0_i32, %c0_i32_0 : i32, i32
  }
  func.func @transform_10(%arg0: i32) -> (i32, i32) {
    %c0_i32 = arith.constant 0 : i32
    %c0_i32_0 = arith.constant 0 : i32
    %c0_i32_1 = arith.constant 0 : i32
    return %c0_i32, %c0_i32_0 : i32, i32
  }
  func.func @transform_11(%arg0: i32) -> (i32, i32) {
    %c0_i32 = arith.constant 0 : i32
    %c0_i32_0 = arith.constant 0 : i32
    %c0_i32_1 = arith.constant 0 : i32
    return %c0_i32, %c0_i32_0 : i32, i32
  }
  func.func @transform_12(%arg0: i32) -> (i32, i32) {
    %c0_i32 = arith.constant 0 : i32
    %c0_i32_0 = arith.constant 0 : i32
    %c0_i32_1 = arith.constant 0 : i32
    return %c0_i32, %c0_i32_0 : i32, i32
  }
  func.func @transform_13(%arg0: i32) -> (i32, i32) {
    %c0_i32 = arith.constant 0 : i32
    %c0_i32_0 = arith.constant 0 : i32
    return %arg0, %c0_i32 : i32, i32
  }
  func.func @transform_14(%arg0: i32) -> (i32, i32) {
    %c0_i32 = arith.constant 0 : i32
    %c0_i32_0 = arith.constant 0 : i32
    return %arg0, %c0_i32 : i32, i32
  }
}

</mosaic_0001>

<llo_original>
// kernel: tpu_custom_call.1
$region0: #{tpu_custom_call.1}
  #allocation0 [shape = 'u32[]', space=smem, size = 0x4, offset = 0x4, fixed_abs, tag = 'smem constant byte address 0x4 - core index']
  #allocation1 [shape = 'u32[72,128]{1,0:T(1,128)}', space=vmem, size = 0x9000, scoped, tag = 'internal scratch']
  %s0 = inlined_call_operand.hbm [shape: f32[24,256], index: 0, kind: input, shape index: {}]
  %s1 = inlined_call_operand.hbm [shape: f32[24,192], index: 1, kind: input, shape index: {}]
  %s2 = inlined_call_operand.hbm [shape: f32[24,128], index: 2, kind: input, shape index: {}]
  %s3 = inlined_call_operand.hbm [shape: f32[256,128], index: 3, kind: input, shape index: {}]
  %s4 = inlined_call_operand.hbm [shape: f32[192,128], index: 4, kind: input, shape index: {}]
  %s5 = inlined_call_operand.hbm [shape: f32[128,128], index: 5, kind: input, shape index: {}]
  %s6 = inlined_call_operand.vmem [shape: f32[1,128], index: 6, kind: input, shape index: {}]
  %s7 = inlined_call_operand.vmem [shape: f32[1,128], index: 7, kind: input, shape index: {}]
  %s8 = inlined_call_operand.vmem [shape: f32[1,128], index: 8, kind: input, shape index: {}]
  %s9 = inlined_call_operand.hbm [shape: f32[128,128], index: 9, kind: input, shape index: {}]
  %s10 = inlined_call_operand.vmem [shape: f32[1,128], index: 10, kind: input, shape index: {}]
  %s11 = inlined_call_operand.vmem [shape: f32[1,128], index: 11, kind: input, shape index: {}]
  %s12 = inlined_call_operand.hbm [shape: f32[384,128], index: 12, kind: input, shape index: {}]
  %s13 = inlined_call_operand.hbm [shape: f32[24,384], index: 13, kind: output, shape index: {0}]
  %s14 = inlined_call_operand.hbm [shape: f32[24,128], index: 14, kind: output, shape index: {1}]
  %15 = xla_tuple %s13, %s14
  %s16 = sld [smem:[#allocation0]]
  $region125: #{tpu_custom_call.1} parent=0
    _
  %s18 = ssub.s32 1, %s16
  %s19 = scalar_select 0, %s18, %s16
  $region1: #{tpu_custom_call.1} parent=0
    #allocation2 [shape = 'u8[16384]{0}', space=vmem, size = 0x4000, scoped, tag = 'input window, operand 0']
    #allocation3 [shape = 's32[2]{0}', space=sflag, size = 0x8, scoped, tag = 'scoped memory for tpu_custom_call.1']
    #allocation4 [shape = 's32[2]{0}', space=sflag, size = 0x8, scoped, tag = 'scoped memory for tpu_custom_call.1']
    #allocation5 [shape = 'u8[16384]{0}', space=vmem, size = 0x4000, scoped, tag = 'input window, operand 1']
    #allocation6 [shape = 's32[2]{0}', space=sflag, size = 0x8, scoped, tag = 'scoped memory for tpu_custom_call.1']
    #allocation7 [shape = 'u8[8192]{0}', space=vmem, size = 0x2000, scoped, tag = 'input window, operand 2']
    #allocation8 [shape = 'u8[131072]{0}', space=vmem, size = 0x20000, scoped, tag = 'input window, operand 3, single buffered']
    #allocation9 [shape = 's32[1]{0}', space=sflag, size = 0x4, scoped, tag = 'scoped memory for tpu_custom_call.1']
    #allocation10 [shape = 'u8[98304]{0}', space=vmem, size = 0x18000, scoped, tag = 'input window, operand 4, single buffered']
    #allocation11 [shape = 'u8[65536]{0}', space=vmem, size = 0x10000, scoped, tag = 'input window, operand 5, single buffered']
    #allocation12 [shape = 's32[1]{0}', space=sflag, size = 0x4, scoped, tag = 'scoped memory for tpu_custom_call.1']
    #allocation13 [shape = 'u8[65536]{0}', space=vmem, size = 0x10000, scoped, tag = 'input window, operand 9, single buffered']
    #allocation14 [shape = 'u8[196608]{0}', space=vmem, size = 0x30000, scoped, tag = 'input window, operand 12, single buffered']
    #allocation15 [shape = 's32[1]{0}', space=sflag, size = 0x4, scoped, tag = 'scoped memory for tpu_custom_call.1']
    #allocation16 [shape = 'u8[24576]{0}', space=vmem, size = 0x6000, scoped, tag = 'output window, operand 0']
    #allocation17 [shape = 'u8[8192]{0}', space=vmem, size = 0x2000, scoped, tag = 'output window, operand 1']
    #allocation18 [shape = 's32[2]{0}', space=sflag, size = 0x8, scoped, tag = 'scoped memory for tpu_custom_call.1']
    %20 = vsyncpa [#allocation3], 0
    %s21 = scalar_lea.sflag [#allocation3], 1
    %22 = vsyncpa %s21, 0
    %23 = vsyncpa [#allocation6], 0
    %s24 = scalar_lea.sflag [#allocation6], 1
    %25 = vsyncpa %s24, 0
    %26 = vsyncpa [#allocation9], 0
    %27 = vsyncpa [#allocation12], 0
    %28 = vsyncpa [#allocation15], 0
    %29 = vsyncpa [#allocation4], 0
    %s30 = scalar_lea.sflag [#allocation4], 1
    %31 = vsyncpa %s30, 0
    %32 = vsyncpa [#allocation18], 0
    %s33 = scalar_lea.sflag [#allocation18], 1
    %34 = vsyncpa %s33, 0
    loop: start=0, step=1, limit=5
    $region2: #{tpu_custom_call.1} parent=1 // loop_pre_header
      _
    $region3: #{tpu_custom_call.1} parent=1 // loop_header
      %s36 = sphi 0, %s40
      %p37 = scmp.ge.s32.totalorder %s36, 5
      %s46 = sphi 0, %s48
      %s49 = sphi 0, %s46
      %s50 = sphi 0, %s49
      %s66 = sphi 0, %s50
      %s72 = sphi 0, %s74
      %s75 = sphi 0, %s72
      %s76 = sphi 0, %s75
      %s92 = sphi 0, %s76
      %s98 = sphi 0, %s100
      %s101 = sphi 0, %s98
      %s102 = sphi 0, %s101
      %s118 = sphi 0, %s102
      %s122 = sphi 0, %s122
      %s124 = sphi 0, %s122
      %s125 = sphi 0, %s124
      %s139 = sphi 0, %s125
      %s143 = sphi 0, %s143
      %s145 = sphi 0, %s143
      %s146 = sphi 0, %s145
      %s160 = sphi 0, %s146
      %s164 = sphi 0, %s164
      %s166 = sphi 0, %s164
      %s167 = sphi 0, %s166
      %s181 = sphi 0, %s167
      %s185 = sphi 0, %s185
      %s187 = sphi 0, %s185
      %s188 = sphi 0, %s187
      %s202 = sphi 0, %s188
      %s206 = sphi 0, %s206
      %s208 = sphi 0, %s206
      %s209 = sphi 0, %s208
      %s223 = sphi 0, %s209
      %s227 = sphi 0, %s227
      %s229 = sphi 0, %s227
      %s230 = sphi 0, %s229
      %s244 = sphi 0, %s230
      %s248 = sphi 0, %s248
      %s250 = sphi 0, %s248
      %s251 = sphi 0, %s250
      %s265 = sphi 0, %s251
      %s269 = sphi 0, %s269
      %s271 = sphi 0, %s269
      %s272 = sphi 0, %s271
      %s286 = sphi 0, %s272
      %s290 = sphi 0, %s290
      %s292 = sphi 0, %s290
      %s293 = sphi 0, %s292
      %s307 = sphi 0, %s293
      %s311 = sphi 0, %s311
      %s313 = sphi 0, %s311
      %s314 = sphi 0, %s313
      %s328 = sphi 0, %s314
      %s334 = sphi 0, %s336
      %s337 = sphi 0, %s334
      %s338 = sphi 0, %s337
      %s354 = sphi 0, %s338
      %s360 = sphi 0, %s362
      %s363 = sphi 0, %s360
      %s364 = sphi 0, %s363
      %s380 = sphi 0, %s364
    $region4: #{tpu_custom_call.1} parent=1 // loop_header_branch
      %39 = sbr.rel (%p37) target = $region8
    $region5: #{tpu_custom_call.1} parent=1 // loop_body
      %s41 = ssub.s32 %s36, 1
      %s42 = ssub.s32 %s36, 2
      %s43 = sadd.s32 %s36, 1
      %s44 = ssub.s32 %s36, %s43
      %p45 = scmp.eq.s32.totalorder %s44, 0
      %s47 = sadd.s32 %s46, 1
      %s48 = scalar_select %p45, %s46, %s47
      %p51 = pneg %p45
      %p52 = scmp.eq.s32.totalorder %s36, 2
      %p53 = por %p51, %p52
      %p54 = scmp.ne.s32.totalorder %s46, %s49
      %p55 = scmp.eq.s32.totalorder %s36, 0
      %p56 = por %p54, %p55
      %p57 = scmp.ne.s32.totalorder %s46, %s49
      %p58 = scmp.eq.s32.totalorder %s41, 2
      %p59 = por %p57, %p58
      %p60 = scmp.ne.s32.totalorder %s49, %s50
      %p61 = scmp.eq.s32.totalorder %s41, 0
      %p62 = por %p60, %p61
      %p63 = scmp.ne.s32.totalorder %s49, %s50
      %p64 = scmp.eq.s32.totalorder %s42, 2
      %p65 = por %p63, %p64
      %p67 = scmp.ne.s32.totalorder %s50, %s66
      %p68 = scmp.eq.s32.totalorder %s42, 0
      %p69 = por %p67, %p68
      %s70 = ssub.s32 %s36, %s43
      %p71 = scmp.eq.s32.totalorder %s70, 0
      %s73 = sadd.s32 %s72, 1
      %s74 = scalar_select %p71, %s72, %s73
      %p77 = pneg %p71
      %p78 = scmp.eq.s32.totalorder %s36, 2
      %p79 = por %p77, %p78
      %p80 = scmp.ne.s32.totalorder %s72, %s75
      %p81 = scmp.eq.s32.totalorder %s36, 0
      %p82 = por %p80, %p81
      %p83 = scmp.ne.s32.totalorder %s72, %s75
      %p84 = scmp.eq.s32.totalorder %s41, 2
      %p85 = por %p83, %p84
      %p86 = scmp.ne.s32.totalorder %s75, %s76
      %p87 = scmp.eq.s32.totalorder %s41, 0
      %p88 = por %p86, %p87
      %p89 = scmp.ne.s32.totalorder %s75, %s76
      %p90 = scmp.eq.s32.totalorder %s42, 2
      %p91 = por %p89, %p90
      %p93 = scmp.ne.s32.totalorder %s76, %s92
      %p94 = scmp.eq.s32.totalorder %s42, 0
      %p95 = por %p93, %p94
      %s96 = ssub.s32 %s36, %s43
      %p97 = scmp.eq.s32.totalorder %s96, 0
      %s99 = sadd.s32 %s98, 1
      %s100 = scalar_select %p97, %s98, %s99
      %p103 = pneg %p97
      %p104 = scmp.eq.s32.totalorder %s36, 2
      %p105 = por %p103, %p104
      %p106 = scmp.ne.s32.totalorder %s98, %s101
      %p107 = scmp.eq.s32.totalorder %s36, 0
      %p108 = por %p106, %p107
      %p109 = scmp.ne.s32.totalorder %s98, %s101
      %p110 = scmp.eq.s32.totalorder %s41, 2
      %p111 = por %p109, %p110
      %p112 = scmp.ne.s32.totalorder %s101, %s102
      %p113 = scmp.eq.s32.totalorder %s41, 0
      %p114 = por %p112, %p113
      %p115 = scmp.ne.s32.totalorder %s101, %s102
      %p116 = scmp.eq.s32.totalorder %s42, 2
      %p117 = por %p115, %p116
      %p119 = scmp.ne.s32.totalorder %s102, %s118
      %p120 = scmp.eq.s32.totalorder %s42, 0
      %p121 = por %p119, %p120
      %s123 = sadd.s32 %s122, 1
      %p126 = scmp.eq.s32.totalorder %s36, 2
      %p127 = scmp.ne.s32.totalorder %s122, %s124
      %p128 = scmp.eq.s32.totalorder %s36, 0
      %p129 = por %p127, %p128
      %p130 = scmp.ne.s32.totalorder %s122, %s124
      %p131 = scmp.eq.s32.totalorder %s41, 2
      %p132 = por %p130, %p131
      %p133 = scmp.ne.s32.totalorder %s124, %s125
      %p134 = scmp.eq.s32.totalorder %s41, 0
      %p135 = por %p133, %p134
      %p136 = scmp.ne.s32.totalorder %s124, %s125
      %p137 = scmp.eq.s32.totalorder %s42, 2
      %p138 = por %p136, %p137
      %p140 = scmp.ne.s32.totalorder %s125, %s139
      %p141 = scmp.eq.s32.totalorder %s42, 0
      %p142 = por %p140, %p141
      %s144 = sadd.s32 %s143, 1
      %p147 = scmp.eq.s32.totalorder %s36, 2
      %p148 = scmp.ne.s32.totalorder %s143, %s145
      %p149 = scmp.eq.s32.totalorder %s36, 0
      %p150 = por %p148, %p149
      %p151 = scmp.ne.s32.totalorder %s143, %s145
      %p152 = scmp.eq.s32.totalorder %s41, 2
      %p153 = por %p151, %p152
      %p154 = scmp.ne.s32.totalorder %s145, %s146
      %p155 = scmp.eq.s32.totalorder %s41, 0
      %p156 = por %p154, %p155
      %p157 = scmp.ne.s32.totalorder %s145, %s146
      %p158 = scmp.eq.s32.totalorder %s42, 2
      %p159 = por %p157, %p158
      %p161 = scmp.ne.s32.totalorder %s146, %s160
      %p162 = scmp.eq.s32.totalorder %s42, 0
      %p163 = por %p161, %p162
      %s165 = sadd.s32 %s164, 1
      %p168 = scmp.eq.s32.totalorder %s36, 2
      %p169 = scmp.ne.s32.totalorder %s164, %s166
      %p170 = scmp.eq.s32.totalorder %s36, 0
      %p171 = por %p169, %p170
      %p172 = scmp.ne.s32.totalorder %s164, %s166
      %p173 = scmp.eq.s32.totalorder %s41, 2
      %p174 = por %p172, %p173
      %p175 = scmp.ne.s32.totalorder %s166, %s167
      %p176 = scmp.eq.s32.totalorder %s41, 0
      %p177 = por %p175, %p176
      %p178 = scmp.ne.s32.totalorder %s166, %s167
      %p179 = scmp.eq.s32.totalorder %s42, 2
      %p180 = por %p178, %p179
      %p182 = scmp.ne.s32.totalorder %s167, %s181
      %p183 = scmp.eq.s32.totalorder %s42, 0
      %p184 = por %p182, %p183
      %s186 = sadd.s32 %s185, 1
      %p189 = scmp.eq.s32.totalorder %s36, 2
      %p190 = scmp.ne.s32.totalorder %s185, %s187
      %p191 = scmp.eq.s32.totalorder %s36, 0
      %p192 = por %p190, %p191
      %p193 = scmp.ne.s32.totalorder %s185, %s187
      %p194 = scmp.eq.s32.totalorder %s41, 2
      %p195 = por %p193, %p194
      %p196 = scmp.ne.s32.totalorder %s187, %s188
      %p197 = scmp.eq.s32.totalorder %s41, 0
      %p198 = por %p196, %p197
      %p199 = scmp.ne.s32.totalorder %s187, %s188
      %p200 = scmp.eq.s32.totalorder %s42, 2
      %p201 = por %p199, %p200
      %p203 = scmp.ne.s32.totalorder %s188, %s202
      %p204 = scmp.eq.s32.totalorder %s42, 0
      %p205 = por %p203, %p204
      %s207 = sadd.s32 %s206, 1
      %p210 = scmp.eq.s32.totalorder %s36, 2
      %p211 = scmp.ne.s32.totalorder %s206, %s208
      %p212 = scmp.eq.s32.totalorder %s36, 0
      %p213 = por %p211, %p212
      %p214 = scmp.ne.s32.totalorder %s206, %s208
      %p215 = scmp.eq.s32.totalorder %s41, 2
      %p216 = por %p214, %p215
      %p217 = scmp.ne.s32.totalorder %s208, %s209
      %p218 = scmp.eq.s32.totalorder %s41, 0
      %p219 = por %p217, %p218
      %p220 = scmp.ne.s32.totalorder %s208, %s209
      %p221 = scmp.eq.s32.totalorder %s42, 2
      %p222 = por %p220, %p221
      %p224 = scmp.ne.s32.totalorder %s209, %s223
      %p225 = scmp.eq.s32.totalorder %s42, 0
      %p226 = por %p224, %p225
      %s228 = sadd.s32 %s227, 1
      %p231 = scmp.eq.s32.totalorder %s36, 2
      %p232 = scmp.ne.s32.totalorder %s227, %s229
      %p233 = scmp.eq.s32.totalorder %s36, 0
      %p234 = por %p232, %p233
      %p235 = scmp.ne.s32.totalorder %s227, %s229
      %p236 = scmp.eq.s32.totalorder %s41, 2
      %p237 = por %p235, %p236
      %p238 = scmp.ne.s32.totalorder %s229, %s230
      %p239 = scmp.eq.s32.totalorder %s41, 0
      %p240 = por %p238, %p239
      %p241 = scmp.ne.s32.totalorder %s229, %s230
      %p242 = scmp.eq.s32.totalorder %s42, 2
      %p243 = por %p241, %p242
      %p245 = scmp.ne.s32.totalorder %s230, %s244
      %p246 = scmp.eq.s32.totalorder %s42, 0
      %p247 = por %p245, %p246
      %s249 = sadd.s32 %s248, 1
      %p252 = scmp.eq.s32.totalorder %s36, 2
      %p253 = scmp.ne.s32.totalorder %s248, %s250
      %p254 = scmp.eq.s32.totalorder %s36, 0
      %p255 = por %p253, %p254
      %p256 = scmp.ne.s32.totalorder %s248, %s250
      %p257 = scmp.eq.s32.totalorder %s41, 2
      %p258 = por %p256, %p257
      %p259 = scmp.ne.s32.totalorder %s250, %s251
      %p260 = scmp.eq.s32.totalorder %s41, 0
      %p261 = por %p259, %p260
      %p262 = scmp.ne.s32.totalorder %s250, %s251
      %p263 = scmp.eq.s32.totalorder %s42, 2
      %p264 = por %p262, %p263
      %p266 = scmp.ne.s32.totalorder %s251, %s265
      %p267 = scmp.eq.s32.totalorder %s42, 0
      %p268 = por %p266, %p267
      %s270 = sadd.s32 %s269, 1
      %p273 = scmp.eq.s32.totalorder %s36, 2
      %p274 = scmp.ne.s32.totalorder %s269, %s271
      %p275 = scmp.eq.s32.totalorder %s36, 0
      %p276 = por %p274, %p275
      %p277 = scmp.ne.s32.totalorder %s269, %s271
      %p278 = scmp.eq.s32.totalorder %s41, 2
      %p279 = por %p277, %p278
      %p280 = scmp.ne.s32.totalorder %s271, %s272
      %p281 = scmp.eq.s32.totalorder %s41, 0
      %p282 = por %p280, %p281
      %p283 = scmp.ne.s32.totalorder %s271, %s272
      %p284 = scmp.eq.s32.totalorder %s42, 2
      %p285 = por %p283, %p284
      %p287 = scmp.ne.s32.totalorder %s272, %s286
      %p288 = scmp.eq.s32.totalorder %s42, 0
      %p289 = por %p287, %p288
      %s291 = sadd.s32 %s290, 1
      %p294 = scmp.eq.s32.totalorder %s36, 2
      %p295 = scmp.ne.s32.totalorder %s290, %s292
      %p296 = scmp.eq.s32.totalorder %s36, 0
      %p297 = por %p295, %p296
      %p298 = scmp.ne.s32.totalorder %s290, %s292
      %p299 = scmp.eq.s32.totalorder %s41, 2
      %p300 = por %p298, %p299
      %p301 = scmp.ne.s32.totalorder %s292, %s293
      %p302 = scmp.eq.s32.totalorder %s41, 0
      %p303 = por %p301, %p302
      %p304 = scmp.ne.s32.totalorder %s292, %s293
      %p305 = scmp.eq.s32.totalorder %s42, 2
      %p306 = por %p304, %p305
      %p308 = scmp.ne.s32.totalorder %s293, %s307
      %p309 = scmp.eq.s32.totalorder %s42, 0
      %p310 = por %p308, %p309
      %s312 = sadd.s32 %s311, 1
      %p315 = scmp.eq.s32.totalorder %s36, 2
      %p316 = scmp.ne.s32.totalorder %s311, %s313
      %p317 = scmp.eq.s32.totalorder %s36, 0
      %p318 = por %p316, %p317
      %p319 = scmp.ne.s32.totalorder %s311, %s313
      %p320 = scmp.eq.s32.totalorder %s41, 2
      %p321 = por %p319, %p320
      %p322 = scmp.ne.s32.totalorder %s313, %s314
      %p323 = scmp.eq.s32.totalorder %s41, 0
      %p324 = por %p322, %p323
      %p325 = scmp.ne.s32.totalorder %s313, %s314
      %p326 = scmp.eq.s32.totalorder %s42, 2
      %p327 = por %p325, %p326
      %p329 = scmp.ne.s32.totalorder %s314, %s328
      %p330 = scmp.eq.s32.totalorder %s42, 0
      %p331 = por %p329, %p330
      %s332 = ssub.s32 %s36, %s43
      %p333 = scmp.eq.s32.totalorder %s332, 0
      %s335 = sadd.s32 %s334, 1
      %s336 = scalar_select %p333, %s334, %s335
      %p339 = pneg %p333
      %p340 = scmp.eq.s32.totalorder %s36, 2
      %p341 = por %p339, %p340
      %p342 = scmp.ne.s32.totalorder %s334, %s337
      %p343 = scmp.eq.s32.totalorder %s36, 0
      %p344 = por %p342, %p343
      %p345 = scmp.ne.s32.totalorder %s334, %s337
      %p346 = scmp.eq.s32.totalorder %s41, 2
      %p347 = por %p345, %p346
      %p348 = scmp.ne.s32.totalorder %s337, %s338
      %p349 = scmp.eq.s32.totalorder %s41, 0
      %p350 = por %p348, %p349
      %p351 = scmp.ne.s32.totalorder %s337, %s338
      %p352 = scmp.eq.s32.totalorder %s42, 2
      %p353 = por %p351, %p352
      %p355 = scmp.ne.s32.totalorder %s338, %s354
      %p356 = scmp.eq.s32.totalorder %s42, 0
      %p357 = por %p355, %p356
      %s358 = ssub.s32 %s36, %s43
      %p359 = scmp.eq.s32.totalorder %s358, 0
      %s361 = sadd.s32 %s360, 1
      %s362 = scalar_select %p359, %s360, %s361
      %p365 = pneg %p359
      %p366 = scmp.eq.s32.totalorder %s36, 2
      %p367 = por %p365, %p366
      %p368 = scmp.ne.s32.totalorder %s360, %s363
      %p369 = scmp.eq.s32.totalorder %s36, 0
      %p370 = por %p368, %p369
      %p371 = scmp.ne.s32.totalorder %s360, %s363
      %p372 = scmp.eq.s32.totalorder %s41, 2
      %p373 = por %p371, %p372
      %p374 = scmp.ne.s32.totalorder %s363, %s364
      %p375 = scmp.eq.s32.totalorder %s41, 0
      %p376 = por %p374, %p375
      %p377 = scmp.ne.s32.totalorder %s363, %s364
      %p378 = scmp.eq.s32.totalorder %s42, 2
      %p379 = por %p377, %p378
      %p381 = scmp.ne.s32.totalorder %s364, %s380
      %p382 = scmp.eq.s32.totalorder %s42, 0
      %p383 = por %p381, %p382
      %p384 = scmp.le.s32.totalorder 1, %s36
      %p385 = scmp.lt.s32.totalorder %s36, 4
      %p386 = pnand %p384, %p385
      %p387 = pneg %p386
      // Predicated region
      $region9: #{tpu_custom_call.1} parent=5 // pred_check
        _
      $region10: #{tpu_custom_call.1} parent=5 // pred_check_branch
        %389 = sbr.rel (%p386) target = $region12
      $region11: #{tpu_custom_call.1} parent=5 // pred_region
        %s390 = ssub.s32 %s36, 1
        // Predicated region
        $region13: #{tpu_custom_call.1} parent=11 // pred_check
          %p391 = pneg %p135
        $region14: #{tpu_custom_call.1} parent=11 // pred_check_branch
          %393 = sbr.rel (%p391) target = $region16
        $region15: #{tpu_custom_call.1} parent=11 // pred_region
          %395 = vsyncadd [#allocation9], 0
          %s396 = sshll.u32 %s3, 4
          %s397 = int_to_ptr.hbm [resolvable:$true] %s396
          %s398 = sshll.u32 [#allocation8], 4
          %s399 = int_to_ptr.vmem [resolvable:$true] %s398
          %404 = dma.hbm_to_vmem [thread:$0]  %s397, 4096, %s399, [#allocation9], 128, 128, 8
        $region16: #{tpu_custom_call.1} parent=11 // pred_fallthru
          _
        // Predicated region
        $region17: #{tpu_custom_call.1} parent=11 // pred_check
          %p405 = pneg %p156
        $region18: #{tpu_custom_call.1} parent=11 // pred_check_branch
          %407 = sbr.rel (%p405) target = $region20
        $region19: #{tpu_custom_call.1} parent=11 // pred_region
          %409 = vsyncadd [#allocation9], 0
          %s410 = sshll.u32 %s4, 4
          %s411 = int_to_ptr.hbm [resolvable:$true] %s410
          %s412 = sshll.u32 [#allocation10], 4
          %s413 = int_to_ptr.vmem [resolvable:$true] %s412
          %418 = dma.hbm_to_vmem [thread:$0]  %s411, 3072, %s413, [#allocation9], 128, 128, 8
        $region20: #{tpu_custom_call.1} parent=11 // pred_fallthru
          _
        // Predicated region
        $region21: #{tpu_custom_call.1} parent=11 // pred_check
          %p419 = pneg %p177
        $region22: #{tpu_custom_call.1} parent=11 // pred_check_branch
          %421 = sbr.rel (%p419) target = $region24
        $region23: #{tpu_custom_call.1} parent=11 // pred_region
          %423 = vsyncadd [#allocation12], 0
          %s424 = sshll.u32 %s5, 4
          %s425 = int_to_ptr.hbm [resolvable:$true] %s424
          %s426 = sshll.u32 [#allocation11], 4
          %s427 = int_to_ptr.vmem [resolvable:$true] %s426
          %432 = dma.hbm_to_vmem [thread:$0]  %s425, 2048, %s427, [#allocation12], 128, 128, 8
        $region24: #{tpu_custom_call.1} parent=11 // pred_fallthru
          _
        // Predicated region
        $region25: #{tpu_custom_call.1} parent=11 // pred_check
          %p433 = pneg %p198
        $region26: #{tpu_custom_call.1} parent=11 // pred_check_branch
          %435 = sbr.rel (%p433) target = $region28
        $region27: #{tpu_custom_call.1} parent=11 // pred_region
          _
        $region28: #{tpu_custom_call.1} parent=11 // pred_fallthru
          _
        // Predicated region
        $region29: #{tpu_custom_call.1} parent=11 // pred_check
          %p436 = pneg %p219
        $region30: #{tpu_custom_call.1} parent=11 // pred_check_branch
          %438 = sbr.rel (%p436) target = $region32
        $region31: #{tpu_custom_call.1} parent=11 // pred_region
          _
        $region32: #{tpu_custom_call.1} parent=11 // pred_fallthru
          _
        // Predicated region
        $region33: #{tpu_custom_call.1} parent=11 // pred_check
          %p439 = pneg %p240
        $region34: #{tpu_custom_call.1} parent=11 // pred_check_branch
          %441 = sbr.rel (%p439) target = $region36
        $region35: #{tpu_custom_call.1} parent=11 // pred_region
          _
        $region36: #{tpu_custom_call.1} parent=11 // pred_fallthru
          _
        // Predicated region
        $region37: #{tpu_custom_call.1} parent=11 // pred_check
          %p442 = pneg %p261
        $region38: #{tpu_custom_call.1} parent=11 // pred_check_branch
          %444 = sbr.rel (%p442) target = $region40
        $region39: #{tpu_custom_call.1} parent=11 // pred_region
          %446 = vsyncadd [#allocation12], 0
          %s447 = sshll.u32 %s9, 4
          %s448 = int_to_ptr.hbm [resolvable:$true] %s447
          %s449 = sshll.u32 [#allocation13], 4
          %s450 = int_to_ptr.vmem [resolvable:$true] %s449
          %455 = dma.hbm_to_vmem [thread:$0]  %s448, 2048, %s450, [#allocation12], 128, 128, 8
        $region40: #{tpu_custom_call.1} parent=11 // pred_fallthru
          _
        // Predicated region
        $region41: #{tpu_custom_call.1} parent=11 // pred_check
          %p456 = pneg %p282
        $region42: #{tpu_custom_call.1} parent=11 // pred_check_branch
          %458 = sbr.rel (%p456) target = $region44
        $region43: #{tpu_custom_call.1} parent=11 // pred_region
          _
        $region44: #{tpu_custom_call.1} parent=11 // pred_fallthru
          _
        // Predicated region
        $region45: #{tpu_custom_call.1} parent=11 // pred_check
          %p459 = pneg %p303
        $region46: #{tpu_custom_call.1} parent=11 // pred_check_branch
          %461 = sbr.rel (%p459) target = $region48
        $region47: #{tpu_custom_call.1} parent=11 // pred_region
          _
        $region48: #{tpu_custom_call.1} parent=11 // pred_fallthru
          _
        // Predicated region
        $region49: #{tpu_custom_call.1} parent=11 // pred_check
          %p462 = pneg %p324
        $region50: #{tpu_custom_call.1} parent=11 // pred_check_branch
          %464 = sbr.rel (%p462) target = $region52
        $region51: #{tpu_custom_call.1} parent=11 // pred_region
          %466 = vsyncadd [#allocation15], 0
          %s467 = sshll.u32 %s12, 4
          %s468 = int_to_ptr.hbm [resolvable:$true] %s467
          %s469 = sshll.u32 [#allocation14], 4
          %s470 = int_to_ptr.vmem [resolvable:$true] %s469
          %475 = dma.hbm_to_vmem [thread:$0]  %s468, 6144, %s470, [#allocation15], 128, 128, 8
        $region52: #{tpu_custom_call.1} parent=11 // pred_fallthru
          _
      $region12: #{tpu_custom_call.1} parent=5 // pred_fallthru
        _
      %p476 = scmp.lt.s32.totalorder %s36, 3
      // Predicated region
      $region53: #{tpu_custom_call.1} parent=5 // pred_check
        %p477 = pneg %p476
      $region54: #{tpu_custom_call.1} parent=5 // pred_check_branch
        %479 = sbr.rel (%p477) target = $region56
      $region55: #{tpu_custom_call.1} parent=5 // pred_region
        // Predicated region
        $region57: #{tpu_custom_call.1} parent=55 // pred_check
          %p480 = pneg %p56
        $region58: #{tpu_custom_call.1} parent=55 // pred_check_branch
          %482 = sbr.rel (%p480) target = $region60
        $region59: #{tpu_custom_call.1} parent=55 // pred_region
          %s483 = sand.u32 %s46, 1
          %s484 = scalar_lea.sflag [#allocation3], %s483
          %s485 = sand.u32 %s46, 1
          %s486 = smul.addr %s485, 16
          %s487 = scalar_lea.vmem [#allocation2], %s486
          %489 = vsyncadd %s484, 0
          %s490 = smul.addr %s36, 2
          %s491 = smul.addr %s490, 8
          %s492 = scalar_lea.hbm %s0, %s491
          %s494 = sshll.u32 %s492, 4
          %s495 = int_to_ptr.hbm [resolvable:$true] %s494
          %s496 = sshll.u32 %s487, 4
          %s497 = int_to_ptr.vmem [resolvable:$true] %s496
          %499 = dma.hbm_to_vmem [thread:$0]  %s495, 256, %s497, %s484
        $region60: #{tpu_custom_call.1} parent=55 // pred_fallthru
          _
        // Predicated region
        $region61: #{tpu_custom_call.1} parent=55 // pred_check
          %p500 = pneg %p82
        $region62: #{tpu_custom_call.1} parent=55 // pred_check_branch
          %502 = sbr.rel (%p500) target = $region64
        $region63: #{tpu_custom_call.1} parent=55 // pred_region
          %s503 = sand.u32 %s36, 1
          %s504 = scalar_lea.sflag [#allocation6], %s503
          %s505 = sand.u32 %s72, 1
          %s506 = smul.addr %s505, 16
          %s507 = scalar_lea.vmem [#allocation5], %s506
          %509 = vsyncadd %s504, 0
          %s510 = smul.addr %s36, 2
          %s511 = smul.addr %s510, 8
          %s512 = scalar_lea.hbm %s1, %s511
          %s514 = sshll.u32 %s512, 4
          %s515 = int_to_ptr.hbm [resolvable:$true] %s514
          %s516 = sshll.u32 %s507, 4
          %s517 = int_to_ptr.vmem [resolvable:$true] %s516
          %519 = dma.hbm_to_vmem [thread:$0]  %s515, 256, %s517, %s504
        $region64: #{tpu_custom_call.1} parent=55 // pred_fallthru
          _
        // Predicated region
        $region65: #{tpu_custom_call.1} parent=55 // pred_check
          %p520 = pneg %p108
        $region66: #{tpu_custom_call.1} parent=55 // pred_check_branch
          %522 = sbr.rel (%p520) target = $region68
        $region67: #{tpu_custom_call.1} parent=55 // pred_region
          %s523 = sand.u32 %s36, 1
          %s524 = scalar_lea.sflag [#allocation6], %s523
          %s525 = sand.u32 %s98, 1
          %s526 = smul.addr %s525, 8
          %s527 = scalar_lea.vmem [#allocation7], %s526
          %529 = vsyncadd %s524, 0
          %s530 = smul.addr %s36, 8
          %s531 = scalar_lea.hbm %s2, %s530
          %s533 = sshll.u32 %s531, 4
          %s534 = int_to_ptr.hbm [resolvable:$true] %s533
          %s535 = sshll.u32 %s527, 4
          %s536 = int_to_ptr.vmem [resolvable:$true] %s535
          %538 = dma.hbm_to_vmem [thread:$0]  %s534, 128, %s536, %s524
        $region68: #{tpu_custom_call.1} parent=55 // pred_fallthru
          _
      $region56: #{tpu_custom_call.1} parent=5 // pred_fallthru
        _
      %p539 = scmp.le.s32.totalorder 1, %s36
      %p540 = scmp.lt.s32.totalorder %s36, 4
      %p541 = pnand %p539, %p540
      %p542 = pneg %p541
      // Predicated region
      $region69: #{tpu_custom_call.1} parent=5 // pred_check
        _
      $region70: #{tpu_custom_call.1} parent=5 // pred_check_branch
        %544 = sbr.rel (%p541) target = $region72
      $region71: #{tpu_custom_call.1} parent=5 // pred_region
        %s545 = ssub.s32 %s36, 1
        %s546 = sand.u32 %s49, 1
        %s547 = scalar_lea.sflag [#allocation3], %s546
        %s548 = sand.u32 %s49, 1
        %s549 = smul.addr %s548, 16
        %s550 = scalar_lea.vmem [#allocation2], %s549
        // Predicated region
        $region73: #{tpu_custom_call.1} parent=71 // pred_check
          %p551 = pneg %p62
        $region74: #{tpu_custom_call.1} parent=71 // pred_check_branch
          %553 = sbr.rel (%p551) target = $region76
        $region75: #{tpu_custom_call.1} parent=71 // pred_region
          %555 = dma.done %s547, 256
        $region76: #{tpu_custom_call.1} parent=71 // pred_fallthru
          _
        %s556 = sand.u32 %s41, 1
        %s557 = scalar_lea.sflag [#allocation6], %s556
        %s558 = sand.u32 %s75, 1
        %s559 = smul.addr %s558, 16
        %s560 = scalar_lea.vmem [#allocation5], %s559
        // Predicated region
        $region77: #{tpu_custom_call.1} parent=71 // pred_check
          %p561 = pneg %p88
        $region78: #{tpu_custom_call.1} parent=71 // pred_check_branch
          %563 = sbr.rel (%p561) target = $region80
        $region79: #{tpu_custom_call.1} parent=71 // pred_region
          %565 = dma.done %s557, 256
        $region80: #{tpu_custom_call.1} parent=71 // pred_fallthru
          _
        %s566 = sand.u32 %s41, 1
        %s567 = scalar_lea.sflag [#allocation6], %s566
        %s568 = sand.u32 %s101, 1
        %s569 = smul.addr %s568, 8
        %s570 = scalar_lea.vmem [#allocation7], %s569
        // Predicated region
        $region81: #{tpu_custom_call.1} parent=71 // pred_check
          %p571 = pneg %p114
        $region82: #{tpu_custom_call.1} parent=71 // pred_check_branch
          %573 = sbr.rel (%p571) target = $region84
        $region83: #{tpu_custom_call.1} parent=71 // pred_region
          %575 = dma.done %s567, 128
        $region84: #{tpu_custom_call.1} parent=71 // pred_fallthru
          _
        // Predicated region
        $region85: #{tpu_custom_call.1} parent=71 // pred_check
          %p576 = pneg %p135
        $region86: #{tpu_custom_call.1} parent=71 // pred_check_branch
          %578 = sbr.rel (%p576) target = $region88
        $region87: #{tpu_custom_call.1} parent=71 // pred_region
          %580 = dma.done [#allocation9], 4096
        $region88: #{tpu_custom_call.1} parent=71 // pred_fallthru
          _
        // Predicated region
        $region89: #{tpu_custom_call.1} parent=71 // pred_check
          %p581 = pneg %p156
        $region90: #{tpu_custom_call.1} parent=71 // pred_check_branch
          %583 = sbr.rel (%p581) target = $region92
        $region91: #{tpu_custom_call.1} parent=71 // pred_region
          %585 = dma.done [#allocation9], 3072
        $region92: #{tpu_custom_call.1} parent=71 // pred_fallthru
          _
        // Predicated region
        $region93: #{tpu_custom_call.1} parent=71 // pred_check
          %p586 = pneg %p177
        $region94: #{tpu_custom_call.1} parent=71 // pred_check_branch
          %588 = sbr.rel (%p586) target = $region96
        $region95: #{tpu_custom_call.1} parent=71 // pred_region
          %590 = dma.done [#allocation12], 2048
        $region96: #{tpu_custom_call.1} parent=71 // pred_fallthru
          _
        // Predicated region
        $region97: #{tpu_custom_call.1} parent=71 // pred_check
          %p591 = pneg %p261
        $region98: #{tpu_custom_call.1} parent=71 // pred_check_branch
          %593 = sbr.rel (%p591) target = $region100
        $region99: #{tpu_custom_call.1} parent=71 // pred_region
          %595 = dma.done [#allocation12], 2048
        $region100: #{tpu_custom_call.1} parent=71 // pred_fallthru
          _
        // Predicated region
        $region101: #{tpu_custom_call.1} parent=71 // pred_check
          %p596 = pneg %p324
        $region102: #{tpu_custom_call.1} parent=71 // pred_check_branch
          %598 = sbr.rel (%p596) target = $region104
        $region103: #{tpu_custom_call.1} parent=71 // pred_region
          %600 = dma.done [#allocation15], 6144
        $region104: #{tpu_custom_call.1} parent=71 // pred_fallthru
          _
        %s601 = sand.u32 %s49, 1
        %s602 = scalar_lea.sflag [#allocation3], %s601
        %s603 = sand.u32 %s49, 1
        %s604 = smul.addr %s603, 16
        %s605 = scalar_lea.vmem [#allocation2], %s604
        %p606 = pneg %p62
        %p607 = pneg %p59
        %s608 = sand.u32 %s41, 1
        %s609 = scalar_lea.sflag [#allocation6], %s608
        %s610 = sand.u32 %s75, 1
        %s611 = smul.addr %s610, 16
        %s612 = scalar_lea.vmem [#allocation5], %s611
        %p613 = pneg %p88
        %p614 = pneg %p85
        %s615 = sand.u32 %s41, 1
        %s616 = scalar_lea.sflag [#allocation6], %s615
        %s617 = sand.u32 %s101, 1
        %s618 = smul.addr %s617, 8
        %s619 = scalar_lea.vmem [#allocation7], %s618
        %p620 = pneg %p114
        %p621 = pneg %p111
        %p622 = pneg %p135
        %p623 = pneg %p132
        %p624 = pneg %p156
        %p625 = pneg %p153
        %p626 = pneg %p177
        %p627 = pneg %p174
        %p628 = pneg %p198
        %p629 = pneg %p195
        %p630 = pneg %p219
        %p631 = pneg %p216
        %p632 = pneg %p240
        %p633 = pneg %p237
        %p634 = pneg %p261
        %p635 = pneg %p258
        %p636 = pneg %p282
        %p637 = pneg %p279
        %p638 = pneg %p303
        %p639 = pneg %p300
        %p640 = pneg %p324
        %p641 = pneg %p321
        %p642 = pneg %p350
        %p643 = pneg %p347
        %s644 = sand.u32 %s337, 1
        %s645 = scalar_lea.sflag [#allocation4], %s644
        %s646 = sand.u32 %s337, 1
        %s647 = smul.addr %s646, 24
        %s648 = scalar_lea.vmem [#allocation16], %s647
        %p649 = pneg %p376
        %p650 = pneg %p373
        %s651 = sand.u32 %s363, 1
        %s652 = scalar_lea.sflag [#allocation18], %s651
        %s653 = sand.u32 %s363, 1
        %s654 = smul.addr %s653, 8
        %s655 = scalar_lea.vmem [#allocation17], %s654
        %v656 = vld [vmem:[#allocation13] sm:$0xff]
        %v657 = vld [vmem:[#allocation13 + $0x8] sm:$0xff]
        %v658 = vld [vmem:[#allocation13 + $0x10] sm:$0xff]
        %v659 = vld [vmem:[#allocation13 + $0x18] sm:$0xff]
        %v660 = vld [vmem:[#allocation13 + $0x20] sm:$0xff]
        %v661 = vld [vmem:[#allocation13 + $0x28] sm:$0xff]
        %v662 = vld [vmem:[#allocation13 + $0x30] sm:$0xff]
        %v663 = vld [vmem:[#allocation13 + $0x38] sm:$0xff]
        %v664 = vld [vmem:[#allocation13 + $0x40] sm:$0xff]
        %v665 = vld [vmem:[#allocation13 + $0x48] sm:$0xff]
        %v666 = vld [vmem:[#allocation13 + $0x50] sm:$0xff]
        %v667 = vld [vmem:[#allocation13 + $0x58] sm:$0xff]
        %v668 = vld [vmem:[#allocation13 + $0x60] sm:$0xff]
        %v669 = vld [vmem:[#allocation13 + $0x68] sm:$0xff]
        %v670 = vld [vmem:[#allocation13 + $0x70] sm:$0xff]
        %v671 = vld [vmem:[#allocation13 + $0x78] sm:$0xff]
        %v672 = vld [vmem:[%s10] sm:$0x1]
        %v673 = vld [vmem:[%s11] sm:$0x1]
        %v674 = vld [vmem:[%s550] sm:$0xff]
        %v675 = vld [vmem:[%s550 + $0x8] sm:$0xff]
        %v676 = vld [vmem:[#allocation8] sm:$0xff]
        %v677 = vld [vmem:[#allocation8 + $0x8] sm:$0xff]
        %v678 = vld [vmem:[#allocation8 + $0x10] sm:$0xff]
        %v679 = vld [vmem:[#allocation8 + $0x18] sm:$0xff]
        %v680 = vld [vmem:[#allocation8 + $0x20] sm:$0xff]
        %v681 = vld [vmem:[#allocation8 + $0x28] sm:$0xff]
        %v682 = vld [vmem:[#allocation8 + $0x30] sm:$0xff]
        %v683 = vld [vmem:[#allocation8 + $0x38] sm:$0xff]
        %v684 = vld [vmem:[#allocation8 + $0x40] sm:$0xff]
        %v685 = vld [vmem:[#allocation8 + $0x48] sm:$0xff]
        %v686 = vld [vmem:[#allocation8 + $0x50] sm:$0xff]
        %v687 = vld [vmem:[#allocation8 + $0x58] sm:$0xff]
        %v688 = vld [vmem:[#allocation8 + $0x60] sm:$0xff]
        %v689 = vld [vmem:[#allocation8 + $0x68] sm:$0xff]
        %v690 = vld [vmem:[#allocation8 + $0x70] sm:$0xff]
        %v691 = vld [vmem:[#allocation8 + $0x78] sm:$0xff]
        %v692 = vld [vmem:[#allocation8 + $0x80] sm:$0xff]
        %v693 = vld [vmem:[#allocation8 + $0x88] sm:$0xff]
        %v694 = vld [vmem:[#allocation8 + $0x90] sm:$0xff]
        %v695 = vld [vmem:[#allocation8 + $0x98] sm:$0xff]
        %v696 = vld [vmem:[#allocation8 + $0xa0] sm:$0xff]
        %v697 = vld [vmem:[#allocation8 + $0xa8] sm:$0xff]
        %v698 = vld [vmem:[#allocation8 + $0xb0] sm:$0xff]
        %v699 = vld [vmem:[#allocation8 + $0xb8] sm:$0xff]
        %v700 = vld [vmem:[#allocation8 + $0xc0] sm:$0xff]
        %v701 = vld [vmem:[#allocation8 + $0xc8] sm:$0xff]
        %v702 = vld [vmem:[#allocation8 + $0xd0] sm:$0xff]
        %v703 = vld [vmem:[#allocation8 + $0xd8] sm:$0xff]
        %v704 = vld [vmem:[#allocation8 + $0xe0] sm:$0xff]
        %v705 = vld [vmem:[#allocation8 + $0xe8] sm:$0xff]
        %v706 = vld [vmem:[#allocation8 + $0xf0] sm:$0xff]
        %v707 = vld [vmem:[#allocation8 + $0xf8] sm:$0xff]
        %v708 = vld [vmem:[%s6] sm:$0x1]
        %v710 = vperm.slane %v708, 0
        %v712 = vand.u32 %v691, 4294901760
        %713 = vmatpush.msra.mxu0 %v712
        %v714 = vand.u32 %v690, 4294901760
        %715 = vmatpush.msra.mxu0 %v714
        %v716 = vand.u32 %v689, 4294901760
        %717 = vmatpush.msra.mxu0 %v716
        %v718 = vand.u32 %v688, 4294901760
        %719 = vmatpush.msra.mxu0 %v718
        %v720 = vand.u32 %v687, 4294901760
        %721 = vmatpush.msra.mxu0 %v720
        %v722 = vand.u32 %v686, 4294901760
        %723 = vmatpush.msra.mxu0 %v722
        %v724 = vand.u32 %v685, 4294901760
        %725 = vmatpush.msra.mxu0 %v724
        %v726 = vand.u32 %v684, 4294901760
        %727 = vmatpush.msra.mxu0 %v726
        %v728 = vand.u32 %v683, 4294901760
        %729 = vmatpush.msra.mxu0 %v728
        %v730 = vand.u32 %v682, 4294901760
        %731 = vmatpush.msra.mxu0 %v730
        %v732 = vand.u32 %v681, 4294901760
        %733 = vmatpush.msra.mxu0 %v732
        %v734 = vand.u32 %v680, 4294901760
        %735 = vmatpush.msra.mxu0 %v734
        %v736 = vand.u32 %v679, 4294901760
        %737 = vmatpush.msra.mxu0 %v736
        %v738 = vand.u32 %v678, 4294901760
        %739 = vmatpush.msra.mxu0 %v738
        %v740 = vand.u32 %v677, 4294901760
        %741 = vmatpush.msra.mxu0 %v740
        %v742 = vand.u32 %v676, 4294901760
        %743 = vmatpush.msra.mxu0 %v742
        %v744 = vand.u32 %v674, 4294901760
        %v745 = vsub.f32 %v674, %v744
        %v746 = vand.u32 %v745, 4294901760
        %v747 = vsub.f32 %v745, %v746
        %v748 = vand.u32 %v747, 4294901760
        %749 = vmatmul.f32.gmra.mxu0 %v748
        %v750 = vpop.f32.mrf.mxu0
        %v751 = vadd.f32 %v710, %v750
        %752 = vdwg.mxu0
        %v753 = vand.u32 %v691, 4294901760
        %v754 = vsub.f32 %v691, %v753
        %v755 = vand.u32 %v754, 4294901760
        %v756 = vsub.f32 %v754, %v755
        %v757 = vand.u32 %v756, 4294901760
        %758 = vmatpush.msra.mxu0 %v757
        %v759 = vand.u32 %v690, 4294901760
        %v760 = vsub.f32 %v690, %v759
        %v761 = vand.u32 %v760, 4294901760
        %v762 = vsub.f32 %v760, %v761
        %v763 = vand.u32 %v762, 4294901760
        %764 = vmatpush.msra.mxu0 %v763
        %v765 = vand.u32 %v689, 4294901760
        %v766 = vsub.f32 %v689, %v765
        %v767 = vand.u32 %v766, 4294901760
        %v768 = vsub.f32 %v766, %v767
        %v769 = vand.u32 %v768, 4294901760
        %770 = vmatpush.msra.mxu0 %v769
        %v771 = vand.u32 %v688, 4294901760
        %v772 = vsub.f32 %v688, %v771
        %v773 = vand.u32 %v772, 4294901760
        %v774 = vsub.f32 %v772, %v773
        %v775 = vand.u32 %v774, 4294901760
        %776 = vmatpush.msra.mxu0 %v775
        %v777 = vand.u32 %v687, 4294901760
        %v778 = vsub.f32 %v687, %v777
        %v779 = vand.u32 %v778, 4294901760
        %v780 = vsub.f32 %v778, %v779
        %v781 = vand.u32 %v780, 4294901760
        %782 = vmatpush.msra.mxu0 %v781
        %v783 = vand.u32 %v686, 4294901760
        %v784 = vsub.f32 %v686, %v783
        %v785 = vand.u32 %v784, 4294901760
        %v786 = vsub.f32 %v784, %v785
        %v787 = vand.u32 %v786, 4294901760
        %788 = vmatpush.msra.mxu0 %v787
        %v789 = vand.u32 %v685, 4294901760
        %v790 = vsub.f32 %v685, %v789
        %v791 = vand.u32 %v790, 4294901760
        %v792 = vsub.f32 %v790, %v791
        %v793 = vand.u32 %v792, 4294901760
        %794 = vmatpush.msra.mxu0 %v793
        %v795 = vand.u32 %v684, 4294901760
        %v796 = vsub.f32 %v684, %v795
        %v797 = vand.u32 %v796, 4294901760
        %v798 = vsub.f32 %v796, %v797
        %v799 = vand.u32 %v798, 4294901760
        %800 = vmatpush.msra.mxu0 %v799
        %v801 = vand.u32 %v683, 4294901760
        %v802 = vsub.f32 %v683, %v801
        %v803 = vand.u32 %v802, 4294901760
        %v804 = vsub.f32 %v802, %v803
        %v805 = vand.u32 %v804, 4294901760
        %806 = vmatpush.msra.mxu0 %v805
        %v807 = vand.u32 %v682, 4294901760
        %v808 = vsub.f32 %v682, %v807
        %v809 = vand.u32 %v808, 4294901760
        %v810 = vsub.f32 %v808, %v809
        %v811 = vand.u32 %v810, 4294901760
        %812 = vmatpush.msra.mxu0 %v811
        %v813 = vand.u32 %v681, 4294901760
        %v814 = vsub.f32 %v681, %v813
        %v815 = vand.u32 %v814, 4294901760
        %v816 = vsub.f32 %v814, %v815
        %v817 = vand.u32 %v816, 4294901760
        %818 = vmatpush.msra.mxu0 %v817
        %v819 = vand.u32 %v680, 4294901760
        %v820 = vsub.f32 %v680, %v819
        %v821 = vand.u32 %v820, 4294901760
        %v822 = vsub.f32 %v820, %v821
        %v823 = vand.u32 %v822, 4294901760
        %824 = vmatpush.msra.mxu0 %v823
        %v825 = vand.u32 %v679, 4294901760
        %v826 = vsub.f32 %v679, %v825
        %v827 = vand.u32 %v826, 4294901760
        %v828 = vsub.f32 %v826, %v827
        %v829 = vand.u32 %v828, 4294901760
        %830 = vmatpush.msra.mxu0 %v829
        %v831 = vand.u32 %v678, 4294901760
        %v832 = vsub.f32 %v678, %v831
        %v833 = vand.u32 %v832, 4294901760
        %v834 = vsub.f32 %v832, %v833
        %v835 = vand.u32 %v834, 4294901760
        %836 = vmatpush.msra.mxu0 %v835
        %v837 = vand.u32 %v677, 4294901760
        %v838 = vsub.f32 %v677, %v837
        %v839 = vand.u32 %v838, 4294901760
        %v840 = vsub.f32 %v838, %v839
        %v841 = vand.u32 %v840, 4294901760
        %842 = vmatpush.msra.mxu0 %v841
        %v843 = vand.u32 %v676, 4294901760
        %v844 = vsub.f32 %v676, %v843
        %v845 = vand.u32 %v844, 4294901760
        %v846 = vsub.f32 %v844, %v845
        %v847 = vand.u32 %v846, 4294901760
        %848 = vmatpush.msra.mxu0 %v847
        %v849 = vand.u32 %v674, 4294901760
        %850 = vmatmul.f32.gmra.mxu0 %v849
        %v851 = vpop.f32.mrf.mxu0
        %v852 = vadd.f32 %v751, %v851
        %853 = vdwg.mxu0
        %v854 = vand.u32 %v691, 4294901760
        %v855 = vsub.f32 %v691, %v854
        %856 = vmatpush.msra.mxu0 %v855
        %v857 = vand.u32 %v690, 4294901760
        %v858 = vsub.f32 %v690, %v857
        %859 = vmatpush.msra.mxu0 %v858
        %v860 = vand.u32 %v689, 4294901760
        %v861 = vsub.f32 %v689, %v860
        %862 = vmatpush.msra.mxu0 %v861
        %v863 = vand.u32 %v688, 4294901760
        %v864 = vsub.f32 %v688, %v863
        %865 = vmatpush.msra.mxu0 %v864
        %v866 = vand.u32 %v687, 4294901760
        %v867 = vsub.f32 %v687, %v866
        %868 = vmatpush.msra.mxu0 %v867
        %v869 = vand.u32 %v686, 4294901760
        %v870 = vsub.f32 %v686, %v869
        %871 = vmatpush.msra.mxu0 %v870
        %v872 = vand.u32 %v685, 4294901760
        %v873 = vsub.f32 %v685, %v872
        %874 = vmatpush.msra.mxu0 %v873
        %v875 = vand.u32 %v684, 4294901760
        %v876 = vsub.f32 %v684, %v875
        %877 = vmatpush.msra.mxu0 %v876
        %v878 = vand.u32 %v683, 4294901760
        %v879 = vsub.f32 %v683, %v878
        %880 = vmatpush.msra.mxu0 %v879
        %v881 = vand.u32 %v682, 4294901760
        %v882 = vsub.f32 %v682, %v881
        %883 = vmatpush.msra.mxu0 %v882
        %v884 = vand.u32 %v681, 4294901760
        %v885 = vsub.f32 %v681, %v884
        %886 = vmatpush.msra.mxu0 %v885
        %v887 = vand.u32 %v680, 4294901760
        %v888 = vsub.f32 %v680, %v887
        %889 = vmatpush.msra.mxu0 %v888
        %v890 = vand.u32 %v679, 4294901760
        %v891 = vsub.f32 %v679, %v890
        %892 = vmatpush.msra.mxu0 %v891
        %v893 = vand.u32 %v678, 4294901760
        %v894 = vsub.f32 %v678, %v893
        %895 = vmatpush.msra.mxu0 %v894
        %v896 = vand.u32 %v677, 4294901760
        %v897 = vsub.f32 %v677, %v896
        %898 = vmatpush.msra.mxu0 %v897
        %v899 = vand.u32 %v676, 4294901760
        %v900 = vsub.f32 %v676, %v899
        %901 = vmatpush.msra.mxu0 %v900
        %v902 = vand.u32 %v674, 4294901760
        %v903 = vsub.f32 %v674, %v902
        %904 = vmatmul.f32.gmra.mxu0 %v903
        %v905 = vpop.f32.mrf.mxu0
        %v906 = vadd.f32 %v852, %v905
        %907 = vdwg.mxu0
        %v908 = vand.u32 %v691, 4294901760
        %909 = vmatpush.msra.mxu0 %v908
        %v910 = vand.u32 %v690, 4294901760
        %911 = vmatpush.msra.mxu0 %v910
        %v912 = vand.u32 %v689, 4294901760
        %913 = vmatpush.msra.mxu0 %v912
        %v914 = vand.u32 %v688, 4294901760
        %915 = vmatpush.msra.mxu0 %v914
        %v916 = vand.u32 %v687, 4294901760
        %917 = vmatpush.msra.mxu0 %v916
        %v918 = vand.u32 %v686, 4294901760
        %919 = vmatpush.msra.mxu0 %v918
        %v920 = vand.u32 %v685, 4294901760
        %921 = vmatpush.msra.mxu0 %v920
        %v922 = vand.u32 %v684, 4294901760
        %923 = vmatpush.msra.mxu0 %v922
        %v924 = vand.u32 %v683, 4294901760
        %925 = vmatpush.msra.mxu0 %v924
        %v926 = vand.u32 %v682, 4294901760
        %927 = vmatpush.msra.mxu0 %v926
        %v928 = vand.u32 %v681, 4294901760
        %929 = vmatpush.msra.mxu0 %v928
        %v930 = vand.u32 %v680, 4294901760
        %931 = vmatpush.msra.mxu0 %v930
        %v932 = vand.u32 %v679, 4294901760
        %933 = vmatpush.msra.mxu0 %v932
        %v934 = vand.u32 %v678, 4294901760
        %935 = vmatpush.msra.mxu0 %v934
        %v936 = vand.u32 %v677, 4294901760
        %937 = vmatpush.msra.mxu0 %v936
        %v938 = vand.u32 %v676, 4294901760
        %939 = vmatpush.msra.mxu0 %v938
        %v940 = vand.u32 %v674, 4294901760
        %v941 = vsub.f32 %v674, %v940
        %v942 = vand.u32 %v941, 4294901760
        %943 = vmatmul.f32.gmra.mxu0 %v942
        %v944 = vpop.f32.mrf.mxu0
        %v945 = vadd.f32 %v906, %v944
        %946 = vdwg.mxu0
        %v947 = vand.u32 %v691, 4294901760
        %v948 = vsub.f32 %v691, %v947
        %v949 = vand.u32 %v948, 4294901760
        %950 = vmatpush.msra.mxu0 %v949
        %v951 = vand.u32 %v690, 4294901760
        %v952 = vsub.f32 %v690, %v951
        %v953 = vand.u32 %v952, 4294901760
        %954 = vmatpush.msra.mxu0 %v953
        %v955 = vand.u32 %v689, 4294901760
        %v956 = vsub.f32 %v689, %v955
        %v957 = vand.u32 %v956, 4294901760
        %958 = vmatpush.msra.mxu0 %v957
        %v959 = vand.u32 %v688, 4294901760
        %v960 = vsub.f32 %v688, %v959
        %v961 = vand.u32 %v960, 4294901760
        %962 = vmatpush.msra.mxu0 %v961
        %v963 = vand.u32 %v687, 4294901760
        %v964 = vsub.f32 %v687, %v963
        %v965 = vand.u32 %v964, 4294901760
        %966 = vmatpush.msra.mxu0 %v965
        %v967 = vand.u32 %v686, 4294901760
        %v968 = vsub.f32 %v686, %v967
        %v969 = vand.u32 %v968, 4294901760
        %970 = vmatpush.msra.mxu0 %v969
        %v971 = vand.u32 %v685, 4294901760
        %v972 = vsub.f32 %v685, %v971
        %v973 = vand.u32 %v972, 4294901760
        %974 = vmatpush.msra.mxu0 %v973
        %v975 = vand.u32 %v684, 4294901760
        %v976 = vsub.f32 %v684, %v975
        %v977 = vand.u32 %v976, 4294901760
        %978 = vmatpush.msra.mxu0 %v977
        %v979 = vand.u32 %v683, 4294901760
        %v980 = vsub.f32 %v683, %v979
        %v981 = vand.u32 %v980, 4294901760
        %982 = vmatpush.msra.mxu0 %v981
        %v983 = vand.u32 %v682, 4294901760
        %v984 = vsub.f32 %v682, %v983
        %v985 = vand.u32 %v984, 4294901760
        %986 = vmatpush.msra.mxu0 %v985
        %v987 = vand.u32 %v681, 4294901760
        %v988 = vsub.f32 %v681, %v987
        %v989 = vand.u32 %v988, 4294901760
        %990 = vmatpush.msra.mxu0 %v989
        %v991 = vand.u32 %v680, 4294901760
        %v992 = vsub.f32 %v680, %v991
        %v993 = vand.u32 %v992, 4294901760
        %994 = vmatpush.msra.mxu0 %v993
        %v995 = vand.u32 %v679, 4294901760
        %v996 = vsub.f32 %v679, %v995
        %v997 = vand.u32 %v996, 4294901760
        %998 = vmatpush.msra.mxu0 %v997
        %v999 = vand.u32 %v678, 4294901760
        %v1000 = vsub.f32 %v678, %v999
        %v1001 = vand.u32 %v1000, 4294901760
        %1002 = vmatpush.msra.mxu0 %v1001
        %v1003 = vand.u32 %v677, 4294901760
        %v1004 = vsub.f32 %v677, %v1003
        %v1005 = vand.u32 %v1004, 4294901760
        %1006 = vmatpush.msra.mxu0 %v1005
        %v1007 = vand.u32 %v676, 4294901760
        %v1008 = vsub.f32 %v676, %v1007
        %v1009 = vand.u32 %v1008, 4294901760
        %1010 = vmatpush.msra.mxu0 %v1009
        %v1011 = vand.u32 %v674, 4294901760
        %1012 = vmatmul.f32.gmra.mxu0 %v1011
        %v1013 = vpop.f32.mrf.mxu0
        %v1014 = vadd.f32 %v945, %v1013
        %1015 = vdwg.mxu0
        %v1016 = vand.u32 %v691, 4294901760
        %1017 = vmatpush.msra.mxu0 %v1016
        %v1018 = vand.u32 %v690, 4294901760
        %1019 = vmatpush.msra.mxu0 %v1018
        %v1020 = vand.u32 %v689, 4294901760
        %1021 = vmatpush.msra.mxu0 %v1020
        %v1022 = vand.u32 %v688, 4294901760
        %1023 = vmatpush.msra.mxu0 %v1022
        %v1024 = vand.u32 %v687, 4294901760
        %1025 = vmatpush.msra.mxu0 %v1024
        %v1026 = vand.u32 %v686, 4294901760
        %1027 = vmatpush.msra.mxu0 %v1026
        %v1028 = vand.u32 %v685, 4294901760
        %1029 = vmatpush.msra.mxu0 %v1028
        %v1030 = vand.u32 %v684, 4294901760
        %1031 = vmatpush.msra.mxu0 %v1030
        %v1032 = vand.u32 %v683, 4294901760
        %1033 = vmatpush.msra.mxu0 %v1032
        %v1034 = vand.u32 %v682, 4294901760
        %1035 = vmatpush.msra.mxu0 %v1034
        %v1036 = vand.u32 %v681, 4294901760
        %1037 = vmatpush.msra.mxu0 %v1036
        %v1038 = vand.u32 %v680, 4294901760
        %1039 = vmatpush.msra.mxu0 %v1038
        %v1040 = vand.u32 %v679, 4294901760
        %1041 = vmatpush.msra.mxu0 %v1040
        %v1042 = vand.u32 %v678, 4294901760
        %1043 = vmatpush.msra.mxu0 %v1042
        %v1044 = vand.u32 %v677, 4294901760
        %1045 = vmatpush.msra.mxu0 %v1044
        %v1046 = vand.u32 %v676, 4294901760
        %1047 = vmatpush.msra.mxu0 %v1046
        %v1048 = vand.u32 %v674, 4294901760
        %1049 = vmatmul.f32.gmra.mxu0 %v1048
        %v1050 = vpop.f32.mrf.mxu0
        %v1051 = vadd.f32 %v1014, %v1050
        %1052 = vdwg.mxu0
        %v1053 = vand.u32 %v707, 4294901760
        %1054 = vmatpush.msra.mxu0 %v1053
        %v1055 = vand.u32 %v706, 4294901760
        %1056 = vmatpush.msra.mxu0 %v1055
        %v1057 = vand.u32 %v705, 4294901760
        %1058 = vmatpush.msra.mxu0 %v1057
        %v1059 = vand.u32 %v704, 4294901760
        %1060 = vmatpush.msra.mxu0 %v1059
        %v1061 = vand.u32 %v703, 4294901760
        %1062 = vmatpush.msra.mxu0 %v1061
        %v1063 = vand.u32 %v702, 4294901760
        %1064 = vmatpush.msra.mxu0 %v1063
        %v1065 = vand.u32 %v701, 4294901760
        %1066 = vmatpush.msra.mxu0 %v1065
        %v1067 = vand.u32 %v700, 4294901760
        %1068 = vmatpush.msra.mxu0 %v1067
        %v1069 = vand.u32 %v699, 4294901760
        %1070 = vmatpush.msra.mxu0 %v1069
        %v1071 = vand.u32 %v698, 4294901760
        %1072 = vmatpush.msra.mxu0 %v1071
        %v1073 = vand.u32 %v697, 4294901760
        %1074 = vmatpush.msra.mxu0 %v1073
        %v1075 = vand.u32 %v696, 4294901760
        %1076 = vmatpush.msra.mxu0 %v1075
        %v1077 = vand.u32 %v695, 4294901760
        %1078 = vmatpush.msra.mxu0 %v1077
        %v1079 = vand.u32 %v694, 4294901760
        %1080 = vmatpush.msra.mxu0 %v1079
        %v1081 = vand.u32 %v693, 4294901760
        %1082 = vmatpush.msra.mxu0 %v1081
        %v1083 = vand.u32 %v692, 4294901760
        %1084 = vmatpush.msra.mxu0 %v1083
        %v1085 = vand.u32 %v675, 4294901760
        %v1086 = vsub.f32 %v675, %v1085
        %v1087 = vand.u32 %v1086, 4294901760
        %v1088 = vsub.f32 %v1086, %v1087
        %v1089 = vand.u32 %v1088, 4294901760
        %1090 = vmatmul.f32.gmra.mxu0 %v1089
        %v1091 = vpop.f32.mrf.mxu0
        %v1092 = vadd.f32 %v1051, %v1091
        %1093 = vdwg.mxu0
        %v1094 = vand.u32 %v707, 4294901760
        %v1095 = vsub.f32 %v707, %v1094
        %v1096 = vand.u32 %v1095, 4294901760
        %v1097 = vsub.f32 %v1095, %v1096
        %v1098 = vand.u32 %v1097, 4294901760
        %1099 = vmatpush.msra.mxu0 %v1098
        %v1100 = vand.u32 %v706, 4294901760
        %v1101 = vsub.f32 %v706, %v1100
        %v1102 = vand.u32 %v1101, 4294901760
        %v1103 = vsub.f32 %v1101, %v1102
        %v1104 = vand.u32 %v1103, 4294901760
        %1105 = vmatpush.msra.mxu0 %v1104
        %v1106 = vand.u32 %v705, 4294901760
        %v1107 = vsub.f32 %v705, %v1106
        %v1108 = vand.u32 %v1107, 4294901760
        %v1109 = vsub.f32 %v1107, %v1108
        %v1110 = vand.u32 %v1109, 4294901760
        %1111 = vmatpush.msra.mxu0 %v1110
        %v1112 = vand.u32 %v704, 4294901760
        %v1113 = vsub.f32 %v704, %v1112
        %v1114 = vand.u32 %v1113, 4294901760
        %v1115 = vsub.f32 %v1113, %v1114
        %v1116 = vand.u32 %v1115, 4294901760
        %1117 = vmatpush.msra.mxu0 %v1116
        %v1118 = vand.u32 %v703, 4294901760
        %v1119 = vsub.f32 %v703, %v1118
        %v1120 = vand.u32 %v1119, 4294901760
        %v1121 = vsub.f32 %v1119, %v1120
        %v1122 = vand.u32 %v1121, 4294901760
        %1123 = vmatpush.msra.mxu0 %v1122
        %v1124 = vand.u32 %v702, 4294901760
        %v1125 = vsub.f32 %v702, %v1124
        %v1126 = vand.u32 %v1125, 4294901760
        %v1127 = vsub.f32 %v1125, %v1126
        %v1128 = vand.u32 %v1127, 4294901760
        %1129 = vmatpush.msra.mxu0 %v1128
        %v1130 = vand.u32 %v701, 4294901760
        %v1131 = vsub.f32 %v701, %v1130
        %v1132 = vand.u32 %v1131, 4294901760
        %v1133 = vsub.f32 %v1131, %v1132
        %v1134 = vand.u32 %v1133, 4294901760
        %1135 = vmatpush.msra.mxu0 %v1134
        %v1136 = vand.u32 %v700, 4294901760
        %v1137 = vsub.f32 %v700, %v1136
        %v1138 = vand.u32 %v1137, 4294901760
        %v1139 = vsub.f32 %v1137, %v1138
        %v1140 = vand.u32 %v1139, 4294901760
        %1141 = vmatpush.msra.mxu0 %v1140
        %v1142 = vand.u32 %v699, 4294901760
        %v1143 = vsub.f32 %v699, %v1142
        %v1144 = vand.u32 %v1143, 4294901760
        %v1145 = vsub.f32 %v1143, %v1144
        %v1146 = vand.u32 %v1145, 4294901760
        %1147 = vmatpush.msra.mxu0 %v1146
        %v1148 = vand.u32 %v698, 4294901760
        %v1149 = vsub.f32 %v698, %v1148
        %v1150 = vand.u32 %v1149, 4294901760
        %v1151 = vsub.f32 %v1149, %v1150
        %v1152 = vand.u32 %v1151, 4294901760
        %1153 = vmatpush.msra.mxu0 %v1152
        %v1154 = vand.u32 %v697, 4294901760
        %v1155 = vsub.f32 %v697, %v1154
        %v1156 = vand.u32 %v1155, 4294901760
        %v1157 = vsub.f32 %v1155, %v1156
        %v1158 = vand.u32 %v1157, 4294901760
        %1159 = vmatpush.msra.mxu0 %v1158
        %v1160 = vand.u32 %v696, 4294901760
        %v1161 = vsub.f32 %v696, %v1160
        %v1162 = vand.u32 %v1161, 4294901760
        %v1163 = vsub.f32 %v1161, %v1162
        %v1164 = vand.u32 %v1163, 4294901760
        %1165 = vmatpush.msra.mxu0 %v1164
        %v1166 = vand.u32 %v695, 4294901760
        %v1167 = vsub.f32 %v695, %v1166
        %v1168 = vand.u32 %v1167, 4294901760
        %v1169 = vsub.f32 %v1167, %v1168
        %v1170 = vand.u32 %v1169, 4294901760
        %1171 = vmatpush.msra.mxu0 %v1170
        %v1172 = vand.u32 %v694, 4294901760
        %v1173 = vsub.f32 %v694, %v1172
        %v1174 = vand.u32 %v1173, 4294901760
        %v1175 = vsub.f32 %v1173, %v1174
        %v1176 = vand.u32 %v1175, 4294901760
        %1177 = vmatpush.msra.mxu0 %v1176
        %v1178 = vand.u32 %v693, 4294901760
        %v1179 = vsub.f32 %v693, %v1178
        %v1180 = vand.u32 %v1179, 4294901760
        %v1181 = vsub.f32 %v1179, %v1180
        %v1182 = vand.u32 %v1181, 4294901760
        %1183 = vmatpush.msra.mxu0 %v1182
        %v1184 = vand.u32 %v692, 4294901760
        %v1185 = vsub.f32 %v692, %v1184
        %v1186 = vand.u32 %v1185, 4294901760
        %v1187 = vsub.f32 %v1185, %v1186
        %v1188 = vand.u32 %v1187, 4294901760
        %1189 = vmatpush.msra.mxu0 %v1188
        %v1190 = vand.u32 %v675, 4294901760
        %1191 = vmatmul.f32.gmra.mxu0 %v1190
        %v1192 = vpop.f32.mrf.mxu0
        %v1193 = vadd.f32 %v1092, %v1192
        %1194 = vdwg.mxu0
        %v1195 = vand.u32 %v707, 4294901760
        %v1196 = vsub.f32 %v707, %v1195
        %1197 = vmatpush.msra.mxu0 %v1196
        %v1198 = vand.u32 %v706, 4294901760
        %v1199 = vsub.f32 %v706, %v1198
        %1200 = vmatpush.msra.mxu0 %v1199
        %v1201 = vand.u32 %v705, 4294901760
        %v1202 = vsub.f32 %v705, %v1201
        %1203 = vmatpush.msra.mxu0 %v1202
        %v1204 = vand.u32 %v704, 4294901760
        %v1205 = vsub.f32 %v704, %v1204
        %1206 = vmatpush.msra.mxu0 %v1205
        %v1207 = vand.u32 %v703, 4294901760
        %v1208 = vsub.f32 %v703, %v1207
        %1209 = vmatpush.msra.mxu0 %v1208
        %v1210 = vand.u32 %v702, 4294901760
        %v1211 = vsub.f32 %v702, %v1210
        %1212 = vmatpush.msra.mxu0 %v1211
        %v1213 = vand.u32 %v701, 4294901760
        %v1214 = vsub.f32 %v701, %v1213
        %1215 = vmatpush.msra.mxu0 %v1214
        %v1216 = vand.u32 %v700, 4294901760
        %v1217 = vsub.f32 %v700, %v1216
        %1218 = vmatpush.msra.mxu0 %v1217
        %v1219 = vand.u32 %v699, 4294901760
        %v1220 = vsub.f32 %v699, %v1219
        %1221 = vmatpush.msra.mxu0 %v1220
        %v1222 = vand.u32 %v698, 4294901760
        %v1223 = vsub.f32 %v698, %v1222
        %1224 = vmatpush.msra.mxu0 %v1223
        %v1225 = vand.u32 %v697, 4294901760
        %v1226 = vsub.f32 %v697, %v1225
        %1227 = vmatpush.msra.mxu0 %v1226
        %v1228 = vand.u32 %v696, 4294901760
        %v1229 = vsub.f32 %v696, %v1228
        %1230 = vmatpush.msra.mxu0 %v1229
        %v1231 = vand.u32 %v695, 4294901760
        %v1232 = vsub.f32 %v695, %v1231
        %1233 = vmatpush.msra.mxu0 %v1232
        %v1234 = vand.u32 %v694, 4294901760
        %v1235 = vsub.f32 %v694, %v1234
        %1236 = vmatpush.msra.mxu0 %v1235
        %v1237 = vand.u32 %v693, 4294901760
        %v1238 = vsub.f32 %v693, %v1237
        %1239 = vmatpush.msra.mxu0 %v1238
        %v1240 = vand.u32 %v692, 4294901760
        %v1241 = vsub.f32 %v692, %v1240
        %1242 = vmatpush.msra.mxu0 %v1241
        %v1243 = vand.u32 %v675, 4294901760
        %v1244 = vsub.f32 %v675, %v1243
        %1245 = vmatmul.f32.gmra.mxu0 %v1244
        %v1246 = vpop.f32.mrf.mxu0
        %v1247 = vadd.f32 %v1193, %v1246
        %1248 = vdwg.mxu0
        %v1249 = vand.u32 %v707, 4294901760
        %1250 = vmatpush.msra.mxu0 %v1249
        %v1251 = vand.u32 %v706, 4294901760
        %1252 = vmatpush.msra.mxu0 %v1251
        %v1253 = vand.u32 %v705, 4294901760
        %1254 = vmatpush.msra.mxu0 %v1253
        %v1255 = vand.u32 %v704, 4294901760
        %1256 = vmatpush.msra.mxu0 %v1255
        %v1257 = vand.u32 %v703, 4294901760
        %1258 = vmatpush.msra.mxu0 %v1257
        %v1259 = vand.u32 %v702, 4294901760
        %1260 = vmatpush.msra.mxu0 %v1259
        %v1261 = vand.u32 %v701, 4294901760
        %1262 = vmatpush.msra.mxu0 %v1261
        %v1263 = vand.u32 %v700, 4294901760
        %1264 = vmatpush.msra.mxu0 %v1263
        %v1265 = vand.u32 %v699, 4294901760
        %1266 = vmatpush.msra.mxu0 %v1265
        %v1267 = vand.u32 %v698, 4294901760
        %1268 = vmatpush.msra.mxu0 %v1267
        %v1269 = vand.u32 %v697, 4294901760
        %1270 = vmatpush.msra.mxu0 %v1269
        %v1271 = vand.u32 %v696, 4294901760
        %1272 = vmatpush.msra.mxu0 %v1271
        %v1273 = vand.u32 %v695, 4294901760
        %1274 = vmatpush.msra.mxu0 %v1273
        %v1275 = vand.u32 %v694, 4294901760
        %1276 = vmatpush.msra.mxu0 %v1275
        %v1277 = vand.u32 %v693, 4294901760
        %1278 = vmatpush.msra.mxu0 %v1277
        %v1279 = vand.u32 %v692, 4294901760
        %1280 = vmatpush.msra.mxu0 %v1279
        %v1281 = vand.u32 %v675, 4294901760
        %v1282 = vsub.f32 %v675, %v1281
        %v1283 = vand.u32 %v1282, 4294901760
        %1284 = vmatmul.f32.gmra.mxu0 %v1283
        %v1285 = vpop.f32.mrf.mxu0
        %v1286 = vadd.f32 %v1247, %v1285
        %1287 = vdwg.mxu0
        %v1288 = vand.u32 %v707, 4294901760
        %v1289 = vsub.f32 %v707, %v1288
        %v1290 = vand.u32 %v1289, 4294901760
        %1291 = vmatpush.msra.mxu0 %v1290
        %v1292 = vand.u32 %v706, 4294901760
        %v1293 = vsub.f32 %v706, %v1292
        %v1294 = vand.u32 %v1293, 4294901760
        %1295 = vmatpush.msra.mxu0 %v1294
        %v1296 = vand.u32 %v705, 4294901760
        %v1297 = vsub.f32 %v705, %v1296
        %v1298 = vand.u32 %v1297, 4294901760
        %1299 = vmatpush.msra.mxu0 %v1298
        %v1300 = vand.u32 %v704, 4294901760
        %v1301 = vsub.f32 %v704, %v1300
        %v1302 = vand.u32 %v1301, 4294901760
        %1303 = vmatpush.msra.mxu0 %v1302
        %v1304 = vand.u32 %v703, 4294901760
        %v1305 = vsub.f32 %v703, %v1304
        %v1306 = vand.u32 %v1305, 4294901760
        %1307 = vmatpush.msra.mxu0 %v1306
        %v1308 = vand.u32 %v702, 4294901760
        %v1309 = vsub.f32 %v702, %v1308
        %v1310 = vand.u32 %v1309, 4294901760
        %1311 = vmatpush.msra.mxu0 %v1310
        %v1312 = vand.u32 %v701, 4294901760
        %v1313 = vsub.f32 %v701, %v1312
        %v1314 = vand.u32 %v1313, 4294901760
        %1315 = vmatpush.msra.mxu0 %v1314
        %v1316 = vand.u32 %v700, 4294901760
        %v1317 = vsub.f32 %v700, %v1316
        %v1318 = vand.u32 %v1317, 4294901760
        %1319 = vmatpush.msra.mxu0 %v1318
        %v1320 = vand.u32 %v699, 4294901760
        %v1321 = vsub.f32 %v699, %v1320
        %v1322 = vand.u32 %v1321, 4294901760
        %1323 = vmatpush.msra.mxu0 %v1322
        %v1324 = vand.u32 %v698, 4294901760
        %v1325 = vsub.f32 %v698, %v1324
        %v1326 = vand.u32 %v1325, 4294901760
        %1327 = vmatpush.msra.mxu0 %v1326
        %v1328 = vand.u32 %v697, 4294901760
        %v1329 = vsub.f32 %v697, %v1328
        %v1330 = vand.u32 %v1329, 4294901760
        %1331 = vmatpush.msra.mxu0 %v1330
        %v1332 = vand.u32 %v696, 4294901760
        %v1333 = vsub.f32 %v696, %v1332
        %v1334 = vand.u32 %v1333, 4294901760
        %1335 = vmatpush.msra.mxu0 %v1334
        %v1336 = vand.u32 %v695, 4294901760
        %v1337 = vsub.f32 %v695, %v1336
        %v1338 = vand.u32 %v1337, 4294901760
        %1339 = vmatpush.msra.mxu0 %v1338
        %v1340 = vand.u32 %v694, 4294901760
        %v1341 = vsub.f32 %v694, %v1340
        %v1342 = vand.u32 %v1341, 4294901760
        %1343 = vmatpush.msra.mxu0 %v1342
        %v1344 = vand.u32 %v693, 4294901760
        %v1345 = vsub.f32 %v693, %v1344
        %v1346 = vand.u32 %v1345, 4294901760
        %1347 = vmatpush.msra.mxu0 %v1346
        %v1348 = vand.u32 %v692, 4294901760
        %v1349 = vsub.f32 %v692, %v1348
        %v1350 = vand.u32 %v1349, 4294901760
        %1351 = vmatpush.msra.mxu0 %v1350
        %v1352 = vand.u32 %v675, 4294901760
        %1353 = vmatmul.f32.gmra.mxu0 %v1352
        %v1354 = vpop.f32.mrf.mxu0
        %v1355 = vadd.f32 %v1286, %v1354
        %1356 = vdwg.mxu0
        %v1357 = vand.u32 %v707, 4294901760
        %1358 = vmatpush.msra.mxu0 %v1357
        %v1359 = vand.u32 %v706, 4294901760
        %1360 = vmatpush.msra.mxu0 %v1359
        %v1361 = vand.u32 %v705, 4294901760
        %1362 = vmatpush.msra.mxu0 %v1361
        %v1363 = vand.u32 %v704, 4294901760
        %1364 = vmatpush.msra.mxu0 %v1363
        %v1365 = vand.u32 %v703, 4294901760
        %1366 = vmatpush.msra.mxu0 %v1365
        %v1367 = vand.u32 %v702, 4294901760
        %1368 = vmatpush.msra.mxu0 %v1367
        %v1369 = vand.u32 %v701, 4294901760
        %1370 = vmatpush.msra.mxu0 %v1369
        %v1371 = vand.u32 %v700, 4294901760
        %1372 = vmatpush.msra.mxu0 %v1371
        %v1373 = vand.u32 %v699, 4294901760
        %1374 = vmatpush.msra.mxu0 %v1373
        %v1375 = vand.u32 %v698, 4294901760
        %1376 = vmatpush.msra.mxu0 %v1375
        %v1377 = vand.u32 %v697, 4294901760
        %1378 = vmatpush.msra.mxu0 %v1377
        %v1379 = vand.u32 %v696, 4294901760
        %1380 = vmatpush.msra.mxu0 %v1379
        %v1381 = vand.u32 %v695, 4294901760
        %1382 = vmatpush.msra.mxu0 %v1381
        %v1383 = vand.u32 %v694, 4294901760
        %1384 = vmatpush.msra.mxu0 %v1383
        %v1385 = vand.u32 %v693, 4294901760
        %1386 = vmatpush.msra.mxu0 %v1385
        %v1387 = vand.u32 %v692, 4294901760
        %1388 = vmatpush.msra.mxu0 %v1387
        %v1389 = vand.u32 %v675, 4294901760
        %1390 = vmatmul.f32.gmra.mxu0 %v1389
        %v1391 = vpop.f32.mrf.mxu0
        %v1392 = vadd.f32 %v1355, %v1391
        %1393 = vdwg.mxu0
        %v1394 = vld [vmem:[#allocation14] sm:$0xff]
        %v1395 = vld [vmem:[#allocation14 + $0x8] sm:$0xff]
        %v1396 = vld [vmem:[#allocation14 + $0x10] sm:$0xff]
        %v1397 = vld [vmem:[#allocation14 + $0x18] sm:$0xff]
        %v1398 = vld [vmem:[#allocation14 + $0x20] sm:$0xff]
        %v1399 = vld [vmem:[#allocation14 + $0x28] sm:$0xff]
        %v1400 = vld [vmem:[#allocation14 + $0x30] sm:$0xff]
        %v1401 = vld [vmem:[#allocation14 + $0x38] sm:$0xff]
        %v1402 = vld [vmem:[#allocation14 + $0x40] sm:$0xff]
        %v1403 = vld [vmem:[#allocation14 + $0x48] sm:$0xff]
        %v1404 = vld [vmem:[#allocation14 + $0x50] sm:$0xff]
        %v1405 = vld [vmem:[#allocation14 + $0x58] sm:$0xff]
        %v1406 = vld [vmem:[#allocation14 + $0x60] sm:$0xff]
        %v1407 = vld [vmem:[#allocation14 + $0x68] sm:$0xff]
        %v1408 = vld [vmem:[#allocation14 + $0x70] sm:$0xff]
        %v1409 = vld [vmem:[#allocation14 + $0x78] sm:$0xff]
        %v1410 = vand.u32 %v1409, 4294901760
        %1411 = vmatpush.msra.mxu0 %v1410
        %v1412 = vand.u32 %v1408, 4294901760
        %1413 = vmatpush.msra.mxu0 %v1412
        %v1414 = vand.u32 %v1407, 4294901760
        %1415 = vmatpush.msra.mxu0 %v1414
        %v1416 = vand.u32 %v1406, 4294901760
        %1417 = vmatpush.msra.mxu0 %v1416
        %v1418 = vand.u32 %v1405, 4294901760
        %1419 = vmatpush.msra.mxu0 %v1418
        %v1420 = vand.u32 %v1404, 4294901760
        %1421 = vmatpush.msra.mxu0 %v1420
        %v1422 = vand.u32 %v1403, 4294901760
        %1423 = vmatpush.msra.mxu0 %v1422
        %v1424 = vand.u32 %v1402, 4294901760
        %1425 = vmatpush.msra.mxu0 %v1424
        %v1426 = vand.u32 %v1401, 4294901760
        %1427 = vmatpush.msra.mxu0 %v1426
        %v1428 = vand.u32 %v1400, 4294901760
        %1429 = vmatpush.msra.mxu0 %v1428
        %v1430 = vand.u32 %v1399, 4294901760
        %1431 = vmatpush.msra.mxu0 %v1430
        %v1432 = vand.u32 %v1398, 4294901760
        %1433 = vmatpush.msra.mxu0 %v1432
        %v1434 = vand.u32 %v1397, 4294901760
        %1435 = vmatpush.msra.mxu0 %v1434
        %v1436 = vand.u32 %v1396, 4294901760
        %1437 = vmatpush.msra.mxu0 %v1436
        %v1438 = vand.u32 %v1395, 4294901760
        %1439 = vmatpush.msra.mxu0 %v1438
        %v1440 = vand.u32 %v1394, 4294901760
        %1441 = vmatpush.msra.mxu0 %v1440
        %v1442 = vand.u32 %v1392, 4294901760
        %v1443 = vsub.f32 %v1392, %v1442
        %v1444 = vand.u32 %v1443, 4294901760
        %v1445 = vsub.f32 %v1443, %v1444
        %v1446 = vand.u32 %v1445, 4294901760
        %1447 = vmatmul.f32.gmra.mxu0 %v1446
        %v1448 = vpop.f32.mrf.mxu0
        %v1449 = vadd.f32 0.0, %v1448
        %1450 = vdwg.mxu0
        %v1451 = vand.u32 %v1409, 4294901760
        %v1452 = vsub.f32 %v1409, %v1451
        %v1453 = vand.u32 %v1452, 4294901760
        %v1454 = vsub.f32 %v1452, %v1453
        %v1455 = vand.u32 %v1454, 4294901760
        %1456 = vmatpush.msra.mxu0 %v1455
        %v1457 = vand.u32 %v1408, 4294901760
        %v1458 = vsub.f32 %v1408, %v1457
        %v1459 = vand.u32 %v1458, 4294901760
        %v1460 = vsub.f32 %v1458, %v1459
        %v1461 = vand.u32 %v1460, 4294901760
        %1462 = vmatpush.msra.mxu0 %v1461
        %v1463 = vand.u32 %v1407, 4294901760
        %v1464 = vsub.f32 %v1407, %v1463
        %v1465 = vand.u32 %v1464, 4294901760
        %v1466 = vsub.f32 %v1464, %v1465
        %v1467 = vand.u32 %v1466, 4294901760
        %1468 = vmatpush.msra.mxu0 %v1467
        %v1469 = vand.u32 %v1406, 4294901760
        %v1470 = vsub.f32 %v1406, %v1469
        %v1471 = vand.u32 %v1470, 4294901760
        %v1472 = vsub.f32 %v1470, %v1471
        %v1473 = vand.u32 %v1472, 4294901760
        %1474 = vmatpush.msra.mxu0 %v1473
        %v1475 = vand.u32 %v1405, 4294901760
        %v1476 = vsub.f32 %v1405, %v1475
        %v1477 = vand.u32 %v1476, 4294901760
        %v1478 = vsub.f32 %v1476, %v1477
        %v1479 = vand.u32 %v1478, 4294901760
        %1480 = vmatpush.msra.mxu0 %v1479
        %v1481 = vand.u32 %v1404, 4294901760
        %v1482 = vsub.f32 %v1404, %v1481
        %v1483 = vand.u32 %v1482, 4294901760
        %v1484 = vsub.f32 %v1482, %v1483
        %v1485 = vand.u32 %v1484, 4294901760
        %1486 = vmatpush.msra.mxu0 %v1485
        %v1487 = vand.u32 %v1403, 4294901760
        %v1488 = vsub.f32 %v1403, %v1487
        %v1489 = vand.u32 %v1488, 4294901760
        %v1490 = vsub.f32 %v1488, %v1489
        %v1491 = vand.u32 %v1490, 4294901760
        %1492 = vmatpush.msra.mxu0 %v1491
        %v1493 = vand.u32 %v1402, 4294901760
        %v1494 = vsub.f32 %v1402, %v1493
        %v1495 = vand.u32 %v1494, 4294901760
        %v1496 = vsub.f32 %v1494, %v1495
        %v1497 = vand.u32 %v1496, 4294901760
        %1498 = vmatpush.msra.mxu0 %v1497
        %v1499 = vand.u32 %v1401, 4294901760
        %v1500 = vsub.f32 %v1401, %v1499
        %v1501 = vand.u32 %v1500, 4294901760
        %v1502 = vsub.f32 %v1500, %v1501
        %v1503 = vand.u32 %v1502, 4294901760
        %1504 = vmatpush.msra.mxu0 %v1503
        %v1505 = vand.u32 %v1400, 4294901760
        %v1506 = vsub.f32 %v1400, %v1505
        %v1507 = vand.u32 %v1506, 4294901760
        %v1508 = vsub.f32 %v1506, %v1507
        %v1509 = vand.u32 %v1508, 4294901760
        %1510 = vmatpush.msra.mxu0 %v1509
        %v1511 = vand.u32 %v1399, 4294901760
        %v1512 = vsub.f32 %v1399, %v1511
        %v1513 = vand.u32 %v1512, 4294901760
        %v1514 = vsub.f32 %v1512, %v1513
        %v1515 = vand.u32 %v1514, 4294901760
        %1516 = vmatpush.msra.mxu0 %v1515
        %v1517 = vand.u32 %v1398, 4294901760
        %v1518 = vsub.f32 %v1398, %v1517
        %v1519 = vand.u32 %v1518, 4294901760
        %v1520 = vsub.f32 %v1518, %v1519
        %v1521 = vand.u32 %v1520, 4294901760
        %1522 = vmatpush.msra.mxu0 %v1521
        %v1523 = vand.u32 %v1397, 4294901760
        %v1524 = vsub.f32 %v1397, %v1523
        %v1525 = vand.u32 %v1524, 4294901760
        %v1526 = vsub.f32 %v1524, %v1525
        %v1527 = vand.u32 %v1526, 4294901760
        %1528 = vmatpush.msra.mxu0 %v1527
        %v1529 = vand.u32 %v1396, 4294901760
        %v1530 = vsub.f32 %v1396, %v1529
        %v1531 = vand.u32 %v1530, 4294901760
        %v1532 = vsub.f32 %v1530, %v1531
        %v1533 = vand.u32 %v1532, 4294901760
        %1534 = vmatpush.msra.mxu0 %v1533
        %v1535 = vand.u32 %v1395, 4294901760
        %v1536 = vsub.f32 %v1395, %v1535
        %v1537 = vand.u32 %v1536, 4294901760
        %v1538 = vsub.f32 %v1536, %v1537
        %v1539 = vand.u32 %v1538, 4294901760
        %1540 = vmatpush.msra.mxu0 %v1539
        %v1541 = vand.u32 %v1394, 4294901760
        %v1542 = vsub.f32 %v1394, %v1541
        %v1543 = vand.u32 %v1542, 4294901760
        %v1544 = vsub.f32 %v1542, %v1543
        %v1545 = vand.u32 %v1544, 4294901760
        %1546 = vmatpush.msra.mxu0 %v1545
        %v1547 = vand.u32 %v1392, 4294901760
        %1548 = vmatmul.f32.gmra.mxu0 %v1547
        %v1549 = vpop.f32.mrf.mxu0
        %v1550 = vadd.f32 %v1449, %v1549
        %1551 = vdwg.mxu0
        %v1552 = vand.u32 %v1409, 4294901760
        %v1553 = vsub.f32 %v1409, %v1552
        %1554 = vmatpush.msra.mxu0 %v1553
        %v1555 = vand.u32 %v1408, 4294901760
        %v1556 = vsub.f32 %v1408, %v1555
        %1557 = vmatpush.msra.mxu0 %v1556
        %v1558 = vand.u32 %v1407, 4294901760
        %v1559 = vsub.f32 %v1407, %v1558
        %1560 = vmatpush.msra.mxu0 %v1559
        %v1561 = vand.u32 %v1406, 4294901760
        %v1562 = vsub.f32 %v1406, %v1561
        %1563 = vmatpush.msra.mxu0 %v1562
        %v1564 = vand.u32 %v1405, 4294901760
        %v1565 = vsub.f32 %v1405, %v1564
        %1566 = vmatpush.msra.mxu0 %v1565
        %v1567 = vand.u32 %v1404, 4294901760
        %v1568 = vsub.f32 %v1404, %v1567
        %1569 = vmatpush.msra.mxu0 %v1568
        %v1570 = vand.u32 %v1403, 4294901760
        %v1571 = vsub.f32 %v1403, %v1570
        %1572 = vmatpush.msra.mxu0 %v1571
        %v1573 = vand.u32 %v1402, 4294901760
        %v1574 = vsub.f32 %v1402, %v1573
        %1575 = vmatpush.msra.mxu0 %v1574
        %v1576 = vand.u32 %v1401, 4294901760
        %v1577 = vsub.f32 %v1401, %v1576
        %1578 = vmatpush.msra.mxu0 %v1577
        %v1579 = vand.u32 %v1400, 4294901760
        %v1580 = vsub.f32 %v1400, %v1579
        %1581 = vmatpush.msra.mxu0 %v1580
        %v1582 = vand.u32 %v1399, 4294901760
        %v1583 = vsub.f32 %v1399, %v1582
        %1584 = vmatpush.msra.mxu0 %v1583
        %v1585 = vand.u32 %v1398, 4294901760
        %v1586 = vsub.f32 %v1398, %v1585
        %1587 = vmatpush.msra.mxu0 %v1586
        %v1588 = vand.u32 %v1397, 4294901760
        %v1589 = vsub.f32 %v1397, %v1588
        %1590 = vmatpush.msra.mxu0 %v1589
        %v1591 = vand.u32 %v1396, 4294901760
        %v1592 = vsub.f32 %v1396, %v1591
        %1593 = vmatpush.msra.mxu0 %v1592
        %v1594 = vand.u32 %v1395, 4294901760
        %v1595 = vsub.f32 %v1395, %v1594
        %1596 = vmatpush.msra.mxu0 %v1595
        %v1597 = vand.u32 %v1394, 4294901760
        %v1598 = vsub.f32 %v1394, %v1597
        %1599 = vmatpush.msra.mxu0 %v1598
        %v1600 = vand.u32 %v1392, 4294901760
        %v1601 = vsub.f32 %v1392, %v1600
        %1602 = vmatmul.f32.gmra.mxu0 %v1601
        %v1603 = vpop.f32.mrf.mxu0
        %v1604 = vadd.f32 %v1550, %v1603
        %1605 = vdwg.mxu0
        %v1606 = vand.u32 %v1409, 4294901760
        %1607 = vmatpush.msra.mxu0 %v1606
        %v1608 = vand.u32 %v1408, 4294901760
        %1609 = vmatpush.msra.mxu0 %v1608
        %v1610 = vand.u32 %v1407, 4294901760
        %1611 = vmatpush.msra.mxu0 %v1610
        %v1612 = vand.u32 %v1406, 4294901760
        %1613 = vmatpush.msra.mxu0 %v1612
        %v1614 = vand.u32 %v1405, 4294901760
        %1615 = vmatpush.msra.mxu0 %v1614
        %v1616 = vand.u32 %v1404, 4294901760
        %1617 = vmatpush.msra.mxu0 %v1616
        %v1618 = vand.u32 %v1403, 4294901760
        %1619 = vmatpush.msra.mxu0 %v1618
        %v1620 = vand.u32 %v1402, 4294901760
        %1621 = vmatpush.msra.mxu0 %v1620
        %v1622 = vand.u32 %v1401, 4294901760
        %1623 = vmatpush.msra.mxu0 %v1622
        %v1624 = vand.u32 %v1400, 4294901760
        %1625 = vmatpush.msra.mxu0 %v1624
        %v1626 = vand.u32 %v1399, 4294901760
        %1627 = vmatpush.msra.mxu0 %v1626
        %v1628 = vand.u32 %v1398, 4294901760
        %1629 = vmatpush.msra.mxu0 %v1628
        %v1630 = vand.u32 %v1397, 4294901760
        %1631 = vmatpush.msra.mxu0 %v1630
        %v1632 = vand.u32 %v1396, 4294901760
        %1633 = vmatpush.msra.mxu0 %v1632
        %v1634 = vand.u32 %v1395, 4294901760
        %1635 = vmatpush.msra.mxu0 %v1634
        %v1636 = vand.u32 %v1394, 4294901760
        %1637 = vmatpush.msra.mxu0 %v1636
        %v1638 = vand.u32 %v1392, 4294901760
        %v1639 = vsub.f32 %v1392, %v1638
        %v1640 = vand.u32 %v1639, 4294901760
        %1641 = vmatmul.f32.gmra.mxu0 %v1640
        %v1642 = vpop.f32.mrf.mxu0
        %v1643 = vadd.f32 %v1604, %v1642
        %1644 = vdwg.mxu0
        %v1645 = vand.u32 %v1409, 4294901760
        %v1646 = vsub.f32 %v1409, %v1645
        %v1647 = vand.u32 %v1646, 4294901760
        %1648 = vmatpush.msra.mxu0 %v1647
        %v1649 = vand.u32 %v1408, 4294901760
        %v1650 = vsub.f32 %v1408, %v1649
        %v1651 = vand.u32 %v1650, 4294901760
        %1652 = vmatpush.msra.mxu0 %v1651
        %v1653 = vand.u32 %v1407, 4294901760
        %v1654 = vsub.f32 %v1407, %v1653
        %v1655 = vand.u32 %v1654, 4294901760
        %1656 = vmatpush.msra.mxu0 %v1655
        %v1657 = vand.u32 %v1406, 4294901760
        %v1658 = vsub.f32 %v1406, %v1657
        %v1659 = vand.u32 %v1658, 4294901760
        %1660 = vmatpush.msra.mxu0 %v1659
        %v1661 = vand.u32 %v1405, 4294901760
        %v1662 = vsub.f32 %v1405, %v1661
        %v1663 = vand.u32 %v1662, 4294901760
        %1664 = vmatpush.msra.mxu0 %v1663
        %v1665 = vand.u32 %v1404, 4294901760
        %v1666 = vsub.f32 %v1404, %v1665
        %v1667 = vand.u32 %v1666, 4294901760
        %1668 = vmatpush.msra.mxu0 %v1667
        %v1669 = vand.u32 %v1403, 4294901760
        %v1670 = vsub.f32 %v1403, %v1669
        %v1671 = vand.u32 %v1670, 4294901760
        %1672 = vmatpush.msra.mxu0 %v1671
        %v1673 = vand.u32 %v1402, 4294901760
        %v1674 = vsub.f32 %v1402, %v1673
        %v1675 = vand.u32 %v1674, 4294901760
        %1676 = vmatpush.msra.mxu0 %v1675
        %v1677 = vand.u32 %v1401, 4294901760
        %v1678 = vsub.f32 %v1401, %v1677
        %v1679 = vand.u32 %v1678, 4294901760
        %1680 = vmatpush.msra.mxu0 %v1679
        %v1681 = vand.u32 %v1400, 4294901760
        %v1682 = vsub.f32 %v1400, %v1681
        %v1683 = vand.u32 %v1682, 4294901760
        %1684 = vmatpush.msra.mxu0 %v1683
        %v1685 = vand.u32 %v1399, 4294901760
        %v1686 = vsub.f32 %v1399, %v1685
        %v1687 = vand.u32 %v1686, 4294901760
        %1688 = vmatpush.msra.mxu0 %v1687
        %v1689 = vand.u32 %v1398, 4294901760
        %v1690 = vsub.f32 %v1398, %v1689
        %v1691 = vand.u32 %v1690, 4294901760
        %1692 = vmatpush.msra.mxu0 %v1691
        %v1693 = vand.u32 %v1397, 4294901760
        %v1694 = vsub.f32 %v1397, %v1693
        %v1695 = vand.u32 %v1694, 4294901760
        %1696 = vmatpush.msra.mxu0 %v1695
        %v1697 = vand.u32 %v1396, 4294901760
        %v1698 = vsub.f32 %v1396, %v1697
        %v1699 = vand.u32 %v1698, 4294901760
        %1700 = vmatpush.msra.mxu0 %v1699
        %v1701 = vand.u32 %v1395, 4294901760
        %v1702 = vsub.f32 %v1395, %v1701
        %v1703 = vand.u32 %v1702, 4294901760
        %1704 = vmatpush.msra.mxu0 %v1703
        %v1705 = vand.u32 %v1394, 4294901760
        %v1706 = vsub.f32 %v1394, %v1705
        %v1707 = vand.u32 %v1706, 4294901760
        %1708 = vmatpush.msra.mxu0 %v1707
        %v1709 = vand.u32 %v1392, 4294901760
        %1710 = vmatmul.f32.gmra.mxu0 %v1709
        %v1711 = vpop.f32.mrf.mxu0
        %v1712 = vadd.f32 %v1643, %v1711
        %1713 = vdwg.mxu0
        %v1714 = vand.u32 %v1409, 4294901760
        %1715 = vmatpush.msra.mxu0 %v1714
        %v1716 = vand.u32 %v1408, 4294901760
        %1717 = vmatpush.msra.mxu0 %v1716
        %v1718 = vand.u32 %v1407, 4294901760
        %1719 = vmatpush.msra.mxu0 %v1718
        %v1720 = vand.u32 %v1406, 4294901760
        %1721 = vmatpush.msra.mxu0 %v1720
        %v1722 = vand.u32 %v1405, 4294901760
        %1723 = vmatpush.msra.mxu0 %v1722
        %v1724 = vand.u32 %v1404, 4294901760
        %1725 = vmatpush.msra.mxu0 %v1724
        %v1726 = vand.u32 %v1403, 4294901760
        %1727 = vmatpush.msra.mxu0 %v1726
        %v1728 = vand.u32 %v1402, 4294901760
        %1729 = vmatpush.msra.mxu0 %v1728
        %v1730 = vand.u32 %v1401, 4294901760
        %1731 = vmatpush.msra.mxu0 %v1730
        %v1732 = vand.u32 %v1400, 4294901760
        %1733 = vmatpush.msra.mxu0 %v1732
        %v1734 = vand.u32 %v1399, 4294901760
        %1735 = vmatpush.msra.mxu0 %v1734
        %v1736 = vand.u32 %v1398, 4294901760
        %1737 = vmatpush.msra.mxu0 %v1736
        %v1738 = vand.u32 %v1397, 4294901760
        %1739 = vmatpush.msra.mxu0 %v1738
        %v1740 = vand.u32 %v1396, 4294901760
        %1741 = vmatpush.msra.mxu0 %v1740
        %v1742 = vand.u32 %v1395, 4294901760
        %1743 = vmatpush.msra.mxu0 %v1742
        %v1744 = vand.u32 %v1394, 4294901760
        %1745 = vmatpush.msra.mxu0 %v1744
        %v1746 = vand.u32 %v1392, 4294901760
        %1747 = vmatmul.f32.gmra.mxu0 %v1746
        %v1748 = vpop.f32.mrf.mxu0
        %v1749 = vadd.f32 %v1712, %v1748
        %1750 = vdwg.mxu0
        %1751 = vst [vmem:[%s648] sm:$0xff] %v1749
        %v1752 = vmul.f32 %v1392, %v1392
        %1753 = vadd.xlane.f32.xlu0 %v1752
        %v1754 = vpop.xlane.xlu0 %1753
        %v1755 = vmax.f32 %v1754, 1e-24
        %v1756 = vrsqrt.pop %v1755
        %v1757 = vmul.f32 %v1756, %v1755
        %v1758 = vmul.f32 %v1757, %v1756
        %v1759 = vmul.f32 0.5, %v1758
        %v1760 = vsub.f32 1.5, %v1759
        %v1761 = vmul.f32 %v1756, %v1760
        %vm1762 = vweird.f32 %v1755
        %vm1763 = vweird.f32 %v1756
        %vm1764 = vmor %vm1762, %vm1763
        %v1765 = vsel %vm1764, %v1756, %v1761
        %v1766 = vmul.f32 %v1392, %v1765
        %v1767 = vld [vmem:[%s560] sm:$0xff]
        %v1768 = vld [vmem:[%s560 + $0x8] sm:$0xff]
        %v1769 = vld [vmem:[#allocation10] sm:$0xff]
        %v1770 = vld [vmem:[#allocation10 + $0x8] sm:$0xff]
        %v1771 = vld [vmem:[#allocation10 + $0x10] sm:$0xff]
        %v1772 = vld [vmem:[#allocation10 + $0x18] sm:$0xff]
        %v1773 = vld [vmem:[#allocation10 + $0x20] sm:$0xff]
        %v1774 = vld [vmem:[#allocation10 + $0x28] sm:$0xff]
        %v1775 = vld [vmem:[#allocation10 + $0x30] sm:$0xff]
        %v1776 = vld [vmem:[#allocation10 + $0x38] sm:$0xff]
        %v1777 = vld [vmem:[#allocation10 + $0x40] sm:$0xff]
        %v1778 = vld [vmem:[#allocation10 + $0x48] sm:$0xff]
        %v1779 = vld [vmem:[#allocation10 + $0x50] sm:$0xff]
        %v1780 = vld [vmem:[#allocation10 + $0x58] sm:$0xff]
        %v1781 = vld [vmem:[#allocation10 + $0x60] sm:$0xff]
        %v1782 = vld [vmem:[#allocation10 + $0x68] sm:$0xff]
        %v1783 = vld [vmem:[#allocation10 + $0x70] sm:$0xff]
        %v1784 = vld [vmem:[#allocation10 + $0x78] sm:$0xff]
        %v1785 = vld [vmem:[#allocation10 + $0x80] sm:$0xff]
        %v1786 = vld [vmem:[#allocation10 + $0x88] sm:$0xff]
        %v1787 = vld [vmem:[#allocation10 + $0x90] sm:$0xff]
        %v1788 = vld [vmem:[#allocation10 + $0x98] sm:$0xff]
        %v1789 = vld [vmem:[#allocation10 + $0xa0] sm:$0xff]
        %v1790 = vld [vmem:[#allocation10 + $0xa8] sm:$0xff]
        %v1791 = vld [vmem:[#allocation10 + $0xb0] sm:$0xff]
        %v1792 = vld [vmem:[#allocation10 + $0xb8] sm:$0xff]
        %v1793 = vld [vmem:[%s7] sm:$0x1]
        %v1795 = vperm.slane %v1793, 0
        %vm1797 = vcmask 523264
        %v1799 = vsel %vm1797, %v1768, 0
        %v1801 = vand.u32 %v1784, 4294901760
        %1802 = vmatpush.msra.mxu0 %v1801
        %v1803 = vand.u32 %v1783, 4294901760
        %1804 = vmatpush.msra.mxu0 %v1803
        %v1805 = vand.u32 %v1782, 4294901760
        %1806 = vmatpush.msra.mxu0 %v1805
        %v1807 = vand.u32 %v1781, 4294901760
        %1808 = vmatpush.msra.mxu0 %v1807
        %v1809 = vand.u32 %v1780, 4294901760
        %1810 = vmatpush.msra.mxu0 %v1809
        %v1811 = vand.u32 %v1779, 4294901760
        %1812 = vmatpush.msra.mxu0 %v1811
        %v1813 = vand.u32 %v1778, 4294901760
        %1814 = vmatpush.msra.mxu0 %v1813
        %v1815 = vand.u32 %v1777, 4294901760
        %1816 = vmatpush.msra.mxu0 %v1815
        %v1817 = vand.u32 %v1776, 4294901760
        %1818 = vmatpush.msra.mxu0 %v1817
        %v1819 = vand.u32 %v1775, 4294901760
        %1820 = vmatpush.msra.mxu0 %v1819
        %v1821 = vand.u32 %v1774, 4294901760
        %1822 = vmatpush.msra.mxu0 %v1821
        %v1823 = vand.u32 %v1773, 4294901760
        %1824 = vmatpush.msra.mxu0 %v1823
        %v1825 = vand.u32 %v1772, 4294901760
        %1826 = vmatpush.msra.mxu0 %v1825
        %v1827 = vand.u32 %v1771, 4294901760
        %1828 = vmatpush.msra.mxu0 %v1827
        %v1829 = vand.u32 %v1770, 4294901760
        %1830 = vmatpush.msra.mxu0 %v1829
        %v1831 = vand.u32 %v1769, 4294901760
        %1832 = vmatpush.msra.mxu0 %v1831
        %v1833 = vand.u32 %v1767, 4294901760
        %v1834 = vsub.f32 %v1767, %v1833
        %v1835 = vand.u32 %v1834, 4294901760
        %v1836 = vsub.f32 %v1834, %v1835
        %v1837 = vand.u32 %v1836, 4294901760
        %1838 = vmatmul.f32.gmra.mxu0 %v1837
        %v1839 = vpop.f32.mrf.mxu0
        %v1840 = vadd.f32 %v1795, %v1839
        %1841 = vdwg.mxu0
        %v1842 = vand.u32 %v1784, 4294901760
        %v1843 = vsub.f32 %v1784, %v1842
        %v1844 = vand.u32 %v1843, 4294901760
        %v1845 = vsub.f32 %v1843, %v1844
        %v1846 = vand.u32 %v1845, 4294901760
        %1847 = vmatpush.msra.mxu0 %v1846
        %v1848 = vand.u32 %v1783, 4294901760
        %v1849 = vsub.f32 %v1783, %v1848
        %v1850 = vand.u32 %v1849, 4294901760
        %v1851 = vsub.f32 %v1849, %v1850
        %v1852 = vand.u32 %v1851, 4294901760
        %1853 = vmatpush.msra.mxu0 %v1852
        %v1854 = vand.u32 %v1782, 4294901760
        %v1855 = vsub.f32 %v1782, %v1854
        %v1856 = vand.u32 %v1855, 4294901760
        %v1857 = vsub.f32 %v1855, %v1856
        %v1858 = vand.u32 %v1857, 4294901760
        %1859 = vmatpush.msra.mxu0 %v1858
        %v1860 = vand.u32 %v1781, 4294901760
        %v1861 = vsub.f32 %v1781, %v1860
        %v1862 = vand.u32 %v1861, 4294901760
        %v1863 = vsub.f32 %v1861, %v1862
        %v1864 = vand.u32 %v1863, 4294901760
        %1865 = vmatpush.msra.mxu0 %v1864
        %v1866 = vand.u32 %v1780, 4294901760
        %v1867 = vsub.f32 %v1780, %v1866
        %v1868 = vand.u32 %v1867, 4294901760
        %v1869 = vsub.f32 %v1867, %v1868
        %v1870 = vand.u32 %v1869, 4294901760
        %1871 = vmatpush.msra.mxu0 %v1870
        %v1872 = vand.u32 %v1779, 4294901760
        %v1873 = vsub.f32 %v1779, %v1872
        %v1874 = vand.u32 %v1873, 4294901760
        %v1875 = vsub.f32 %v1873, %v1874
        %v1876 = vand.u32 %v1875, 4294901760
        %1877 = vmatpush.msra.mxu0 %v1876
        %v1878 = vand.u32 %v1778, 4294901760
        %v1879 = vsub.f32 %v1778, %v1878
        %v1880 = vand.u32 %v1879, 4294901760
        %v1881 = vsub.f32 %v1879, %v1880
        %v1882 = vand.u32 %v1881, 4294901760
        %1883 = vmatpush.msra.mxu0 %v1882
        %v1884 = vand.u32 %v1777, 4294901760
        %v1885 = vsub.f32 %v1777, %v1884
        %v1886 = vand.u32 %v1885, 4294901760
        %v1887 = vsub.f32 %v1885, %v1886
        %v1888 = vand.u32 %v1887, 4294901760
        %1889 = vmatpush.msra.mxu0 %v1888
        %v1890 = vand.u32 %v1776, 4294901760
        %v1891 = vsub.f32 %v1776, %v1890
        %v1892 = vand.u32 %v1891, 4294901760
        %v1893 = vsub.f32 %v1891, %v1892
        %v1894 = vand.u32 %v1893, 4294901760
        %1895 = vmatpush.msra.mxu0 %v1894
        %v1896 = vand.u32 %v1775, 4294901760
        %v1897 = vsub.f32 %v1775, %v1896
        %v1898 = vand.u32 %v1897, 4294901760
        %v1899 = vsub.f32 %v1897, %v1898
        %v1900 = vand.u32 %v1899, 4294901760
        %1901 = vmatpush.msra.mxu0 %v1900
        %v1902 = vand.u32 %v1774, 4294901760
        %v1903 = vsub.f32 %v1774, %v1902
        %v1904 = vand.u32 %v1903, 4294901760
        %v1905 = vsub.f32 %v1903, %v1904
        %v1906 = vand.u32 %v1905, 4294901760
        %1907 = vmatpush.msra.mxu0 %v1906
        %v1908 = vand.u32 %v1773, 4294901760
        %v1909 = vsub.f32 %v1773, %v1908
        %v1910 = vand.u32 %v1909, 4294901760
        %v1911 = vsub.f32 %v1909, %v1910
        %v1912 = vand.u32 %v1911, 4294901760
        %1913 = vmatpush.msra.mxu0 %v1912
        %v1914 = vand.u32 %v1772, 4294901760
        %v1915 = vsub.f32 %v1772, %v1914
        %v1916 = vand.u32 %v1915, 4294901760
        %v1917 = vsub.f32 %v1915, %v1916
        %v1918 = vand.u32 %v1917, 4294901760
        %1919 = vmatpush.msra.mxu0 %v1918
        %v1920 = vand.u32 %v1771, 4294901760
        %v1921 = vsub.f32 %v1771, %v1920
        %v1922 = vand.u32 %v1921, 4294901760
        %v1923 = vsub.f32 %v1921, %v1922
        %v1924 = vand.u32 %v1923, 4294901760
        %1925 = vmatpush.msra.mxu0 %v1924
        %v1926 = vand.u32 %v1770, 4294901760
        %v1927 = vsub.f32 %v1770, %v1926
        %v1928 = vand.u32 %v1927, 4294901760
        %v1929 = vsub.f32 %v1927, %v1928
        %v1930 = vand.u32 %v1929, 4294901760
        %1931 = vmatpush.msra.mxu0 %v1930
        %v1932 = vand.u32 %v1769, 4294901760
        %v1933 = vsub.f32 %v1769, %v1932
        %v1934 = vand.u32 %v1933, 4294901760
        %v1935 = vsub.f32 %v1933, %v1934
        %v1936 = vand.u32 %v1935, 4294901760
        %1937 = vmatpush.msra.mxu0 %v1936
        %v1938 = vand.u32 %v1767, 4294901760
        %1939 = vmatmul.f32.gmra.mxu0 %v1938
        %v1940 = vpop.f32.mrf.mxu0
        %v1941 = vadd.f32 %v1840, %v1940
        %1942 = vdwg.mxu0
        %v1943 = vand.u32 %v1784, 4294901760
        %v1944 = vsub.f32 %v1784, %v1943
        %1945 = vmatpush.msra.mxu0 %v1944
        %v1946 = vand.u32 %v1783, 4294901760
        %v1947 = vsub.f32 %v1783, %v1946
        %1948 = vmatpush.msra.mxu0 %v1947
        %v1949 = vand.u32 %v1782, 4294901760
        %v1950 = vsub.f32 %v1782, %v1949
        %1951 = vmatpush.msra.mxu0 %v1950
        %v1952 = vand.u32 %v1781, 4294901760
        %v1953 = vsub.f32 %v1781, %v1952
        %1954 = vmatpush.msra.mxu0 %v1953
        %v1955 = vand.u32 %v1780, 4294901760
        %v1956 = vsub.f32 %v1780, %v1955
        %1957 = vmatpush.msra.mxu0 %v1956
        %v1958 = vand.u32 %v1779, 4294901760
        %v1959 = vsub.f32 %v1779, %v1958
        %1960 = vmatpush.msra.mxu0 %v1959
        %v1961 = vand.u32 %v1778, 4294901760
        %v1962 = vsub.f32 %v1778, %v1961
        %1963 = vmatpush.msra.mxu0 %v1962
        %v1964 = vand.u32 %v1777, 4294901760
        %v1965 = vsub.f32 %v1777, %v1964
        %1966 = vmatpush.msra.mxu0 %v1965
        %v1967 = vand.u32 %v1776, 4294901760
        %v1968 = vsub.f32 %v1776, %v1967
        %1969 = vmatpush.msra.mxu0 %v1968
        %v1970 = vand.u32 %v1775, 4294901760
        %v1971 = vsub.f32 %v1775, %v1970
        %1972 = vmatpush.msra.mxu0 %v1971
        %v1973 = vand.u32 %v1774, 4294901760
        %v1974 = vsub.f32 %v1774, %v1973
        %1975 = vmatpush.msra.mxu0 %v1974
        %v1976 = vand.u32 %v1773, 4294901760
        %v1977 = vsub.f32 %v1773, %v1976
        %1978 = vmatpush.msra.mxu0 %v1977
        %v1979 = vand.u32 %v1772, 4294901760
        %v1980 = vsub.f32 %v1772, %v1979
        %1981 = vmatpush.msra.mxu0 %v1980
        %v1982 = vand.u32 %v1771, 4294901760
        %v1983 = vsub.f32 %v1771, %v1982
        %1984 = vmatpush.msra.mxu0 %v1983
        %v1985 = vand.u32 %v1770, 4294901760
        %v1986 = vsub.f32 %v1770, %v1985
        %1987 = vmatpush.msra.mxu0 %v1986
        %v1988 = vand.u32 %v1769, 4294901760
        %v1989 = vsub.f32 %v1769, %v1988
        %1990 = vmatpush.msra.mxu0 %v1989
        %v1991 = vand.u32 %v1767, 4294901760
        %v1992 = vsub.f32 %v1767, %v1991
        %1993 = vmatmul.f32.gmra.mxu0 %v1992
        %v1994 = vpop.f32.mrf.mxu0
        %v1995 = vadd.f32 %v1941, %v1994
        %1996 = vdwg.mxu0
        %v1997 = vand.u32 %v1784, 4294901760
        %1998 = vmatpush.msra.mxu0 %v1997
        %v1999 = vand.u32 %v1783, 4294901760
        %2000 = vmatpush.msra.mxu0 %v1999
        %v2001 = vand.u32 %v1782, 4294901760
        %2002 = vmatpush.msra.mxu0 %v2001
        %v2003 = vand.u32 %v1781, 4294901760
        %2004 = vmatpush.msra.mxu0 %v2003
        %v2005 = vand.u32 %v1780, 4294901760
        %2006 = vmatpush.msra.mxu0 %v2005
        %v2007 = vand.u32 %v1779, 4294901760
        %2008 = vmatpush.msra.mxu0 %v2007
        %v2009 = vand.u32 %v1778, 4294901760
        %2010 = vmatpush.msra.mxu0 %v2009
        %v2011 = vand.u32 %v1777, 4294901760
        %2012 = vmatpush.msra.mxu0 %v2011
        %v2013 = vand.u32 %v1776, 4294901760
        %2014 = vmatpush.msra.mxu0 %v2013
        %v2015 = vand.u32 %v1775, 4294901760
        %2016 = vmatpush.msra.mxu0 %v2015
        %v2017 = vand.u32 %v1774, 4294901760
        %2018 = vmatpush.msra.mxu0 %v2017
        %v2019 = vand.u32 %v1773, 4294901760
        %2020 = vmatpush.msra.mxu0 %v2019
        %v2021 = vand.u32 %v1772, 4294901760
        %2022 = vmatpush.msra.mxu0 %v2021
        %v2023 = vand.u32 %v1771, 4294901760
        %2024 = vmatpush.msra.mxu0 %v2023
        %v2025 = vand.u32 %v1770, 4294901760
        %2026 = vmatpush.msra.mxu0 %v2025
        %v2027 = vand.u32 %v1769, 4294901760
        %2028 = vmatpush.msra.mxu0 %v2027
        %v2029 = vand.u32 %v1767, 4294901760
        %v2030 = vsub.f32 %v1767, %v2029
        %v2031 = vand.u32 %v2030, 4294901760
        %2032 = vmatmul.f32.gmra.mxu0 %v2031
        %v2033 = vpop.f32.mrf.mxu0
        %v2034 = vadd.f32 %v1995, %v2033
        %2035 = vdwg.mxu0
        %v2036 = vand.u32 %v1784, 4294901760
        %v2037 = vsub.f32 %v1784, %v2036
        %v2038 = vand.u32 %v2037, 4294901760
        %2039 = vmatpush.msra.mxu0 %v2038
        %v2040 = vand.u32 %v1783, 4294901760
        %v2041 = vsub.f32 %v1783, %v2040
        %v2042 = vand.u32 %v2041, 4294901760
        %2043 = vmatpush.msra.mxu0 %v2042
        %v2044 = vand.u32 %v1782, 4294901760
        %v2045 = vsub.f32 %v1782, %v2044
        %v2046 = vand.u32 %v2045, 4294901760
        %2047 = vmatpush.msra.mxu0 %v2046
        %v2048 = vand.u32 %v1781, 4294901760
        %v2049 = vsub.f32 %v1781, %v2048
        %v2050 = vand.u32 %v2049, 4294901760
        %2051 = vmatpush.msra.mxu0 %v2050
        %v2052 = vand.u32 %v1780, 4294901760
        %v2053 = vsub.f32 %v1780, %v2052
        %v2054 = vand.u32 %v2053, 4294901760
        %2055 = vmatpush.msra.mxu0 %v2054
        %v2056 = vand.u32 %v1779, 4294901760
        %v2057 = vsub.f32 %v1779, %v2056
        %v2058 = vand.u32 %v2057, 4294901760
        %2059 = vmatpush.msra.mxu0 %v2058
        %v2060 = vand.u32 %v1778, 4294901760
        %v2061 = vsub.f32 %v1778, %v2060
        %v2062 = vand.u32 %v2061, 4294901760
        %2063 = vmatpush.msra.mxu0 %v2062
        %v2064 = vand.u32 %v1777, 4294901760
        %v2065 = vsub.f32 %v1777, %v2064
        %v2066 = vand.u32 %v2065, 4294901760
        %2067 = vmatpush.msra.mxu0 %v2066
        %v2068 = vand.u32 %v1776, 4294901760
        %v2069 = vsub.f32 %v1776, %v2068
        %v2070 = vand.u32 %v2069, 4294901760
        %2071 = vmatpush.msra.mxu0 %v2070
        %v2072 = vand.u32 %v1775, 4294901760
        %v2073 = vsub.f32 %v1775, %v2072
        %v2074 = vand.u32 %v2073, 4294901760
        %2075 = vmatpush.msra.mxu0 %v2074
        %v2076 = vand.u32 %v1774, 4294901760
        %v2077 = vsub.f32 %v1774, %v2076
        %v2078 = vand.u32 %v2077, 4294901760
        %2079 = vmatpush.msra.mxu0 %v2078
        %v2080 = vand.u32 %v1773, 4294901760
        %v2081 = vsub.f32 %v1773, %v2080
        %v2082 = vand.u32 %v2081, 4294901760
        %2083 = vmatpush.msra.mxu0 %v2082
        %v2084 = vand.u32 %v1772, 4294901760
        %v2085 = vsub.f32 %v1772, %v2084
        %v2086 = vand.u32 %v2085, 4294901760
        %2087 = vmatpush.msra.mxu0 %v2086
        %v2088 = vand.u32 %v1771, 4294901760
        %v2089 = vsub.f32 %v1771, %v2088
        %v2090 = vand.u32 %v2089, 4294901760
        %2091 = vmatpush.msra.mxu0 %v2090
        %v2092 = vand.u32 %v1770, 4294901760
        %v2093 = vsub.f32 %v1770, %v2092
        %v2094 = vand.u32 %v2093, 4294901760
        %2095 = vmatpush.msra.mxu0 %v2094
        %v2096 = vand.u32 %v1769, 4294901760
        %v2097 = vsub.f32 %v1769, %v2096
        %v2098 = vand.u32 %v2097, 4294901760
        %2099 = vmatpush.msra.mxu0 %v2098
        %v2100 = vand.u32 %v1767, 4294901760
        %2101 = vmatmul.f32.gmra.mxu0 %v2100
        %v2102 = vpop.f32.mrf.mxu0
        %v2103 = vadd.f32 %v2034, %v2102
        %2104 = vdwg.mxu0
        %v2105 = vand.u32 %v1784, 4294901760
        %2106 = vmatpush.msra.mxu0 %v2105
        %v2107 = vand.u32 %v1783, 4294901760
        %2108 = vmatpush.msra.mxu0 %v2107
        %v2109 = vand.u32 %v1782, 4294901760
        %2110 = vmatpush.msra.mxu0 %v2109
        %v2111 = vand.u32 %v1781, 4294901760
        %2112 = vmatpush.msra.mxu0 %v2111
        %v2113 = vand.u32 %v1780, 4294901760
        %2114 = vmatpush.msra.mxu0 %v2113
        %v2115 = vand.u32 %v1779, 4294901760
        %2116 = vmatpush.msra.mxu0 %v2115
        %v2117 = vand.u32 %v1778, 4294901760
        %2118 = vmatpush.msra.mxu0 %v2117
        %v2119 = vand.u32 %v1777, 4294901760
        %2120 = vmatpush.msra.mxu0 %v2119
        %v2121 = vand.u32 %v1776, 4294901760
        %2122 = vmatpush.msra.mxu0 %v2121
        %v2123 = vand.u32 %v1775, 4294901760
        %2124 = vmatpush.msra.mxu0 %v2123
        %v2125 = vand.u32 %v1774, 4294901760
        %2126 = vmatpush.msra.mxu0 %v2125
        %v2127 = vand.u32 %v1773, 4294901760
        %2128 = vmatpush.msra.mxu0 %v2127
        %v2129 = vand.u32 %v1772, 4294901760
        %2130 = vmatpush.msra.mxu0 %v2129
        %v2131 = vand.u32 %v1771, 4294901760
        %2132 = vmatpush.msra.mxu0 %v2131
        %v2133 = vand.u32 %v1770, 4294901760
        %2134 = vmatpush.msra.mxu0 %v2133
        %v2135 = vand.u32 %v1769, 4294901760
        %2136 = vmatpush.msra.mxu0 %v2135
        %v2137 = vand.u32 %v1767, 4294901760
        %2138 = vmatmul.f32.gmra.mxu0 %v2137
        %v2139 = vpop.f32.mrf.mxu0
        %v2140 = vadd.f32 %v2103, %v2139
        %2141 = vdwg.mxu0
        %2142 = vmatpush.msra.mxu0 0.0
        %2143 = vmatpush.msra.mxu0 0.0
        %2144 = vmatpush.msra.mxu0 0.0
        %2145 = vmatpush.msra.mxu0 0.0
        %2146 = vmatpush.msra.mxu0 0.0
        %2147 = vmatpush.msra.mxu0 0.0
        %2148 = vmatpush.msra.mxu0 0.0
        %2149 = vmatpush.msra.mxu0 0.0
        %v2150 = vand.u32 %v1792, 4294901760
        %2151 = vmatpush.msra.mxu0 %v2150
        %v2152 = vand.u32 %v1791, 4294901760
        %2153 = vmatpush.msra.mxu0 %v2152
        %v2154 = vand.u32 %v1790, 4294901760
        %2155 = vmatpush.msra.mxu0 %v2154
        %v2156 = vand.u32 %v1789, 4294901760
        %2157 = vmatpush.msra.mxu0 %v2156
        %v2158 = vand.u32 %v1788, 4294901760
        %2159 = vmatpush.msra.mxu0 %v2158
        %v2160 = vand.u32 %v1787, 4294901760
        %2161 = vmatpush.msra.mxu0 %v2160
        %v2162 = vand.u32 %v1786, 4294901760
        %2163 = vmatpush.msra.mxu0 %v2162
        %v2164 = vand.u32 %v1785, 4294901760
        %2165 = vmatpush.msra.mxu0 %v2164
        %v2166 = vand.u32 %v1799, 4294901760
        %v2167 = vsub.f32 %v1799, %v2166
        %v2168 = vand.u32 %v2167, 4294901760
        %v2169 = vsub.f32 %v2167, %v2168
        %v2170 = vand.u32 %v2169, 4294901760
        %2171 = vmatmul.f32.gmra.mxu0 %v2170
        %v2172 = vpop.f32.mrf.mxu0
        %v2173 = vadd.f32 %v2140, %v2172
        %2174 = vdwg.mxu0
        %2175 = vmatpush.msra.mxu0 0.0
        %2176 = vmatpush.msra.mxu0 0.0
        %2177 = vmatpush.msra.mxu0 0.0
        %2178 = vmatpush.msra.mxu0 0.0
        %2179 = vmatpush.msra.mxu0 0.0
        %2180 = vmatpush.msra.mxu0 0.0
        %2181 = vmatpush.msra.mxu0 0.0
        %2182 = vmatpush.msra.mxu0 0.0
        %v2183 = vand.u32 %v1792, 4294901760
        %v2184 = vsub.f32 %v1792, %v2183
        %v2185 = vand.u32 %v2184, 4294901760
        %v2186 = vsub.f32 %v2184, %v2185
        %v2187 = vand.u32 %v2186, 4294901760
        %2188 = vmatpush.msra.mxu0 %v2187
        %v2189 = vand.u32 %v1791, 4294901760
        %v2190 = vsub.f32 %v1791, %v2189
        %v2191 = vand.u32 %v2190, 4294901760
        %v2192 = vsub.f32 %v2190, %v2191
        %v2193 = vand.u32 %v2192, 4294901760
        %2194 = vmatpush.msra.mxu0 %v2193
        %v2195 = vand.u32 %v1790, 4294901760
        %v2196 = vsub.f32 %v1790, %v2195
        %v2197 = vand.u32 %v2196, 4294901760
        %v2198 = vsub.f32 %v2196, %v2197
        %v2199 = vand.u32 %v2198, 4294901760
        %2200 = vmatpush.msra.mxu0 %v2199
        %v2201 = vand.u32 %v1789, 4294901760
        %v2202 = vsub.f32 %v1789, %v2201
        %v2203 = vand.u32 %v2202, 4294901760
        %v2204 = vsub.f32 %v2202, %v2203
        %v2205 = vand.u32 %v2204, 4294901760
        %2206 = vmatpush.msra.mxu0 %v2205
        %v2207 = vand.u32 %v1788, 4294901760
        %v2208 = vsub.f32 %v1788, %v2207
        %v2209 = vand.u32 %v2208, 4294901760
        %v2210 = vsub.f32 %v2208, %v2209
        %v2211 = vand.u32 %v2210, 4294901760
        %2212 = vmatpush.msra.mxu0 %v2211
        %v2213 = vand.u32 %v1787, 4294901760
        %v2214 = vsub.f32 %v1787, %v2213
        %v2215 = vand.u32 %v2214, 4294901760
        %v2216 = vsub.f32 %v2214, %v2215
        %v2217 = vand.u32 %v2216, 4294901760
        %2218 = vmatpush.msra.mxu0 %v2217
        %v2219 = vand.u32 %v1786, 4294901760
        %v2220 = vsub.f32 %v1786, %v2219
        %v2221 = vand.u32 %v2220, 4294901760
        %v2222 = vsub.f32 %v2220, %v2221
        %v2223 = vand.u32 %v2222, 4294901760
        %2224 = vmatpush.msra.mxu0 %v2223
        %v2225 = vand.u32 %v1785, 4294901760
        %v2226 = vsub.f32 %v1785, %v2225
        %v2227 = vand.u32 %v2226, 4294901760
        %v2228 = vsub.f32 %v2226, %v2227
        %v2229 = vand.u32 %v2228, 4294901760
        %2230 = vmatpush.msra.mxu0 %v2229
        %v2231 = vand.u32 %v1799, 4294901760
        %2232 = vmatmul.f32.gmra.mxu0 %v2231
        %v2233 = vpop.f32.mrf.mxu0
        %v2234 = vadd.f32 %v2173, %v2233
        %2235 = vdwg.mxu0
        %2236 = vmatpush.msra.mxu0 0.0
        %2237 = vmatpush.msra.mxu0 0.0
        %2238 = vmatpush.msra.mxu0 0.0
        %2239 = vmatpush.msra.mxu0 0.0
        %2240 = vmatpush.msra.mxu0 0.0
        %2241 = vmatpush.msra.mxu0 0.0
        %2242 = vmatpush.msra.mxu0 0.0
        %2243 = vmatpush.msra.mxu0 0.0
        %v2244 = vand.u32 %v1792, 4294901760
        %v2245 = vsub.f32 %v1792, %v2244
        %2246 = vmatpush.msra.mxu0 %v2245
        %v2247 = vand.u32 %v1791, 4294901760
        %v2248 = vsub.f32 %v1791, %v2247
        %2249 = vmatpush.msra.mxu0 %v2248
        %v2250 = vand.u32 %v1790, 4294901760
        %v2251 = vsub.f32 %v1790, %v2250
        %2252 = vmatpush.msra.mxu0 %v2251
        %v2253 = vand.u32 %v1789, 4294901760
        %v2254 = vsub.f32 %v1789, %v2253
        %2255 = vmatpush.msra.mxu0 %v2254
        %v2256 = vand.u32 %v1788, 4294901760
        %v2257 = vsub.f32 %v1788, %v2256
        %2258 = vmatpush.msra.mxu0 %v2257
        %v2259 = vand.u32 %v1787, 4294901760
        %v2260 = vsub.f32 %v1787, %v2259
        %2261 = vmatpush.msra.mxu0 %v2260
        %v2262 = vand.u32 %v1786, 4294901760
        %v2263 = vsub.f32 %v1786, %v2262
        %2264 = vmatpush.msra.mxu0 %v2263
        %v2265 = vand.u32 %v1785, 4294901760
        %v2266 = vsub.f32 %v1785, %v2265
        %2267 = vmatpush.msra.mxu0 %v2266
        %v2268 = vand.u32 %v1799, 4294901760
        %v2269 = vsub.f32 %v1799, %v2268
        %2270 = vmatmul.f32.gmra.mxu0 %v2269
        %v2271 = vpop.f32.mrf.mxu0
        %v2272 = vadd.f32 %v2234, %v2271
        %2273 = vdwg.mxu0
        %2274 = vmatpush.msra.mxu0 0.0
        %2275 = vmatpush.msra.mxu0 0.0
        %2276 = vmatpush.msra.mxu0 0.0
        %2277 = vmatpush.msra.mxu0 0.0
        %2278 = vmatpush.msra.mxu0 0.0
        %2279 = vmatpush.msra.mxu0 0.0
        %2280 = vmatpush.msra.mxu0 0.0
        %2281 = vmatpush.msra.mxu0 0.0
        %v2282 = vand.u32 %v1792, 4294901760
        %2283 = vmatpush.msra.mxu0 %v2282
        %v2284 = vand.u32 %v1791, 4294901760
        %2285 = vmatpush.msra.mxu0 %v2284
        %v2286 = vand.u32 %v1790, 4294901760
        %2287 = vmatpush.msra.mxu0 %v2286
        %v2288 = vand.u32 %v1789, 4294901760
        %2289 = vmatpush.msra.mxu0 %v2288
        %v2290 = vand.u32 %v1788, 4294901760
        %2291 = vmatpush.msra.mxu0 %v2290
        %v2292 = vand.u32 %v1787, 4294901760
        %2293 = vmatpush.msra.mxu0 %v2292
        %v2294 = vand.u32 %v1786, 4294901760
        %2295 = vmatpush.msra.mxu0 %v2294
        %v2296 = vand.u32 %v1785, 4294901760
        %2297 = vmatpush.msra.mxu0 %v2296
        %v2298 = vand.u32 %v1799, 4294901760
        %v2299 = vsub.f32 %v1799, %v2298
        %v2300 = vand.u32 %v2299, 4294901760
        %2301 = vmatmul.f32.gmra.mxu0 %v2300
        %v2302 = vpop.f32.mrf.mxu0
        %v2303 = vadd.f32 %v2272, %v2302
        %2304 = vdwg.mxu0
        %2305 = vmatpush.msra.mxu0 0.0
        %2306 = vmatpush.msra.mxu0 0.0
        %2307 = vmatpush.msra.mxu0 0.0
        %2308 = vmatpush.msra.mxu0 0.0
        %2309 = vmatpush.msra.mxu0 0.0
        %2310 = vmatpush.msra.mxu0 0.0
        %2311 = vmatpush.msra.mxu0 0.0
        %2312 = vmatpush.msra.mxu0 0.0
        %v2313 = vand.u32 %v1792, 4294901760
        %v2314 = vsub.f32 %v1792, %v2313
        %v2315 = vand.u32 %v2314, 4294901760
        %2316 = vmatpush.msra.mxu0 %v2315
        %v2317 = vand.u32 %v1791, 4294901760
        %v2318 = vsub.f32 %v1791, %v2317
        %v2319 = vand.u32 %v2318, 4294901760
        %2320 = vmatpush.msra.mxu0 %v2319
        %v2321 = vand.u32 %v1790, 4294901760
        %v2322 = vsub.f32 %v1790, %v2321
        %v2323 = vand.u32 %v2322, 4294901760
        %2324 = vmatpush.msra.mxu0 %v2323
        %v2325 = vand.u32 %v1789, 4294901760
        %v2326 = vsub.f32 %v1789, %v2325
        %v2327 = vand.u32 %v2326, 4294901760
        %2328 = vmatpush.msra.mxu0 %v2327
        %v2329 = vand.u32 %v1788, 4294901760
        %v2330 = vsub.f32 %v1788, %v2329
        %v2331 = vand.u32 %v2330, 4294901760
        %2332 = vmatpush.msra.mxu0 %v2331
        %v2333 = vand.u32 %v1787, 4294901760
        %v2334 = vsub.f32 %v1787, %v2333
        %v2335 = vand.u32 %v2334, 4294901760
        %2336 = vmatpush.msra.mxu0 %v2335
        %v2337 = vand.u32 %v1786, 4294901760
        %v2338 = vsub.f32 %v1786, %v2337
        %v2339 = vand.u32 %v2338, 4294901760
        %2340 = vmatpush.msra.mxu0 %v2339
        %v2341 = vand.u32 %v1785, 4294901760
        %v2342 = vsub.f32 %v1785, %v2341
        %v2343 = vand.u32 %v2342, 4294901760
        %2344 = vmatpush.msra.mxu0 %v2343
        %v2345 = vand.u32 %v1799, 4294901760
        %2346 = vmatmul.f32.gmra.mxu0 %v2345
        %v2347 = vpop.f32.mrf.mxu0
        %v2348 = vadd.f32 %v2303, %v2347
        %2349 = vdwg.mxu0
        %2350 = vmatpush.msra.mxu0 0.0
        %2351 = vmatpush.msra.mxu0 0.0
        %2352 = vmatpush.msra.mxu0 0.0
        %2353 = vmatpush.msra.mxu0 0.0
        %2354 = vmatpush.msra.mxu0 0.0
        %2355 = vmatpush.msra.mxu0 0.0
        %2356 = vmatpush.msra.mxu0 0.0
        %2357 = vmatpush.msra.mxu0 0.0
        %v2358 = vand.u32 %v1792, 4294901760
        %2359 = vmatpush.msra.mxu0 %v2358
        %v2360 = vand.u32 %v1791, 4294901760
        %2361 = vmatpush.msra.mxu0 %v2360
        %v2362 = vand.u32 %v1790, 4294901760
        %2363 = vmatpush.msra.mxu0 %v2362
        %v2364 = vand.u32 %v1789, 4294901760
        %2365 = vmatpush.msra.mxu0 %v2364
        %v2366 = vand.u32 %v1788, 4294901760
        %2367 = vmatpush.msra.mxu0 %v2366
        %v2368 = vand.u32 %v1787, 4294901760
        %2369 = vmatpush.msra.mxu0 %v2368
        %v2370 = vand.u32 %v1786, 4294901760
        %2371 = vmatpush.msra.mxu0 %v2370
        %v2372 = vand.u32 %v1785, 4294901760
        %2373 = vmatpush.msra.mxu0 %v2372
        %v2374 = vand.u32 %v1799, 4294901760
        %2375 = vmatmul.f32.gmra.mxu0 %v2374
        %v2376 = vpop.f32.mrf.mxu0
        %v2377 = vadd.f32 %v2348, %v2376
        %2378 = vdwg.mxu0
        %v2379 = vld [vmem:[#allocation14 + $0x80] sm:$0xff]
        %v2380 = vld [vmem:[#allocation14 + $0x88] sm:$0xff]
        %v2381 = vld [vmem:[#allocation14 + $0x90] sm:$0xff]
        %v2382 = vld [vmem:[#allocation14 + $0x98] sm:$0xff]
        %v2383 = vld [vmem:[#allocation14 + $0xa0] sm:$0xff]
        %v2384 = vld [vmem:[#allocation14 + $0xa8] sm:$0xff]
        %v2385 = vld [vmem:[#allocation14 + $0xb0] sm:$0xff]
        %v2386 = vld [vmem:[#allocation14 + $0xb8] sm:$0xff]
        %v2387 = vld [vmem:[#allocation14 + $0xc0] sm:$0xff]
        %v2388 = vld [vmem:[#allocation14 + $0xc8] sm:$0xff]
        %v2389 = vld [vmem:[#allocation14 + $0xd0] sm:$0xff]
        %v2390 = vld [vmem:[#allocation14 + $0xd8] sm:$0xff]
        %v2391 = vld [vmem:[#allocation14 + $0xe0] sm:$0xff]
        %v2392 = vld [vmem:[#allocation14 + $0xe8] sm:$0xff]
        %v2393 = vld [vmem:[#allocation14 + $0xf0] sm:$0xff]
        %v2394 = vld [vmem:[#allocation14 + $0xf8] sm:$0xff]
        %v2395 = vand.u32 %v2394, 4294901760
        %2396 = vmatpush.msra.mxu0 %v2395
        %v2397 = vand.u32 %v2393, 4294901760
        %2398 = vmatpush.msra.mxu0 %v2397
        %v2399 = vand.u32 %v2392, 4294901760
        %2400 = vmatpush.msra.mxu0 %v2399
        %v2401 = vand.u32 %v2391, 4294901760
        %2402 = vmatpush.msra.mxu0 %v2401
        %v2403 = vand.u32 %v2390, 4294901760
        %2404 = vmatpush.msra.mxu0 %v2403
        %v2405 = vand.u32 %v2389, 4294901760
        %2406 = vmatpush.msra.mxu0 %v2405
        %v2407 = vand.u32 %v2388, 4294901760
        %2408 = vmatpush.msra.mxu0 %v2407
        %v2409 = vand.u32 %v2387, 4294901760
        %2410 = vmatpush.msra.mxu0 %v2409
        %v2411 = vand.u32 %v2386, 4294901760
        %2412 = vmatpush.msra.mxu0 %v2411
        %v2413 = vand.u32 %v2385, 4294901760
        %2414 = vmatpush.msra.mxu0 %v2413
        %v2415 = vand.u32 %v2384, 4294901760
        %2416 = vmatpush.msra.mxu0 %v2415
        %v2417 = vand.u32 %v2383, 4294901760
        %2418 = vmatpush.msra.mxu0 %v2417
        %v2419 = vand.u32 %v2382, 4294901760
        %2420 = vmatpush.msra.mxu0 %v2419
        %v2421 = vand.u32 %v2381, 4294901760
        %2422 = vmatpush.msra.mxu0 %v2421
        %v2423 = vand.u32 %v2380, 4294901760
        %2424 = vmatpush.msra.mxu0 %v2423
        %v2425 = vand.u32 %v2379, 4294901760
        %2426 = vmatpush.msra.mxu0 %v2425
        %v2427 = vand.u32 %v2377, 4294901760
        %v2428 = vsub.f32 %v2377, %v2427
        %v2429 = vand.u32 %v2428, 4294901760
        %v2430 = vsub.f32 %v2428, %v2429
        %v2431 = vand.u32 %v2430, 4294901760
        %2432 = vmatmul.f32.gmra.mxu0 %v2431
        %v2433 = vpop.f32.mrf.mxu0
        %v2434 = vadd.f32 0.0, %v2433
        %2435 = vdwg.mxu0
        %v2436 = vand.u32 %v2394, 4294901760
        %v2437 = vsub.f32 %v2394, %v2436
        %v2438 = vand.u32 %v2437, 4294901760
        %v2439 = vsub.f32 %v2437, %v2438
        %v2440 = vand.u32 %v2439, 4294901760
        %2441 = vmatpush.msra.mxu0 %v2440
        %v2442 = vand.u32 %v2393, 4294901760
        %v2443 = vsub.f32 %v2393, %v2442
        %v2444 = vand.u32 %v2443, 4294901760
        %v2445 = vsub.f32 %v2443, %v2444
        %v2446 = vand.u32 %v2445, 4294901760
        %2447 = vmatpush.msra.mxu0 %v2446
        %v2448 = vand.u32 %v2392, 4294901760
        %v2449 = vsub.f32 %v2392, %v2448
        %v2450 = vand.u32 %v2449, 4294901760
        %v2451 = vsub.f32 %v2449, %v2450
        %v2452 = vand.u32 %v2451, 4294901760
        %2453 = vmatpush.msra.mxu0 %v2452
        %v2454 = vand.u32 %v2391, 4294901760
        %v2455 = vsub.f32 %v2391, %v2454
        %v2456 = vand.u32 %v2455, 4294901760
        %v2457 = vsub.f32 %v2455, %v2456
        %v2458 = vand.u32 %v2457, 4294901760
        %2459 = vmatpush.msra.mxu0 %v2458
        %v2460 = vand.u32 %v2390, 4294901760
        %v2461 = vsub.f32 %v2390, %v2460
        %v2462 = vand.u32 %v2461, 4294901760
        %v2463 = vsub.f32 %v2461, %v2462
        %v2464 = vand.u32 %v2463, 4294901760
        %2465 = vmatpush.msra.mxu0 %v2464
        %v2466 = vand.u32 %v2389, 4294901760
        %v2467 = vsub.f32 %v2389, %v2466
        %v2468 = vand.u32 %v2467, 4294901760
        %v2469 = vsub.f32 %v2467, %v2468
        %v2470 = vand.u32 %v2469, 4294901760
        %2471 = vmatpush.msra.mxu0 %v2470
        %v2472 = vand.u32 %v2388, 4294901760
        %v2473 = vsub.f32 %v2388, %v2472
        %v2474 = vand.u32 %v2473, 4294901760
        %v2475 = vsub.f32 %v2473, %v2474
        %v2476 = vand.u32 %v2475, 4294901760
        %2477 = vmatpush.msra.mxu0 %v2476
        %v2478 = vand.u32 %v2387, 4294901760
        %v2479 = vsub.f32 %v2387, %v2478
        %v2480 = vand.u32 %v2479, 4294901760
        %v2481 = vsub.f32 %v2479, %v2480
        %v2482 = vand.u32 %v2481, 4294901760
        %2483 = vmatpush.msra.mxu0 %v2482
        %v2484 = vand.u32 %v2386, 4294901760
        %v2485 = vsub.f32 %v2386, %v2484
        %v2486 = vand.u32 %v2485, 4294901760
        %v2487 = vsub.f32 %v2485, %v2486
        %v2488 = vand.u32 %v2487, 4294901760
        %2489 = vmatpush.msra.mxu0 %v2488
        %v2490 = vand.u32 %v2385, 4294901760
        %v2491 = vsub.f32 %v2385, %v2490
        %v2492 = vand.u32 %v2491, 4294901760
        %v2493 = vsub.f32 %v2491, %v2492
        %v2494 = vand.u32 %v2493, 4294901760
        %2495 = vmatpush.msra.mxu0 %v2494
        %v2496 = vand.u32 %v2384, 4294901760
        %v2497 = vsub.f32 %v2384, %v2496
        %v2498 = vand.u32 %v2497, 4294901760
        %v2499 = vsub.f32 %v2497, %v2498
        %v2500 = vand.u32 %v2499, 4294901760
        %2501 = vmatpush.msra.mxu0 %v2500
        %v2502 = vand.u32 %v2383, 4294901760
        %v2503 = vsub.f32 %v2383, %v2502
        %v2504 = vand.u32 %v2503, 4294901760
        %v2505 = vsub.f32 %v2503, %v2504
        %v2506 = vand.u32 %v2505, 4294901760
        %2507 = vmatpush.msra.mxu0 %v2506
        %v2508 = vand.u32 %v2382, 4294901760
        %v2509 = vsub.f32 %v2382, %v2508
        %v2510 = vand.u32 %v2509, 4294901760
        %v2511 = vsub.f32 %v2509, %v2510
        %v2512 = vand.u32 %v2511, 4294901760
        %2513 = vmatpush.msra.mxu0 %v2512
        %v2514 = vand.u32 %v2381, 4294901760
        %v2515 = vsub.f32 %v2381, %v2514
        %v2516 = vand.u32 %v2515, 4294901760
        %v2517 = vsub.f32 %v2515, %v2516
        %v2518 = vand.u32 %v2517, 4294901760
        %2519 = vmatpush.msra.mxu0 %v2518
        %v2520 = vand.u32 %v2380, 4294901760
        %v2521 = vsub.f32 %v2380, %v2520
        %v2522 = vand.u32 %v2521, 4294901760
        %v2523 = vsub.f32 %v2521, %v2522
        %v2524 = vand.u32 %v2523, 4294901760
        %2525 = vmatpush.msra.mxu0 %v2524
        %v2526 = vand.u32 %v2379, 4294901760
        %v2527 = vsub.f32 %v2379, %v2526
        %v2528 = vand.u32 %v2527, 4294901760
        %v2529 = vsub.f32 %v2527, %v2528
        %v2530 = vand.u32 %v2529, 4294901760
        %2531 = vmatpush.msra.mxu0 %v2530
        %v2532 = vand.u32 %v2377, 4294901760
        %2533 = vmatmul.f32.gmra.mxu0 %v2532
        %v2534 = vpop.f32.mrf.mxu0
        %v2535 = vadd.f32 %v2434, %v2534
        %2536 = vdwg.mxu0
        %v2537 = vand.u32 %v2394, 4294901760
        %v2538 = vsub.f32 %v2394, %v2537
        %2539 = vmatpush.msra.mxu0 %v2538
        %v2540 = vand.u32 %v2393, 4294901760
        %v2541 = vsub.f32 %v2393, %v2540
        %2542 = vmatpush.msra.mxu0 %v2541
        %v2543 = vand.u32 %v2392, 4294901760
        %v2544 = vsub.f32 %v2392, %v2543
        %2545 = vmatpush.msra.mxu0 %v2544
        %v2546 = vand.u32 %v2391, 4294901760
        %v2547 = vsub.f32 %v2391, %v2546
        %2548 = vmatpush.msra.mxu0 %v2547
        %v2549 = vand.u32 %v2390, 4294901760
        %v2550 = vsub.f32 %v2390, %v2549
        %2551 = vmatpush.msra.mxu0 %v2550
        %v2552 = vand.u32 %v2389, 4294901760
        %v2553 = vsub.f32 %v2389, %v2552
        %2554 = vmatpush.msra.mxu0 %v2553
        %v2555 = vand.u32 %v2388, 4294901760
        %v2556 = vsub.f32 %v2388, %v2555
        %2557 = vmatpush.msra.mxu0 %v2556
        %v2558 = vand.u32 %v2387, 4294901760
        %v2559 = vsub.f32 %v2387, %v2558
        %2560 = vmatpush.msra.mxu0 %v2559
        %v2561 = vand.u32 %v2386, 4294901760
        %v2562 = vsub.f32 %v2386, %v2561
        %2563 = vmatpush.msra.mxu0 %v2562
        %v2564 = vand.u32 %v2385, 4294901760
        %v2565 = vsub.f32 %v2385, %v2564
        %2566 = vmatpush.msra.mxu0 %v2565
        %v2567 = vand.u32 %v2384, 4294901760
        %v2568 = vsub.f32 %v2384, %v2567
        %2569 = vmatpush.msra.mxu0 %v2568
        %v2570 = vand.u32 %v2383, 4294901760
        %v2571 = vsub.f32 %v2383, %v2570
        %2572 = vmatpush.msra.mxu0 %v2571
        %v2573 = vand.u32 %v2382, 4294901760
        %v2574 = vsub.f32 %v2382, %v2573
        %2575 = vmatpush.msra.mxu0 %v2574
        %v2576 = vand.u32 %v2381, 4294901760
        %v2577 = vsub.f32 %v2381, %v2576
        %2578 = vmatpush.msra.mxu0 %v2577
        %v2579 = vand.u32 %v2380, 4294901760
        %v2580 = vsub.f32 %v2380, %v2579
        %2581 = vmatpush.msra.mxu0 %v2580
        %v2582 = vand.u32 %v2379, 4294901760
        %v2583 = vsub.f32 %v2379, %v2582
        %2584 = vmatpush.msra.mxu0 %v2583
        %v2585 = vand.u32 %v2377, 4294901760
        %v2586 = vsub.f32 %v2377, %v2585
        %2587 = vmatmul.f32.gmra.mxu0 %v2586
        %v2588 = vpop.f32.mrf.mxu0
        %v2589 = vadd.f32 %v2535, %v2588
        %2590 = vdwg.mxu0
        %v2591 = vand.u32 %v2394, 4294901760
        %2592 = vmatpush.msra.mxu0 %v2591
        %v2593 = vand.u32 %v2393, 4294901760
        %2594 = vmatpush.msra.mxu0 %v2593
        %v2595 = vand.u32 %v2392, 4294901760
        %2596 = vmatpush.msra.mxu0 %v2595
        %v2597 = vand.u32 %v2391, 4294901760
        %2598 = vmatpush.msra.mxu0 %v2597
        %v2599 = vand.u32 %v2390, 4294901760
        %2600 = vmatpush.msra.mxu0 %v2599
        %v2601 = vand.u32 %v2389, 4294901760
        %2602 = vmatpush.msra.mxu0 %v2601
        %v2603 = vand.u32 %v2388, 4294901760
        %2604 = vmatpush.msra.mxu0 %v2603
        %v2605 = vand.u32 %v2387, 4294901760
        %2606 = vmatpush.msra.mxu0 %v2605
        %v2607 = vand.u32 %v2386, 4294901760
        %2608 = vmatpush.msra.mxu0 %v2607
        %v2609 = vand.u32 %v2385, 4294901760
        %2610 = vmatpush.msra.mxu0 %v2609
        %v2611 = vand.u32 %v2384, 4294901760
        %2612 = vmatpush.msra.mxu0 %v2611
        %v2613 = vand.u32 %v2383, 4294901760
        %2614 = vmatpush.msra.mxu0 %v2613
        %v2615 = vand.u32 %v2382, 4294901760
        %2616 = vmatpush.msra.mxu0 %v2615
        %v2617 = vand.u32 %v2381, 4294901760
        %2618 = vmatpush.msra.mxu0 %v2617
        %v2619 = vand.u32 %v2380, 4294901760
        %2620 = vmatpush.msra.mxu0 %v2619
        %v2621 = vand.u32 %v2379, 4294901760
        %2622 = vmatpush.msra.mxu0 %v2621
        %v2623 = vand.u32 %v2377, 4294901760
        %v2624 = vsub.f32 %v2377, %v2623
        %v2625 = vand.u32 %v2624, 4294901760
        %2626 = vmatmul.f32.gmra.mxu0 %v2625
        %v2627 = vpop.f32.mrf.mxu0
        %v2628 = vadd.f32 %v2589, %v2627
        %2629 = vdwg.mxu0
        %v2630 = vand.u32 %v2394, 4294901760
        %v2631 = vsub.f32 %v2394, %v2630
        %v2632 = vand.u32 %v2631, 4294901760
        %2633 = vmatpush.msra.mxu0 %v2632
        %v2634 = vand.u32 %v2393, 4294901760
        %v2635 = vsub.f32 %v2393, %v2634
        %v2636 = vand.u32 %v2635, 4294901760
        %2637 = vmatpush.msra.mxu0 %v2636
        %v2638 = vand.u32 %v2392, 4294901760
        %v2639 = vsub.f32 %v2392, %v2638
        %v2640 = vand.u32 %v2639, 4294901760
        %2641 = vmatpush.msra.mxu0 %v2640
        %v2642 = vand.u32 %v2391, 4294901760
        %v2643 = vsub.f32 %v2391, %v2642
        %v2644 = vand.u32 %v2643, 4294901760
        %2645 = vmatpush.msra.mxu0 %v2644
        %v2646 = vand.u32 %v2390, 4294901760
        %v2647 = vsub.f32 %v2390, %v2646
        %v2648 = vand.u32 %v2647, 4294901760
        %2649 = vmatpush.msra.mxu0 %v2648
        %v2650 = vand.u32 %v2389, 4294901760
        %v2651 = vsub.f32 %v2389, %v2650
        %v2652 = vand.u32 %v2651, 4294901760
        %2653 = vmatpush.msra.mxu0 %v2652
        %v2654 = vand.u32 %v2388, 4294901760
        %v2655 = vsub.f32 %v2388, %v2654
        %v2656 = vand.u32 %v2655, 4294901760
        %2657 = vmatpush.msra.mxu0 %v2656
        %v2658 = vand.u32 %v2387, 4294901760
        %v2659 = vsub.f32 %v2387, %v2658
        %v2660 = vand.u32 %v2659, 4294901760
        %2661 = vmatpush.msra.mxu0 %v2660
        %v2662 = vand.u32 %v2386, 4294901760
        %v2663 = vsub.f32 %v2386, %v2662
        %v2664 = vand.u32 %v2663, 4294901760
        %2665 = vmatpush.msra.mxu0 %v2664
        %v2666 = vand.u32 %v2385, 4294901760
        %v2667 = vsub.f32 %v2385, %v2666
        %v2668 = vand.u32 %v2667, 4294901760
        %2669 = vmatpush.msra.mxu0 %v2668
        %v2670 = vand.u32 %v2384, 4294901760
        %v2671 = vsub.f32 %v2384, %v2670
        %v2672 = vand.u32 %v2671, 4294901760
        %2673 = vmatpush.msra.mxu0 %v2672
        %v2674 = vand.u32 %v2383, 4294901760
        %v2675 = vsub.f32 %v2383, %v2674
        %v2676 = vand.u32 %v2675, 4294901760
        %2677 = vmatpush.msra.mxu0 %v2676
        %v2678 = vand.u32 %v2382, 4294901760
        %v2679 = vsub.f32 %v2382, %v2678
        %v2680 = vand.u32 %v2679, 4294901760
        %2681 = vmatpush.msra.mxu0 %v2680
        %v2682 = vand.u32 %v2381, 4294901760
        %v2683 = vsub.f32 %v2381, %v2682
        %v2684 = vand.u32 %v2683, 4294901760
        %2685 = vmatpush.msra.mxu0 %v2684
        %v2686 = vand.u32 %v2380, 4294901760
        %v2687 = vsub.f32 %v2380, %v2686
        %v2688 = vand.u32 %v2687, 4294901760
        %2689 = vmatpush.msra.mxu0 %v2688
        %v2690 = vand.u32 %v2379, 4294901760
        %v2691 = vsub.f32 %v2379, %v2690
        %v2692 = vand.u32 %v2691, 4294901760
        %2693 = vmatpush.msra.mxu0 %v2692
        %v2694 = vand.u32 %v2377, 4294901760
        %2695 = vmatmul.f32.gmra.mxu0 %v2694
        %v2696 = vpop.f32.mrf.mxu0
        %v2697 = vadd.f32 %v2628, %v2696
        %2698 = vdwg.mxu0
        %v2699 = vand.u32 %v2394, 4294901760
        %2700 = vmatpush.msra.mxu0 %v2699
        %v2701 = vand.u32 %v2393, 4294901760
        %2702 = vmatpush.msra.mxu0 %v2701
        %v2703 = vand.u32 %v2392, 4294901760
        %2704 = vmatpush.msra.mxu0 %v2703
        %v2705 = vand.u32 %v2391, 4294901760
        %2706 = vmatpush.msra.mxu0 %v2705
        %v2707 = vand.u32 %v2390, 4294901760
        %2708 = vmatpush.msra.mxu0 %v2707
        %v2709 = vand.u32 %v2389, 4294901760
        %2710 = vmatpush.msra.mxu0 %v2709
        %v2711 = vand.u32 %v2388, 4294901760
        %2712 = vmatpush.msra.mxu0 %v2711
        %v2713 = vand.u32 %v2387, 4294901760
        %2714 = vmatpush.msra.mxu0 %v2713
        %v2715 = vand.u32 %v2386, 4294901760
        %2716 = vmatpush.msra.mxu0 %v2715
        %v2717 = vand.u32 %v2385, 4294901760
        %2718 = vmatpush.msra.mxu0 %v2717
        %v2719 = vand.u32 %v2384, 4294901760
        %2720 = vmatpush.msra.mxu0 %v2719
        %v2721 = vand.u32 %v2383, 4294901760
        %2722 = vmatpush.msra.mxu0 %v2721
        %v2723 = vand.u32 %v2382, 4294901760
        %2724 = vmatpush.msra.mxu0 %v2723
        %v2725 = vand.u32 %v2381, 4294901760
        %2726 = vmatpush.msra.mxu0 %v2725
        %v2727 = vand.u32 %v2380, 4294901760
        %2728 = vmatpush.msra.mxu0 %v2727
        %v2729 = vand.u32 %v2379, 4294901760
        %2730 = vmatpush.msra.mxu0 %v2729
        %v2731 = vand.u32 %v2377, 4294901760
        %2732 = vmatmul.f32.gmra.mxu0 %v2731
        %v2733 = vpop.f32.mrf.mxu0
        %v2734 = vadd.f32 %v2697, %v2733
        %2735 = vdwg.mxu0
        %2736 = vst [vmem:[%s648 + $0x8] sm:$0xff] %v2734
        %v2737 = vmul.f32 %v2377, %v2377
        %2738 = vadd.xlane.f32.xlu0 %v2737
        %v2739 = vpop.xlane.xlu0 %2738
        %v2740 = vmax.f32 %v2739, 1e-24
        %v2741 = vrsqrt.pop %v2740
        %v2742 = vmul.f32 %v2741, %v2740
        %v2743 = vmul.f32 %v2742, %v2741
        %v2744 = vmul.f32 0.5, %v2743
        %v2745 = vsub.f32 1.5, %v2744
        %v2746 = vmul.f32 %v2741, %v2745
        %vm2747 = vweird.f32 %v2740
        %vm2748 = vweird.f32 %v2741
        %vm2749 = vmor %vm2747, %vm2748
        %v2750 = vsel %vm2749, %v2741, %v2746
        %v2751 = vmul.f32 %v2377, %v2750
        %v2752 = vld [vmem:[%s570] sm:$0xff]
        %v2753 = vld [vmem:[#allocation11] sm:$0xff]
        %v2754 = vld [vmem:[#allocation11 + $0x8] sm:$0xff]
        %v2755 = vld [vmem:[#allocation11 + $0x10] sm:$0xff]
        %v2756 = vld [vmem:[#allocation11 + $0x18] sm:$0xff]
        %v2757 = vld [vmem:[#allocation11 + $0x20] sm:$0xff]
        %v2758 = vld [vmem:[#allocation11 + $0x28] sm:$0xff]
        %v2759 = vld [vmem:[#allocation11 + $0x30] sm:$0xff]
        %v2760 = vld [vmem:[#allocation11 + $0x38] sm:$0xff]
        %v2761 = vld [vmem:[#allocation11 + $0x40] sm:$0xff]
        %v2762 = vld [vmem:[#allocation11 + $0x48] sm:$0xff]
        %v2763 = vld [vmem:[#allocation11 + $0x50] sm:$0xff]
        %v2764 = vld [vmem:[#allocation11 + $0x58] sm:$0xff]
        %v2765 = vld [vmem:[#allocation11 + $0x60] sm:$0xff]
        %v2766 = vld [vmem:[#allocation11 + $0x68] sm:$0xff]
        %v2767 = vld [vmem:[#allocation11 + $0x70] sm:$0xff]
        %v2768 = vld [vmem:[#allocation11 + $0x78] sm:$0xff]
        %v2769 = vld [vmem:[%s8] sm:$0x1]
        %v2771 = vperm.slane %v2769, 0
        %v2773 = vand.u32 %v2768, 4294901760
        %2774 = vmatpush.msra.mxu0 %v2773
        %v2775 = vand.u32 %v2767, 4294901760
        %2776 = vmatpush.msra.mxu0 %v2775
        %v2777 = vand.u32 %v2766, 4294901760
        %2778 = vmatpush.msra.mxu0 %v2777
        %v2779 = vand.u32 %v2765, 4294901760
        %2780 = vmatpush.msra.mxu0 %v2779
        %v2781 = vand.u32 %v2764, 4294901760
        %2782 = vmatpush.msra.mxu0 %v2781
        %v2783 = vand.u32 %v2763, 4294901760
        %2784 = vmatpush.msra.mxu0 %v2783
        %v2785 = vand.u32 %v2762, 4294901760
        %2786 = vmatpush.msra.mxu0 %v2785
        %v2787 = vand.u32 %v2761, 4294901760
        %2788 = vmatpush.msra.mxu0 %v2787
        %v2789 = vand.u32 %v2760, 4294901760
        %2790 = vmatpush.msra.mxu0 %v2789
        %v2791 = vand.u32 %v2759, 4294901760
        %2792 = vmatpush.msra.mxu0 %v2791
        %v2793 = vand.u32 %v2758, 4294901760
        %2794 = vmatpush.msra.mxu0 %v2793
        %v2795 = vand.u32 %v2757, 4294901760
        %2796 = vmatpush.msra.mxu0 %v2795
        %v2797 = vand.u32 %v2756, 4294901760
        %2798 = vmatpush.msra.mxu0 %v2797
        %v2799 = vand.u32 %v2755, 4294901760
        %2800 = vmatpush.msra.mxu0 %v2799
        %v2801 = vand.u32 %v2754, 4294901760
        %2802 = vmatpush.msra.mxu0 %v2801
        %v2803 = vand.u32 %v2753, 4294901760
        %2804 = vmatpush.msra.mxu0 %v2803
        %v2805 = vand.u32 %v2752, 4294901760
        %v2806 = vsub.f32 %v2752, %v2805
        %v2807 = vand.u32 %v2806, 4294901760
        %v2808 = vsub.f32 %v2806, %v2807
        %v2809 = vand.u32 %v2808, 4294901760
        %2810 = vmatmul.f32.gmra.mxu0 %v2809
        %v2811 = vpop.f32.mrf.mxu0
        %v2812 = vadd.f32 %v2771, %v2811
        %2813 = vdwg.mxu0
        %v2814 = vand.u32 %v2768, 4294901760
        %v2815 = vsub.f32 %v2768, %v2814
        %v2816 = vand.u32 %v2815, 4294901760
        %v2817 = vsub.f32 %v2815, %v2816
        %v2818 = vand.u32 %v2817, 4294901760
        %2819 = vmatpush.msra.mxu0 %v2818
        %v2820 = vand.u32 %v2767, 4294901760
        %v2821 = vsub.f32 %v2767, %v2820
        %v2822 = vand.u32 %v2821, 4294901760
        %v2823 = vsub.f32 %v2821, %v2822
        %v2824 = vand.u32 %v2823, 4294901760
        %2825 = vmatpush.msra.mxu0 %v2824
        %v2826 = vand.u32 %v2766, 4294901760
        %v2827 = vsub.f32 %v2766, %v2826
        %v2828 = vand.u32 %v2827, 4294901760
        %v2829 = vsub.f32 %v2827, %v2828
        %v2830 = vand.u32 %v2829, 4294901760
        %2831 = vmatpush.msra.mxu0 %v2830
        %v2832 = vand.u32 %v2765, 4294901760
        %v2833 = vsub.f32 %v2765, %v2832
        %v2834 = vand.u32 %v2833, 4294901760
        %v2835 = vsub.f32 %v2833, %v2834
        %v2836 = vand.u32 %v2835, 4294901760
        %2837 = vmatpush.msra.mxu0 %v2836
        %v2838 = vand.u32 %v2764, 4294901760
        %v2839 = vsub.f32 %v2764, %v2838
        %v2840 = vand.u32 %v2839, 4294901760
        %v2841 = vsub.f32 %v2839, %v2840
        %v2842 = vand.u32 %v2841, 4294901760
        %2843 = vmatpush.msra.mxu0 %v2842
        %v2844 = vand.u32 %v2763, 4294901760
        %v2845 = vsub.f32 %v2763, %v2844
        %v2846 = vand.u32 %v2845, 4294901760
        %v2847 = vsub.f32 %v2845, %v2846
        %v2848 = vand.u32 %v2847, 4294901760
        %2849 = vmatpush.msra.mxu0 %v2848
        %v2850 = vand.u32 %v2762, 4294901760
        %v2851 = vsub.f32 %v2762, %v2850
        %v2852 = vand.u32 %v2851, 4294901760
        %v2853 = vsub.f32 %v2851, %v2852
        %v2854 = vand.u32 %v2853, 4294901760
        %2855 = vmatpush.msra.mxu0 %v2854
        %v2856 = vand.u32 %v2761, 4294901760
        %v2857 = vsub.f32 %v2761, %v2856
        %v2858 = vand.u32 %v2857, 4294901760
        %v2859 = vsub.f32 %v2857, %v2858
        %v2860 = vand.u32 %v2859, 4294901760
        %2861 = vmatpush.msra.mxu0 %v2860
        %v2862 = vand.u32 %v2760, 4294901760
        %v2863 = vsub.f32 %v2760, %v2862
        %v2864 = vand.u32 %v2863, 4294901760
        %v2865 = vsub.f32 %v2863, %v2864
        %v2866 = vand.u32 %v2865, 4294901760
        %2867 = vmatpush.msra.mxu0 %v2866
        %v2868 = vand.u32 %v2759, 4294901760
        %v2869 = vsub.f32 %v2759, %v2868
        %v2870 = vand.u32 %v2869, 4294901760
        %v2871 = vsub.f32 %v2869, %v2870
        %v2872 = vand.u32 %v2871, 4294901760
        %2873 = vmatpush.msra.mxu0 %v2872
        %v2874 = vand.u32 %v2758, 4294901760
        %v2875 = vsub.f32 %v2758, %v2874
        %v2876 = vand.u32 %v2875, 4294901760
        %v2877 = vsub.f32 %v2875, %v2876
        %v2878 = vand.u32 %v2877, 4294901760
        %2879 = vmatpush.msra.mxu0 %v2878
        %v2880 = vand.u32 %v2757, 4294901760
        %v2881 = vsub.f32 %v2757, %v2880
        %v2882 = vand.u32 %v2881, 4294901760
        %v2883 = vsub.f32 %v2881, %v2882
        %v2884 = vand.u32 %v2883, 4294901760
        %2885 = vmatpush.msra.mxu0 %v2884
        %v2886 = vand.u32 %v2756, 4294901760
        %v2887 = vsub.f32 %v2756, %v2886
        %v2888 = vand.u32 %v2887, 4294901760
        %v2889 = vsub.f32 %v2887, %v2888
        %v2890 = vand.u32 %v2889, 4294901760
        %2891 = vmatpush.msra.mxu0 %v2890
        %v2892 = vand.u32 %v2755, 4294901760
        %v2893 = vsub.f32 %v2755, %v2892
        %v2894 = vand.u32 %v2893, 4294901760
        %v2895 = vsub.f32 %v2893, %v2894
        %v2896 = vand.u32 %v2895, 4294901760
        %2897 = vmatpush.msra.mxu0 %v2896
        %v2898 = vand.u32 %v2754, 4294901760
        %v2899 = vsub.f32 %v2754, %v2898
        %v2900 = vand.u32 %v2899, 4294901760
        %v2901 = vsub.f32 %v2899, %v2900
        %v2902 = vand.u32 %v2901, 4294901760
        %2903 = vmatpush.msra.mxu0 %v2902
        %v2904 = vand.u32 %v2753, 4294901760
        %v2905 = vsub.f32 %v2753, %v2904
        %v2906 = vand.u32 %v2905, 4294901760
        %v2907 = vsub.f32 %v2905, %v2906
        %v2908 = vand.u32 %v2907, 4294901760
        %2909 = vmatpush.msra.mxu0 %v2908
        %v2910 = vand.u32 %v2752, 4294901760
        %2911 = vmatmul.f32.gmra.mxu0 %v2910
        %v2912 = vpop.f32.mrf.mxu0
        %v2913 = vadd.f32 %v2812, %v2912
        %2914 = vdwg.mxu0
        %v2915 = vand.u32 %v2768, 4294901760
        %v2916 = vsub.f32 %v2768, %v2915
        %2917 = vmatpush.msra.mxu0 %v2916
        %v2918 = vand.u32 %v2767, 4294901760
        %v2919 = vsub.f32 %v2767, %v2918
        %2920 = vmatpush.msra.mxu0 %v2919
        %v2921 = vand.u32 %v2766, 4294901760
        %v2922 = vsub.f32 %v2766, %v2921
        %2923 = vmatpush.msra.mxu0 %v2922
        %v2924 = vand.u32 %v2765, 4294901760
        %v2925 = vsub.f32 %v2765, %v2924
        %2926 = vmatpush.msra.mxu0 %v2925
        %v2927 = vand.u32 %v2764, 4294901760
        %v2928 = vsub.f32 %v2764, %v2927
        %2929 = vmatpush.msra.mxu0 %v2928
        %v2930 = vand.u32 %v2763, 4294901760
        %v2931 = vsub.f32 %v2763, %v2930
        %2932 = vmatpush.msra.mxu0 %v2931
        %v2933 = vand.u32 %v2762, 4294901760
        %v2934 = vsub.f32 %v2762, %v2933
        %2935 = vmatpush.msra.mxu0 %v2934
        %v2936 = vand.u32 %v2761, 4294901760
        %v2937 = vsub.f32 %v2761, %v2936
        %2938 = vmatpush.msra.mxu0 %v2937
        %v2939 = vand.u32 %v2760, 4294901760
        %v2940 = vsub.f32 %v2760, %v2939
        %2941 = vmatpush.msra.mxu0 %v2940
        %v2942 = vand.u32 %v2759, 4294901760
        %v2943 = vsub.f32 %v2759, %v2942
        %2944 = vmatpush.msra.mxu0 %v2943
        %v2945 = vand.u32 %v2758, 4294901760
        %v2946 = vsub.f32 %v2758, %v2945
        %2947 = vmatpush.msra.mxu0 %v2946
        %v2948 = vand.u32 %v2757, 4294901760
        %v2949 = vsub.f32 %v2757, %v2948
        %2950 = vmatpush.msra.mxu0 %v2949
        %v2951 = vand.u32 %v2756, 4294901760
        %v2952 = vsub.f32 %v2756, %v2951
        %2953 = vmatpush.msra.mxu0 %v2952
        %v2954 = vand.u32 %v2755, 4294901760
        %v2955 = vsub.f32 %v2755, %v2954
        %2956 = vmatpush.msra.mxu0 %v2955
        %v2957 = vand.u32 %v2754, 4294901760
        %v2958 = vsub.f32 %v2754, %v2957
        %2959 = vmatpush.msra.mxu0 %v2958
        %v2960 = vand.u32 %v2753, 4294901760
        %v2961 = vsub.f32 %v2753, %v2960
        %2962 = vmatpush.msra.mxu0 %v2961
        %v2963 = vand.u32 %v2752, 4294901760
        %v2964 = vsub.f32 %v2752, %v2963
        %2965 = vmatmul.f32.gmra.mxu0 %v2964
        %v2966 = vpop.f32.mrf.mxu0
        %v2967 = vadd.f32 %v2913, %v2966
        %2968 = vdwg.mxu0
        %v2969 = vand.u32 %v2768, 4294901760
        %2970 = vmatpush.msra.mxu0 %v2969
        %v2971 = vand.u32 %v2767, 4294901760
        %2972 = vmatpush.msra.mxu0 %v2971
        %v2973 = vand.u32 %v2766, 4294901760
        %2974 = vmatpush.msra.mxu0 %v2973
        %v2975 = vand.u32 %v2765, 4294901760
        %2976 = vmatpush.msra.mxu0 %v2975
        %v2977 = vand.u32 %v2764, 4294901760
        %2978 = vmatpush.msra.mxu0 %v2977
        %v2979 = vand.u32 %v2763, 4294901760
        %2980 = vmatpush.msra.mxu0 %v2979
        %v2981 = vand.u32 %v2762, 4294901760
        %2982 = vmatpush.msra.mxu0 %v2981
        %v2983 = vand.u32 %v2761, 4294901760
        %2984 = vmatpush.msra.mxu0 %v2983
        %v2985 = vand.u32 %v2760, 4294901760
        %2986 = vmatpush.msra.mxu0 %v2985
        %v2987 = vand.u32 %v2759, 4294901760
        %2988 = vmatpush.msra.mxu0 %v2987
        %v2989 = vand.u32 %v2758, 4294901760
        %2990 = vmatpush.msra.mxu0 %v2989
        %v2991 = vand.u32 %v2757, 4294901760
        %2992 = vmatpush.msra.mxu0 %v2991
        %v2993 = vand.u32 %v2756, 4294901760
        %2994 = vmatpush.msra.mxu0 %v2993
        %v2995 = vand.u32 %v2755, 4294901760
        %2996 = vmatpush.msra.mxu0 %v2995
        %v2997 = vand.u32 %v2754, 4294901760
        %2998 = vmatpush.msra.mxu0 %v2997
        %v2999 = vand.u32 %v2753, 4294901760
        %3000 = vmatpush.msra.mxu0 %v2999
        %v3001 = vand.u32 %v2752, 4294901760
        %v3002 = vsub.f32 %v2752, %v3001
        %v3003 = vand.u32 %v3002, 4294901760
        %3004 = vmatmul.f32.gmra.mxu0 %v3003
        %v3005 = vpop.f32.mrf.mxu0
        %v3006 = vadd.f32 %v2967, %v3005
        %3007 = vdwg.mxu0
        %v3008 = vand.u32 %v2768, 4294901760
        %v3009 = vsub.f32 %v2768, %v3008
        %v3010 = vand.u32 %v3009, 4294901760
        %3011 = vmatpush.msra.mxu0 %v3010
        %v3012 = vand.u32 %v2767, 4294901760
        %v3013 = vsub.f32 %v2767, %v3012
        %v3014 = vand.u32 %v3013, 4294901760
        %3015 = vmatpush.msra.mxu0 %v3014
        %v3016 = vand.u32 %v2766, 4294901760
        %v3017 = vsub.f32 %v2766, %v3016
        %v3018 = vand.u32 %v3017, 4294901760
        %3019 = vmatpush.msra.mxu0 %v3018
        %v3020 = vand.u32 %v2765, 4294901760
        %v3021 = vsub.f32 %v2765, %v3020
        %v3022 = vand.u32 %v3021, 4294901760
        %3023 = vmatpush.msra.mxu0 %v3022
        %v3024 = vand.u32 %v2764, 4294901760
        %v3025 = vsub.f32 %v2764, %v3024
        %v3026 = vand.u32 %v3025, 4294901760
        %3027 = vmatpush.msra.mxu0 %v3026
        %v3028 = vand.u32 %v2763, 4294901760
        %v3029 = vsub.f32 %v2763, %v3028
        %v3030 = vand.u32 %v3029, 4294901760
        %3031 = vmatpush.msra.mxu0 %v3030
        %v3032 = vand.u32 %v2762, 4294901760
        %v3033 = vsub.f32 %v2762, %v3032
        %v3034 = vand.u32 %v3033, 4294901760
        %3035 = vmatpush.msra.mxu0 %v3034
        %v3036 = vand.u32 %v2761, 4294901760
        %v3037 = vsub.f32 %v2761, %v3036
        %v3038 = vand.u32 %v3037, 4294901760
        %3039 = vmatpush.msra.mxu0 %v3038
        %v3040 = vand.u32 %v2760, 4294901760
        %v3041 = vsub.f32 %v2760, %v3040
        %v3042 = vand.u32 %v3041, 4294901760
        %3043 = vmatpush.msra.mxu0 %v3042
        %v3044 = vand.u32 %v2759, 4294901760
        %v3045 = vsub.f32 %v2759, %v3044
        %v3046 = vand.u32 %v3045, 4294901760
        %3047 = vmatpush.msra.mxu0 %v3046
        %v3048 = vand.u32 %v2758, 4294901760
        %v3049 = vsub.f32 %v2758, %v3048
        %v3050 = vand.u32 %v3049, 4294901760
        %3051 = vmatpush.msra.mxu0 %v3050
        %v3052 = vand.u32 %v2757, 4294901760
        %v3053 = vsub.f32 %v2757, %v3052
        %v3054 = vand.u32 %v3053, 4294901760
        %3055 = vmatpush.msra.mxu0 %v3054
        %v3056 = vand.u32 %v2756, 4294901760
        %v3057 = vsub.f32 %v2756, %v3056
        %v3058 = vand.u32 %v3057, 4294901760
        %3059 = vmatpush.msra.mxu0 %v3058
        %v3060 = vand.u32 %v2755, 4294901760
        %v3061 = vsub.f32 %v2755, %v3060
        %v3062 = vand.u32 %v3061, 4294901760
        %3063 = vmatpush.msra.mxu0 %v3062
        %v3064 = vand.u32 %v2754, 4294901760
        %v3065 = vsub.f32 %v2754, %v3064
        %v3066 = vand.u32 %v3065, 4294901760
        %3067 = vmatpush.msra.mxu0 %v3066
        %v3068 = vand.u32 %v2753, 4294901760
        %v3069 = vsub.f32 %v2753, %v3068
        %v3070 = vand.u32 %v3069, 4294901760
        %3071 = vmatpush.msra.mxu0 %v3070
        %v3072 = vand.u32 %v2752, 4294901760
        %3073 = vmatmul.f32.gmra.mxu0 %v3072
        %v3074 = vpop.f32.mrf.mxu0
        %v3075 = vadd.f32 %v3006, %v3074
        %3076 = vdwg.mxu0
        %v3077 = vand.u32 %v2768, 4294901760
        %3078 = vmatpush.msra.mxu0 %v3077
        %v3079 = vand.u32 %v2767, 4294901760
        %3080 = vmatpush.msra.mxu0 %v3079
        %v3081 = vand.u32 %v2766, 4294901760
        %3082 = vmatpush.msra.mxu0 %v3081
        %v3083 = vand.u32 %v2765, 4294901760
        %3084 = vmatpush.msra.mxu0 %v3083
        %v3085 = vand.u32 %v2764, 4294901760
        %3086 = vmatpush.msra.mxu0 %v3085
        %v3087 = vand.u32 %v2763, 4294901760
        %3088 = vmatpush.msra.mxu0 %v3087
        %v3089 = vand.u32 %v2762, 4294901760
        %3090 = vmatpush.msra.mxu0 %v3089
        %v3091 = vand.u32 %v2761, 4294901760
        %3092 = vmatpush.msra.mxu0 %v3091
        %v3093 = vand.u32 %v2760, 4294901760
        %3094 = vmatpush.msra.mxu0 %v3093
        %v3095 = vand.u32 %v2759, 4294901760
        %3096 = vmatpush.msra.mxu0 %v3095
        %v3097 = vand.u32 %v2758, 4294901760
        %3098 = vmatpush.msra.mxu0 %v3097
        %v3099 = vand.u32 %v2757, 4294901760
        %3100 = vmatpush.msra.mxu0 %v3099
        %v3101 = vand.u32 %v2756, 4294901760
        %3102 = vmatpush.msra.mxu0 %v3101
        %v3103 = vand.u32 %v2755, 4294901760
        %3104 = vmatpush.msra.mxu0 %v3103
        %v3105 = vand.u32 %v2754, 4294901760
        %3106 = vmatpush.msra.mxu0 %v3105
        %v3107 = vand.u32 %v2753, 4294901760
        %3108 = vmatpush.msra.mxu0 %v3107
        %v3109 = vand.u32 %v2752, 4294901760
        %3110 = vmatmul.f32.gmra.mxu0 %v3109
        %v3111 = vpop.f32.mrf.mxu0
        %v3112 = vadd.f32 %v3075, %v3111
        %3113 = vdwg.mxu0
        %v3114 = vld [vmem:[#allocation14 + $0x100] sm:$0xff]
        %v3115 = vld [vmem:[#allocation14 + $0x108] sm:$0xff]
        %v3116 = vld [vmem:[#allocation14 + $0x110] sm:$0xff]
        %v3117 = vld [vmem:[#allocation14 + $0x118] sm:$0xff]
        %v3118 = vld [vmem:[#allocation14 + $0x120] sm:$0xff]
        %v3119 = vld [vmem:[#allocation14 + $0x128] sm:$0xff]
        %v3120 = vld [vmem:[#allocation14 + $0x130] sm:$0xff]
        %v3121 = vld [vmem:[#allocation14 + $0x138] sm:$0xff]
        %v3122 = vld [vmem:[#allocation14 + $0x140] sm:$0xff]
        %v3123 = vld [vmem:[#allocation14 + $0x148] sm:$0xff]
        %v3124 = vld [vmem:[#allocation14 + $0x150] sm:$0xff]
        %v3125 = vld [vmem:[#allocation14 + $0x158] sm:$0xff]
        %v3126 = vld [vmem:[#allocation14 + $0x160] sm:$0xff]
        %v3127 = vld [vmem:[#allocation14 + $0x168] sm:$0xff]
        %v3128 = vld [vmem:[#allocation14 + $0x170] sm:$0xff]
        %v3129 = vld [vmem:[#allocation14 + $0x178] sm:$0xff]
        %v3130 = vand.u32 %v3129, 4294901760
        %3131 = vmatpush.msra.mxu0 %v3130
        %v3132 = vand.u32 %v3128, 4294901760
        %3133 = vmatpush.msra.mxu0 %v3132
        %v3134 = vand.u32 %v3127, 4294901760
        %3135 = vmatpush.msra.mxu0 %v3134
        %v3136 = vand.u32 %v3126, 4294901760
        %3137 = vmatpush.msra.mxu0 %v3136
        %v3138 = vand.u32 %v3125, 4294901760
        %3139 = vmatpush.msra.mxu0 %v3138
        %v3140 = vand.u32 %v3124, 4294901760
        %3141 = vmatpush.msra.mxu0 %v3140
        %v3142 = vand.u32 %v3123, 4294901760
        %3143 = vmatpush.msra.mxu0 %v3142
        %v3144 = vand.u32 %v3122, 4294901760
        %3145 = vmatpush.msra.mxu0 %v3144
        %v3146 = vand.u32 %v3121, 4294901760
        %3147 = vmatpush.msra.mxu0 %v3146
        %v3148 = vand.u32 %v3120, 4294901760
        %3149 = vmatpush.msra.mxu0 %v3148
        %v3150 = vand.u32 %v3119, 4294901760
        %3151 = vmatpush.msra.mxu0 %v3150
        %v3152 = vand.u32 %v3118, 4294901760
        %3153 = vmatpush.msra.mxu0 %v3152
        %v3154 = vand.u32 %v3117, 4294901760
        %3155 = vmatpush.msra.mxu0 %v3154
        %v3156 = vand.u32 %v3116, 4294901760
        %3157 = vmatpush.msra.mxu0 %v3156
        %v3158 = vand.u32 %v3115, 4294901760
        %3159 = vmatpush.msra.mxu0 %v3158
        %v3160 = vand.u32 %v3114, 4294901760
        %3161 = vmatpush.msra.mxu0 %v3160
        %v3162 = vand.u32 %v3112, 4294901760
        %v3163 = vsub.f32 %v3112, %v3162
        %v3164 = vand.u32 %v3163, 4294901760
        %v3165 = vsub.f32 %v3163, %v3164
        %v3166 = vand.u32 %v3165, 4294901760
        %3167 = vmatmul.f32.gmra.mxu0 %v3166
        %v3168 = vpop.f32.mrf.mxu0
        %v3169 = vadd.f32 0.0, %v3168
        %3170 = vdwg.mxu0
        %v3171 = vand.u32 %v3129, 4294901760
        %v3172 = vsub.f32 %v3129, %v3171
        %v3173 = vand.u32 %v3172, 4294901760
        %v3174 = vsub.f32 %v3172, %v3173
        %v3175 = vand.u32 %v3174, 4294901760
        %3176 = vmatpush.msra.mxu0 %v3175
        %v3177 = vand.u32 %v3128, 4294901760
        %v3178 = vsub.f32 %v3128, %v3177
        %v3179 = vand.u32 %v3178, 4294901760
        %v3180 = vsub.f32 %v3178, %v3179
        %v3181 = vand.u32 %v3180, 4294901760
        %3182 = vmatpush.msra.mxu0 %v3181
        %v3183 = vand.u32 %v3127, 4294901760
        %v3184 = vsub.f32 %v3127, %v3183
        %v3185 = vand.u32 %v3184, 4294901760
        %v3186 = vsub.f32 %v3184, %v3185
        %v3187 = vand.u32 %v3186, 4294901760
        %3188 = vmatpush.msra.mxu0 %v3187
        %v3189 = vand.u32 %v3126, 4294901760
        %v3190 = vsub.f32 %v3126, %v3189
        %v3191 = vand.u32 %v3190, 4294901760
        %v3192 = vsub.f32 %v3190, %v3191
        %v3193 = vand.u32 %v3192, 4294901760
        %3194 = vmatpush.msra.mxu0 %v3193
        %v3195 = vand.u32 %v3125, 4294901760
        %v3196 = vsub.f32 %v3125, %v3195
        %v3197 = vand.u32 %v3196, 4294901760
        %v3198 = vsub.f32 %v3196, %v3197
        %v3199 = vand.u32 %v3198, 4294901760
        %3200 = vmatpush.msra.mxu0 %v3199
        %v3201 = vand.u32 %v3124, 4294901760
        %v3202 = vsub.f32 %v3124, %v3201
        %v3203 = vand.u32 %v3202, 4294901760
        %v3204 = vsub.f32 %v3202, %v3203
        %v3205 = vand.u32 %v3204, 4294901760
        %3206 = vmatpush.msra.mxu0 %v3205
        %v3207 = vand.u32 %v3123, 4294901760
        %v3208 = vsub.f32 %v3123, %v3207
        %v3209 = vand.u32 %v3208, 4294901760
        %v3210 = vsub.f32 %v3208, %v3209
        %v3211 = vand.u32 %v3210, 4294901760
        %3212 = vmatpush.msra.mxu0 %v3211
        %v3213 = vand.u32 %v3122, 4294901760
        %v3214 = vsub.f32 %v3122, %v3213
        %v3215 = vand.u32 %v3214, 4294901760
        %v3216 = vsub.f32 %v3214, %v3215
        %v3217 = vand.u32 %v3216, 4294901760
        %3218 = vmatpush.msra.mxu0 %v3217
        %v3219 = vand.u32 %v3121, 4294901760
        %v3220 = vsub.f32 %v3121, %v3219
        %v3221 = vand.u32 %v3220, 4294901760
        %v3222 = vsub.f32 %v3220, %v3221
        %v3223 = vand.u32 %v3222, 4294901760
        %3224 = vmatpush.msra.mxu0 %v3223
        %v3225 = vand.u32 %v3120, 4294901760
        %v3226 = vsub.f32 %v3120, %v3225
        %v3227 = vand.u32 %v3226, 4294901760
        %v3228 = vsub.f32 %v3226, %v3227
        %v3229 = vand.u32 %v3228, 4294901760
        %3230 = vmatpush.msra.mxu0 %v3229
        %v3231 = vand.u32 %v3119, 4294901760
        %v3232 = vsub.f32 %v3119, %v3231
        %v3233 = vand.u32 %v3232, 4294901760
        %v3234 = vsub.f32 %v3232, %v3233
        %v3235 = vand.u32 %v3234, 4294901760
        %3236 = vmatpush.msra.mxu0 %v3235
        %v3237 = vand.u32 %v3118, 4294901760
        %v3238 = vsub.f32 %v3118, %v3237
        %v3239 = vand.u32 %v3238, 4294901760
        %v3240 = vsub.f32 %v3238, %v3239
        %v3241 = vand.u32 %v3240, 4294901760
        %3242 = vmatpush.msra.mxu0 %v3241
        %v3243 = vand.u32 %v3117, 4294901760
        %v3244 = vsub.f32 %v3117, %v3243
        %v3245 = vand.u32 %v3244, 4294901760
        %v3246 = vsub.f32 %v3244, %v3245
        %v3247 = vand.u32 %v3246, 4294901760
        %3248 = vmatpush.msra.mxu0 %v3247
        %v3249 = vand.u32 %v3116, 4294901760
        %v3250 = vsub.f32 %v3116, %v3249
        %v3251 = vand.u32 %v3250, 4294901760
        %v3252 = vsub.f32 %v3250, %v3251
        %v3253 = vand.u32 %v3252, 4294901760
        %3254 = vmatpush.msra.mxu0 %v3253
        %v3255 = vand.u32 %v3115, 4294901760
        %v3256 = vsub.f32 %v3115, %v3255
        %v3257 = vand.u32 %v3256, 4294901760
        %v3258 = vsub.f32 %v3256, %v3257
        %v3259 = vand.u32 %v3258, 4294901760
        %3260 = vmatpush.msra.mxu0 %v3259
        %v3261 = vand.u32 %v3114, 4294901760
        %v3262 = vsub.f32 %v3114, %v3261
        %v3263 = vand.u32 %v3262, 4294901760
        %v3264 = vsub.f32 %v3262, %v3263
        %v3265 = vand.u32 %v3264, 4294901760
        %3266 = vmatpush.msra.mxu0 %v3265
        %v3267 = vand.u32 %v3112, 4294901760
        %3268 = vmatmul.f32.gmra.mxu0 %v3267
        %v3269 = vpop.f32.mrf.mxu0
        %v3270 = vadd.f32 %v3169, %v3269
        %3271 = vdwg.mxu0
        %v3272 = vand.u32 %v3129, 4294901760
        %v3273 = vsub.f32 %v3129, %v3272
        %3274 = vmatpush.msra.mxu0 %v3273
        %v3275 = vand.u32 %v3128, 4294901760
        %v3276 = vsub.f32 %v3128, %v3275
        %3277 = vmatpush.msra.mxu0 %v3276
        %v3278 = vand.u32 %v3127, 4294901760
        %v3279 = vsub.f32 %v3127, %v3278
        %3280 = vmatpush.msra.mxu0 %v3279
        %v3281 = vand.u32 %v3126, 4294901760
        %v3282 = vsub.f32 %v3126, %v3281
        %3283 = vmatpush.msra.mxu0 %v3282
        %v3284 = vand.u32 %v3125, 4294901760
        %v3285 = vsub.f32 %v3125, %v3284
        %3286 = vmatpush.msra.mxu0 %v3285
        %v3287 = vand.u32 %v3124, 4294901760
        %v3288 = vsub.f32 %v3124, %v3287
        %3289 = vmatpush.msra.mxu0 %v3288
        %v3290 = vand.u32 %v3123, 4294901760
        %v3291 = vsub.f32 %v3123, %v3290
        %3292 = vmatpush.msra.mxu0 %v3291
        %v3293 = vand.u32 %v3122, 4294901760
        %v3294 = vsub.f32 %v3122, %v3293
        %3295 = vmatpush.msra.mxu0 %v3294
        %v3296 = vand.u32 %v3121, 4294901760
        %v3297 = vsub.f32 %v3121, %v3296
        %3298 = vmatpush.msra.mxu0 %v3297
        %v3299 = vand.u32 %v3120, 4294901760
        %v3300 = vsub.f32 %v3120, %v3299
        %3301 = vmatpush.msra.mxu0 %v3300
        %v3302 = vand.u32 %v3119, 4294901760
        %v3303 = vsub.f32 %v3119, %v3302
        %3304 = vmatpush.msra.mxu0 %v3303
        %v3305 = vand.u32 %v3118, 4294901760
        %v3306 = vsub.f32 %v3118, %v3305
        %3307 = vmatpush.msra.mxu0 %v3306
        %v3308 = vand.u32 %v3117, 4294901760
        %v3309 = vsub.f32 %v3117, %v3308
        %3310 = vmatpush.msra.mxu0 %v3309
        %v3311 = vand.u32 %v3116, 4294901760
        %v3312 = vsub.f32 %v3116, %v3311
        %3313 = vmatpush.msra.mxu0 %v3312
        %v3314 = vand.u32 %v3115, 4294901760
        %v3315 = vsub.f32 %v3115, %v3314
        %3316 = vmatpush.msra.mxu0 %v3315
        %v3317 = vand.u32 %v3114, 4294901760
        %v3318 = vsub.f32 %v3114, %v3317
        %3319 = vmatpush.msra.mxu0 %v3318
        %v3320 = vand.u32 %v3112, 4294901760
        %v3321 = vsub.f32 %v3112, %v3320
        %3322 = vmatmul.f32.gmra.mxu0 %v3321
        %v3323 = vpop.f32.mrf.mxu0
        %v3324 = vadd.f32 %v3270, %v3323
        %3325 = vdwg.mxu0
        %v3326 = vand.u32 %v3129, 4294901760
        %3327 = vmatpush.msra.mxu0 %v3326
        %v3328 = vand.u32 %v3128, 4294901760
        %3329 = vmatpush.msra.mxu0 %v3328
        %v3330 = vand.u32 %v3127, 4294901760
        %3331 = vmatpush.msra.mxu0 %v3330
        %v3332 = vand.u32 %v3126, 4294901760
        %3333 = vmatpush.msra.mxu0 %v3332
        %v3334 = vand.u32 %v3125, 4294901760
        %3335 = vmatpush.msra.mxu0 %v3334
        %v3336 = vand.u32 %v3124, 4294901760
        %3337 = vmatpush.msra.mxu0 %v3336
        %v3338 = vand.u32 %v3123, 4294901760
        %3339 = vmatpush.msra.mxu0 %v3338
        %v3340 = vand.u32 %v3122, 4294901760
        %3341 = vmatpush.msra.mxu0 %v3340
        %v3342 = vand.u32 %v3121, 4294901760
        %3343 = vmatpush.msra.mxu0 %v3342
        %v3344 = vand.u32 %v3120, 4294901760
        %3345 = vmatpush.msra.mxu0 %v3344
        %v3346 = vand.u32 %v3119, 4294901760
        %3347 = vmatpush.msra.mxu0 %v3346
        %v3348 = vand.u32 %v3118, 4294901760
        %3349 = vmatpush.msra.mxu0 %v3348
        %v3350 = vand.u32 %v3117, 4294901760
        %3351 = vmatpush.msra.mxu0 %v3350
        %v3352 = vand.u32 %v3116, 4294901760
        %3353 = vmatpush.msra.mxu0 %v3352
        %v3354 = vand.u32 %v3115, 4294901760
        %3355 = vmatpush.msra.mxu0 %v3354
        %v3356 = vand.u32 %v3114, 4294901760
        %3357 = vmatpush.msra.mxu0 %v3356
        %v3358 = vand.u32 %v3112, 4294901760
        %v3359 = vsub.f32 %v3112, %v3358
        %v3360 = vand.u32 %v3359, 4294901760
        %3361 = vmatmul.f32.gmra.mxu0 %v3360
        %v3362 = vpop.f32.mrf.mxu0
        %v3363 = vadd.f32 %v3324, %v3362
        %3364 = vdwg.mxu0
        %v3365 = vand.u32 %v3129, 4294901760
        %v3366 = vsub.f32 %v3129, %v3365
        %v3367 = vand.u32 %v3366, 4294901760
        %3368 = vmatpush.msra.mxu0 %v3367
        %v3369 = vand.u32 %v3128, 4294901760
        %v3370 = vsub.f32 %v3128, %v3369
        %v3371 = vand.u32 %v3370, 4294901760
        %3372 = vmatpush.msra.mxu0 %v3371
        %v3373 = vand.u32 %v3127, 4294901760
        %v3374 = vsub.f32 %v3127, %v3373
        %v3375 = vand.u32 %v3374, 4294901760
        %3376 = vmatpush.msra.mxu0 %v3375
        %v3377 = vand.u32 %v3126, 4294901760
        %v3378 = vsub.f32 %v3126, %v3377
        %v3379 = vand.u32 %v3378, 4294901760
        %3380 = vmatpush.msra.mxu0 %v3379
        %v3381 = vand.u32 %v3125, 4294901760
        %v3382 = vsub.f32 %v3125, %v3381
        %v3383 = vand.u32 %v3382, 4294901760
        %3384 = vmatpush.msra.mxu0 %v3383
        %v3385 = vand.u32 %v3124, 4294901760
        %v3386 = vsub.f32 %v3124, %v3385
        %v3387 = vand.u32 %v3386, 4294901760
        %3388 = vmatpush.msra.mxu0 %v3387
        %v3389 = vand.u32 %v3123, 4294901760
        %v3390 = vsub.f32 %v3123, %v3389
        %v3391 = vand.u32 %v3390, 4294901760
        %3392 = vmatpush.msra.mxu0 %v3391
        %v3393 = vand.u32 %v3122, 4294901760
        %v3394 = vsub.f32 %v3122, %v3393
        %v3395 = vand.u32 %v3394, 4294901760
        %3396 = vmatpush.msra.mxu0 %v3395
        %v3397 = vand.u32 %v3121, 4294901760
        %v3398 = vsub.f32 %v3121, %v3397
        %v3399 = vand.u32 %v3398, 4294901760
        %3400 = vmatpush.msra.mxu0 %v3399
        %v3401 = vand.u32 %v3120, 4294901760
        %v3402 = vsub.f32 %v3120, %v3401
        %v3403 = vand.u32 %v3402, 4294901760
        %3404 = vmatpush.msra.mxu0 %v3403
        %v3405 = vand.u32 %v3119, 4294901760
        %v3406 = vsub.f32 %v3119, %v3405
        %v3407 = vand.u32 %v3406, 4294901760
        %3408 = vmatpush.msra.mxu0 %v3407
        %v3409 = vand.u32 %v3118, 4294901760
        %v3410 = vsub.f32 %v3118, %v3409
        %v3411 = vand.u32 %v3410, 4294901760
        %3412 = vmatpush.msra.mxu0 %v3411
        %v3413 = vand.u32 %v3117, 4294901760
        %v3414 = vsub.f32 %v3117, %v3413
        %v3415 = vand.u32 %v3414, 4294901760
        %3416 = vmatpush.msra.mxu0 %v3415
        %v3417 = vand.u32 %v3116, 4294901760
        %v3418 = vsub.f32 %v3116, %v3417
        %v3419 = vand.u32 %v3418, 4294901760
        %3420 = vmatpush.msra.mxu0 %v3419
        %v3421 = vand.u32 %v3115, 4294901760
        %v3422 = vsub.f32 %v3115, %v3421
        %v3423 = vand.u32 %v3422, 4294901760
        %3424 = vmatpush.msra.mxu0 %v3423
        %v3425 = vand.u32 %v3114, 4294901760
        %v3426 = vsub.f32 %v3114, %v3425
        %v3427 = vand.u32 %v3426, 4294901760
        %3428 = vmatpush.msra.mxu0 %v3427
        %v3429 = vand.u32 %v3112, 4294901760
        %3430 = vmatmul.f32.gmra.mxu0 %v3429
        %v3431 = vpop.f32.mrf.mxu0
        %v3432 = vadd.f32 %v3363, %v3431
        %3433 = vdwg.mxu0
        %v3434 = vand.u32 %v3129, 4294901760
        %3435 = vmatpush.msra.mxu0 %v3434
        %v3436 = vand.u32 %v3128, 4294901760
        %3437 = vmatpush.msra.mxu0 %v3436
        %v3438 = vand.u32 %v3127, 4294901760
        %3439 = vmatpush.msra.mxu0 %v3438
        %v3440 = vand.u32 %v3126, 4294901760
        %3441 = vmatpush.msra.mxu0 %v3440
        %v3442 = vand.u32 %v3125, 4294901760
        %3443 = vmatpush.msra.mxu0 %v3442
        %v3444 = vand.u32 %v3124, 4294901760
        %3445 = vmatpush.msra.mxu0 %v3444
        %v3446 = vand.u32 %v3123, 4294901760
        %3447 = vmatpush.msra.mxu0 %v3446
        %v3448 = vand.u32 %v3122, 4294901760
        %3449 = vmatpush.msra.mxu0 %v3448
        %v3450 = vand.u32 %v3121, 4294901760
        %3451 = vmatpush.msra.mxu0 %v3450
        %v3452 = vand.u32 %v3120, 4294901760
        %3453 = vmatpush.msra.mxu0 %v3452
        %v3454 = vand.u32 %v3119, 4294901760
        %3455 = vmatpush.msra.mxu0 %v3454
        %v3456 = vand.u32 %v3118, 4294901760
        %3457 = vmatpush.msra.mxu0 %v3456
        %v3458 = vand.u32 %v3117, 4294901760
        %3459 = vmatpush.msra.mxu0 %v3458
        %v3460 = vand.u32 %v3116, 4294901760
        %3461 = vmatpush.msra.mxu0 %v3460
        %v3462 = vand.u32 %v3115, 4294901760
        %3463 = vmatpush.msra.mxu0 %v3462
        %v3464 = vand.u32 %v3114, 4294901760
        %3465 = vmatpush.msra.mxu0 %v3464
        %v3466 = vand.u32 %v3112, 4294901760
        %3467 = vmatmul.f32.gmra.mxu0 %v3466
        %v3468 = vpop.f32.mrf.mxu0
        %v3469 = vadd.f32 %v3432, %v3468
        %3470 = vdwg.mxu0
        %3471 = vst [vmem:[%s648 + $0x10] sm:$0xff] %v3469
        %v3472 = vmul.f32 %v3112, %v3112
        %3473 = vadd.xlane.f32.xlu0 %v3472
        %v3474 = vpop.xlane.xlu0 %3473
        %v3475 = vmax.f32 %v3474, 1e-24
        %v3476 = vrsqrt.pop %v3475
        %v3477 = vmul.f32 %v3476, %v3475
        %v3478 = vmul.f32 %v3477, %v3476
        %v3479 = vmul.f32 0.5, %v3478
        %v3480 = vsub.f32 1.5, %v3479
        %v3481 = vmul.f32 %v3476, %v3480
        %vm3482 = vweird.f32 %v3475
        %vm3483 = vweird.f32 %v3476
        %vm3484 = vmor %vm3482, %vm3483
        %v3485 = vsel %vm3484, %v3476, %v3481
        %v3486 = vmul.f32 %v3112, %v3485
        %v3488 = vperm.slane %v672, 0
        %v3490 = vand.u32 %v671, 4294901760
        %3491 = vmatpush.msra.mxu0 %v3490
        %v3492 = vand.u32 %v670, 4294901760
        %3493 = vmatpush.msra.mxu0 %v3492
        %v3494 = vand.u32 %v669, 4294901760
        %3495 = vmatpush.msra.mxu0 %v3494
        %v3496 = vand.u32 %v668, 4294901760
        %3497 = vmatpush.msra.mxu0 %v3496
        %v3498 = vand.u32 %v667, 4294901760
        %3499 = vmatpush.msra.mxu0 %v3498
        %v3500 = vand.u32 %v666, 4294901760
        %3501 = vmatpush.msra.mxu0 %v3500
        %v3502 = vand.u32 %v665, 4294901760
        %3503 = vmatpush.msra.mxu0 %v3502
        %v3504 = vand.u32 %v664, 4294901760
        %3505 = vmatpush.msra.mxu0 %v3504
        %v3506 = vand.u32 %v663, 4294901760
        %3507 = vmatpush.msra.mxu0 %v3506
        %v3508 = vand.u32 %v662, 4294901760
        %3509 = vmatpush.msra.mxu0 %v3508
        %v3510 = vand.u32 %v661, 4294901760
        %3511 = vmatpush.msra.mxu0 %v3510
        %v3512 = vand.u32 %v660, 4294901760
        %3513 = vmatpush.msra.mxu0 %v3512
        %v3514 = vand.u32 %v659, 4294901760
        %3515 = vmatpush.msra.mxu0 %v3514
        %v3516 = vand.u32 %v658, 4294901760
        %3517 = vmatpush.msra.mxu0 %v3516
        %v3518 = vand.u32 %v657, 4294901760
        %3519 = vmatpush.msra.mxu0 %v3518
        %v3520 = vand.u32 %v656, 4294901760
        %3521 = vmatpush.msra.mxu0 %v3520
        %v3522 = vand.u32 %v1766, 4294901760
        %v3523 = vsub.f32 %v1766, %v3522
        %v3524 = vand.u32 %v3523, 4294901760
        %v3525 = vsub.f32 %v3523, %v3524
        %v3526 = vand.u32 %v3525, 4294901760
        %3527 = vmatmul.f32.gmra.mxu0 %v3526
        %v3528 = vpop.f32.mrf.mxu0
        %v3529 = vadd.f32 %v3488, %v3528
        %v3530 = vand.u32 %v2751, 4294901760
        %v3531 = vsub.f32 %v2751, %v3530
        %v3532 = vand.u32 %v3531, 4294901760
        %v3533 = vsub.f32 %v3531, %v3532
        %v3534 = vand.u32 %v3533, 4294901760
        %3535 = vmatmul.f32.gmra.mxu0 %v3534
        %v3536 = vpop.f32.mrf.mxu0
        %v3537 = vadd.f32 %v3488, %v3536
        %v3538 = vand.u32 %v3486, 4294901760
        %v3539 = vsub.f32 %v3486, %v3538
        %v3540 = vand.u32 %v3539, 4294901760
        %v3541 = vsub.f32 %v3539, %v3540
        %v3542 = vand.u32 %v3541, 4294901760
        %3543 = vmatmul.f32.gmra.mxu0 %v3542
        %v3544 = vpop.f32.mrf.mxu0
        %v3545 = vadd.f32 %v3488, %v3544
        %3546 = vdwg.mxu0
        %v3547 = vand.u32 %v671, 4294901760
        %v3548 = vsub.f32 %v671, %v3547
        %v3549 = vand.u32 %v3548, 4294901760
        %v3550 = vsub.f32 %v3548, %v3549
        %v3551 = vand.u32 %v3550, 4294901760
        %3552 = vmatpush.msra.mxu0 %v3551
        %v3553 = vand.u32 %v670, 4294901760
        %v3554 = vsub.f32 %v670, %v3553
        %v3555 = vand.u32 %v3554, 4294901760
        %v3556 = vsub.f32 %v3554, %v3555
        %v3557 = vand.u32 %v3556, 4294901760
        %3558 = vmatpush.msra.mxu0 %v3557
        %v3559 = vand.u32 %v669, 4294901760
        %v3560 = vsub.f32 %v669, %v3559
        %v3561 = vand.u32 %v3560, 4294901760
        %v3562 = vsub.f32 %v3560, %v3561
        %v3563 = vand.u32 %v3562, 4294901760
        %3564 = vmatpush.msra.mxu0 %v3563
        %v3565 = vand.u32 %v668, 4294901760
        %v3566 = vsub.f32 %v668, %v3565
        %v3567 = vand.u32 %v3566, 4294901760
        %v3568 = vsub.f32 %v3566, %v3567
        %v3569 = vand.u32 %v3568, 4294901760
        %3570 = vmatpush.msra.mxu0 %v3569
        %v3571 = vand.u32 %v667, 4294901760
        %v3572 = vsub.f32 %v667, %v3571
        %v3573 = vand.u32 %v3572, 4294901760
        %v3574 = vsub.f32 %v3572, %v3573
        %v3575 = vand.u32 %v3574, 4294901760
        %3576 = vmatpush.msra.mxu0 %v3575
        %v3577 = vand.u32 %v666, 4294901760
        %v3578 = vsub.f32 %v666, %v3577
        %v3579 = vand.u32 %v3578, 4294901760
        %v3580 = vsub.f32 %v3578, %v3579
        %v3581 = vand.u32 %v3580, 4294901760
        %3582 = vmatpush.msra.mxu0 %v3581
        %v3583 = vand.u32 %v665, 4294901760
        %v3584 = vsub.f32 %v665, %v3583
        %v3585 = vand.u32 %v3584, 4294901760
        %v3586 = vsub.f32 %v3584, %v3585
        %v3587 = vand.u32 %v3586, 4294901760
        %3588 = vmatpush.msra.mxu0 %v3587
        %v3589 = vand.u32 %v664, 4294901760
        %v3590 = vsub.f32 %v664, %v3589
        %v3591 = vand.u32 %v3590, 4294901760
        %v3592 = vsub.f32 %v3590, %v3591
        %v3593 = vand.u32 %v3592, 4294901760
        %3594 = vmatpush.msra.mxu0 %v3593
        %v3595 = vand.u32 %v663, 4294901760
        %v3596 = vsub.f32 %v663, %v3595
        %v3597 = vand.u32 %v3596, 4294901760
        %v3598 = vsub.f32 %v3596, %v3597
        %v3599 = vand.u32 %v3598, 4294901760
        %3600 = vmatpush.msra.mxu0 %v3599
        %v3601 = vand.u32 %v662, 4294901760
        %v3602 = vsub.f32 %v662, %v3601
        %v3603 = vand.u32 %v3602, 4294901760
        %v3604 = vsub.f32 %v3602, %v3603
        %v3605 = vand.u32 %v3604, 4294901760
        %3606 = vmatpush.msra.mxu0 %v3605
        %v3607 = vand.u32 %v661, 4294901760
        %v3608 = vsub.f32 %v661, %v3607
        %v3609 = vand.u32 %v3608, 4294901760
        %v3610 = vsub.f32 %v3608, %v3609
        %v3611 = vand.u32 %v3610, 4294901760
        %3612 = vmatpush.msra.mxu0 %v3611
        %v3613 = vand.u32 %v660, 4294901760
        %v3614 = vsub.f32 %v660, %v3613
        %v3615 = vand.u32 %v3614, 4294901760
        %v3616 = vsub.f32 %v3614, %v3615
        %v3617 = vand.u32 %v3616, 4294901760
        %3618 = vmatpush.msra.mxu0 %v3617
        %v3619 = vand.u32 %v659, 4294901760
        %v3620 = vsub.f32 %v659, %v3619
        %v3621 = vand.u32 %v3620, 4294901760
        %v3622 = vsub.f32 %v3620, %v3621
        %v3623 = vand.u32 %v3622, 4294901760
        %3624 = vmatpush.msra.mxu0 %v3623
        %v3625 = vand.u32 %v658, 4294901760
        %v3626 = vsub.f32 %v658, %v3625
        %v3627 = vand.u32 %v3626, 4294901760
        %v3628 = vsub.f32 %v3626, %v3627
        %v3629 = vand.u32 %v3628, 4294901760
        %3630 = vmatpush.msra.mxu0 %v3629
        %v3631 = vand.u32 %v657, 4294901760
        %v3632 = vsub.f32 %v657, %v3631
        %v3633 = vand.u32 %v3632, 4294901760
        %v3634 = vsub.f32 %v3632, %v3633
        %v3635 = vand.u32 %v3634, 4294901760
        %3636 = vmatpush.msra.mxu0 %v3635
        %v3637 = vand.u32 %v656, 4294901760
        %v3638 = vsub.f32 %v656, %v3637
        %v3639 = vand.u32 %v3638, 4294901760
        %v3640 = vsub.f32 %v3638, %v3639
        %v3641 = vand.u32 %v3640, 4294901760
        %3642 = vmatpush.msra.mxu0 %v3641
        %v3643 = vand.u32 %v1766, 4294901760
        %3644 = vmatmul.f32.gmra.mxu0 %v3643
        %v3645 = vpop.f32.mrf.mxu0
        %v3646 = vadd.f32 %v3529, %v3645
        %v3647 = vand.u32 %v2751, 4294901760
        %3648 = vmatmul.f32.gmra.mxu0 %v3647
        %v3649 = vpop.f32.mrf.mxu0
        %v3650 = vadd.f32 %v3537, %v3649
        %v3651 = vand.u32 %v3486, 4294901760
        %3652 = vmatmul.f32.gmra.mxu0 %v3651
        %v3653 = vpop.f32.mrf.mxu0
        %v3654 = vadd.f32 %v3545, %v3653
        %3655 = vdwg.mxu0
        %v3656 = vand.u32 %v671, 4294901760
        %v3657 = vsub.f32 %v671, %v3656
        %3658 = vmatpush.msra.mxu0 %v3657
        %v3659 = vand.u32 %v670, 4294901760
        %v3660 = vsub.f32 %v670, %v3659
        %3661 = vmatpush.msra.mxu0 %v3660
        %v3662 = vand.u32 %v669, 4294901760
        %v3663 = vsub.f32 %v669, %v3662
        %3664 = vmatpush.msra.mxu0 %v3663
        %v3665 = vand.u32 %v668, 4294901760
        %v3666 = vsub.f32 %v668, %v3665
        %3667 = vmatpush.msra.mxu0 %v3666
        %v3668 = vand.u32 %v667, 4294901760
        %v3669 = vsub.f32 %v667, %v3668
        %3670 = vmatpush.msra.mxu0 %v3669
        %v3671 = vand.u32 %v666, 4294901760
        %v3672 = vsub.f32 %v666, %v3671
        %3673 = vmatpush.msra.mxu0 %v3672
        %v3674 = vand.u32 %v665, 4294901760
        %v3675 = vsub.f32 %v665, %v3674
        %3676 = vmatpush.msra.mxu0 %v3675
        %v3677 = vand.u32 %v664, 4294901760
        %v3678 = vsub.f32 %v664, %v3677
        %3679 = vmatpush.msra.mxu0 %v3678
        %v3680 = vand.u32 %v663, 4294901760
        %v3681 = vsub.f32 %v663, %v3680
        %3682 = vmatpush.msra.mxu0 %v3681
        %v3683 = vand.u32 %v662, 4294901760
        %v3684 = vsub.f32 %v662, %v3683
        %3685 = vmatpush.msra.mxu0 %v3684
        %v3686 = vand.u32 %v661, 4294901760
        %v3687 = vsub.f32 %v661, %v3686
        %3688 = vmatpush.msra.mxu0 %v3687
        %v3689 = vand.u32 %v660, 4294901760
        %v3690 = vsub.f32 %v660, %v3689
        %3691 = vmatpush.msra.mxu0 %v3690
        %v3692 = vand.u32 %v659, 4294901760
        %v3693 = vsub.f32 %v659, %v3692
        %3694 = vmatpush.msra.mxu0 %v3693
        %v3695 = vand.u32 %v658, 4294901760
        %v3696 = vsub.f32 %v658, %v3695
        %3697 = vmatpush.msra.mxu0 %v3696
        %v3698 = vand.u32 %v657, 4294901760
        %v3699 = vsub.f32 %v657, %v3698
        %3700 = vmatpush.msra.mxu0 %v3699
        %v3701 = vand.u32 %v656, 4294901760
        %v3702 = vsub.f32 %v656, %v3701
        %3703 = vmatpush.msra.mxu0 %v3702
        %v3704 = vand.u32 %v1766, 4294901760
        %v3705 = vsub.f32 %v1766, %v3704
        %3706 = vmatmul.f32.gmra.mxu0 %v3705
        %v3707 = vpop.f32.mrf.mxu0
        %v3708 = vadd.f32 %v3646, %v3707
        %v3709 = vand.u32 %v2751, 4294901760
        %v3710 = vsub.f32 %v2751, %v3709
        %3711 = vmatmul.f32.gmra.mxu0 %v3710
        %v3712 = vpop.f32.mrf.mxu0
        %v3713 = vadd.f32 %v3650, %v3712
        %v3714 = vand.u32 %v3486, 4294901760
        %v3715 = vsub.f32 %v3486, %v3714
        %3716 = vmatmul.f32.gmra.mxu0 %v3715
        %v3717 = vpop.f32.mrf.mxu0
        %v3718 = vadd.f32 %v3654, %v3717
        %3719 = vdwg.mxu0
        %v3720 = vand.u32 %v671, 4294901760
        %3721 = vmatpush.msra.mxu0 %v3720
        %v3722 = vand.u32 %v670, 4294901760
        %3723 = vmatpush.msra.mxu0 %v3722
        %v3724 = vand.u32 %v669, 4294901760
        %3725 = vmatpush.msra.mxu0 %v3724
        %v3726 = vand.u32 %v668, 4294901760
        %3727 = vmatpush.msra.mxu0 %v3726
        %v3728 = vand.u32 %v667, 4294901760
        %3729 = vmatpush.msra.mxu0 %v3728
        %v3730 = vand.u32 %v666, 4294901760
        %3731 = vmatpush.msra.mxu0 %v3730
        %v3732 = vand.u32 %v665, 4294901760
        %3733 = vmatpush.msra.mxu0 %v3732
        %v3734 = vand.u32 %v664, 4294901760
        %3735 = vmatpush.msra.mxu0 %v3734
        %v3736 = vand.u32 %v663, 4294901760
        %3737 = vmatpush.msra.mxu0 %v3736
        %v3738 = vand.u32 %v662, 4294901760
        %3739 = vmatpush.msra.mxu0 %v3738
        %v3740 = vand.u32 %v661, 4294901760
        %3741 = vmatpush.msra.mxu0 %v3740
        %v3742 = vand.u32 %v660, 4294901760
        %3743 = vmatpush.msra.mxu0 %v3742
        %v3744 = vand.u32 %v659, 4294901760
        %3745 = vmatpush.msra.mxu0 %v3744
        %v3746 = vand.u32 %v658, 4294901760
        %3747 = vmatpush.msra.mxu0 %v3746
        %v3748 = vand.u32 %v657, 4294901760
        %3749 = vmatpush.msra.mxu0 %v3748
        %v3750 = vand.u32 %v656, 4294901760
        %3751 = vmatpush.msra.mxu0 %v3750
        %v3752 = vand.u32 %v1766, 4294901760
        %v3753 = vsub.f32 %v1766, %v3752
        %v3754 = vand.u32 %v3753, 4294901760
        %3755 = vmatmul.f32.gmra.mxu0 %v3754
        %v3756 = vpop.f32.mrf.mxu0
        %v3757 = vadd.f32 %v3708, %v3756
        %v3758 = vand.u32 %v2751, 4294901760
        %v3759 = vsub.f32 %v2751, %v3758
        %v3760 = vand.u32 %v3759, 4294901760
        %3761 = vmatmul.f32.gmra.mxu0 %v3760
        %v3762 = vpop.f32.mrf.mxu0
        %v3763 = vadd.f32 %v3713, %v3762
        %v3764 = vand.u32 %v3486, 4294901760
        %v3765 = vsub.f32 %v3486, %v3764
        %v3766 = vand.u32 %v3765, 4294901760
        %3767 = vmatmul.f32.gmra.mxu0 %v3766
        %v3768 = vpop.f32.mrf.mxu0
        %v3769 = vadd.f32 %v3718, %v3768
        %3770 = vdwg.mxu0
        %v3771 = vand.u32 %v671, 4294901760
        %v3772 = vsub.f32 %v671, %v3771
        %v3773 = vand.u32 %v3772, 4294901760
        %3774 = vmatpush.msra.mxu0 %v3773
        %v3775 = vand.u32 %v670, 4294901760
        %v3776 = vsub.f32 %v670, %v3775
        %v3777 = vand.u32 %v3776, 4294901760
        %3778 = vmatpush.msra.mxu0 %v3777
        %v3779 = vand.u32 %v669, 4294901760
        %v3780 = vsub.f32 %v669, %v3779
        %v3781 = vand.u32 %v3780, 4294901760
        %3782 = vmatpush.msra.mxu0 %v3781
        %v3783 = vand.u32 %v668, 4294901760
        %v3784 = vsub.f32 %v668, %v3783
        %v3785 = vand.u32 %v3784, 4294901760
        %3786 = vmatpush.msra.mxu0 %v3785
        %v3787 = vand.u32 %v667, 4294901760
        %v3788 = vsub.f32 %v667, %v3787
        %v3789 = vand.u32 %v3788, 4294901760
        %3790 = vmatpush.msra.mxu0 %v3789
        %v3791 = vand.u32 %v666, 4294901760
        %v3792 = vsub.f32 %v666, %v3791
        %v3793 = vand.u32 %v3792, 4294901760
        %3794 = vmatpush.msra.mxu0 %v3793
        %v3795 = vand.u32 %v665, 4294901760
        %v3796 = vsub.f32 %v665, %v3795
        %v3797 = vand.u32 %v3796, 4294901760
        %3798 = vmatpush.msra.mxu0 %v3797
        %v3799 = vand.u32 %v664, 4294901760
        %v3800 = vsub.f32 %v664, %v3799
        %v3801 = vand.u32 %v3800, 4294901760
        %3802 = vmatpush.msra.mxu0 %v3801
        %v3803 = vand.u32 %v663, 4294901760
        %v3804 = vsub.f32 %v663, %v3803
        %v3805 = vand.u32 %v3804, 4294901760
        %3806 = vmatpush.msra.mxu0 %v3805
        %v3807 = vand.u32 %v662, 4294901760
        %v3808 = vsub.f32 %v662, %v3807
        %v3809 = vand.u32 %v3808, 4294901760
        %3810 = vmatpush.msra.mxu0 %v3809
        %v3811 = vand.u32 %v661, 4294901760
        %v3812 = vsub.f32 %v661, %v3811
        %v3813 = vand.u32 %v3812, 4294901760
        %3814 = vmatpush.msra.mxu0 %v3813
        %v3815 = vand.u32 %v660, 4294901760
        %v3816 = vsub.f32 %v660, %v3815
        %v3817 = vand.u32 %v3816, 4294901760
        %3818 = vmatpush.msra.mxu0 %v3817
        %v3819 = vand.u32 %v659, 4294901760
        %v3820 = vsub.f32 %v659, %v3819
        %v3821 = vand.u32 %v3820, 4294901760
        %3822 = vmatpush.msra.mxu0 %v3821
        %v3823 = vand.u32 %v658, 4294901760
        %v3824 = vsub.f32 %v658, %v3823
        %v3825 = vand.u32 %v3824, 4294901760
        %3826 = vmatpush.msra.mxu0 %v3825
        %v3827 = vand.u32 %v657, 4294901760
        %v3828 = vsub.f32 %v657, %v3827
        %v3829 = vand.u32 %v3828, 4294901760
        %3830 = vmatpush.msra.mxu0 %v3829
        %v3831 = vand.u32 %v656, 4294901760
        %v3832 = vsub.f32 %v656, %v3831
        %v3833 = vand.u32 %v3832, 4294901760
        %3834 = vmatpush.msra.mxu0 %v3833
        %v3835 = vand.u32 %v1766, 4294901760
        %3836 = vmatmul.f32.gmra.mxu0 %v3835
        %v3837 = vpop.f32.mrf.mxu0
        %v3838 = vadd.f32 %v3757, %v3837
        %v3839 = vand.u32 %v2751, 4294901760
        %3840 = vmatmul.f32.gmra.mxu0 %v3839
        %v3841 = vpop.f32.mrf.mxu0
        %v3842 = vadd.f32 %v3763, %v3841
        %v3843 = vand.u32 %v3486, 4294901760
        %3844 = vmatmul.f32.gmra.mxu0 %v3843
        %v3845 = vpop.f32.mrf.mxu0
        %v3846 = vadd.f32 %v3769, %v3845
        %3847 = vdwg.mxu0
        %v3848 = vand.u32 %v671, 4294901760
        %3849 = vmatpush.msra.mxu0 %v3848
        %v3850 = vand.u32 %v670, 4294901760
        %3851 = vmatpush.msra.mxu0 %v3850
        %v3852 = vand.u32 %v669, 4294901760
        %3853 = vmatpush.msra.mxu0 %v3852
        %v3854 = vand.u32 %v668, 4294901760
        %3855 = vmatpush.msra.mxu0 %v3854
        %v3856 = vand.u32 %v667, 4294901760
        %3857 = vmatpush.msra.mxu0 %v3856
        %v3858 = vand.u32 %v666, 4294901760
        %3859 = vmatpush.msra.mxu0 %v3858
        %v3860 = vand.u32 %v665, 4294901760
        %3861 = vmatpush.msra.mxu0 %v3860
        %v3862 = vand.u32 %v664, 4294901760
        %3863 = vmatpush.msra.mxu0 %v3862
        %v3864 = vand.u32 %v663, 4294901760
        %3865 = vmatpush.msra.mxu0 %v3864
        %v3866 = vand.u32 %v662, 4294901760
        %3867 = vmatpush.msra.mxu0 %v3866
        %v3868 = vand.u32 %v661, 4294901760
        %3869 = vmatpush.msra.mxu0 %v3868
        %v3870 = vand.u32 %v660, 4294901760
        %3871 = vmatpush.msra.mxu0 %v3870
        %v3872 = vand.u32 %v659, 4294901760
        %3873 = vmatpush.msra.mxu0 %v3872
        %v3874 = vand.u32 %v658, 4294901760
        %3875 = vmatpush.msra.mxu0 %v3874
        %v3876 = vand.u32 %v657, 4294901760
        %3877 = vmatpush.msra.mxu0 %v3876
        %v3878 = vand.u32 %v656, 4294901760
        %3879 = vmatpush.msra.mxu0 %v3878
        %v3880 = vand.u32 %v1766, 4294901760
        %3881 = vmatmul.f32.gmra.mxu0 %v3880
        %v3882 = vpop.f32.mrf.mxu0
        %v3883 = vadd.f32 %v3838, %v3882
        %v3884 = vand.u32 %v2751, 4294901760
        %3885 = vmatmul.f32.gmra.mxu0 %v3884
        %v3886 = vpop.f32.mrf.mxu0
        %v3887 = vadd.f32 %v3842, %v3886
        %v3888 = vand.u32 %v3486, 4294901760
        %3889 = vmatmul.f32.gmra.mxu0 %v3888
        %v3890 = vpop.f32.mrf.mxu0
        %v3891 = vadd.f32 %v3846, %v3890
        %3892 = vdwg.mxu0
        %v3893 = vtanh.pop %v3883
        %v3894 = vtanh.pop %v3887
        %v3895 = vtanh.pop %v3891
        %v3897 = vperm.slane %v673, 0
        %v3899 = vmul.f32 %v3893, %v3897
        %v3900 = vmul.f32 %v3894, %v3897
        %v3901 = vmul.f32 %v3895, %v3897
        %3902 = vadd.xlane.f32.xlu0 %v3899
        %v3903 = vpop.xlane.xlu0 %3902
        %3904 = vadd.xlane.f32.xlu0 %v3900
        %v3905 = vpop.xlane.xlu0 %3904
        %3906 = vadd.xlane.f32.xlu0 %v3901
        %v3907 = vpop.xlane.xlu0 %3906
        %s3908 = smul.u32 %s41, 8
        %v3909 = vlaneseq
        %v3910 = vshrl.u32 %v3909, 7
        %v3911 = vstv %s3908
        %v3912 = vadd.s32 %v3910, %v3911
        %vm3913 = vcmp.lt.s32.totalorder %v3912, 20
        %v3914 = vlaneseq
        %v3915 = vand.u32 %v3914, 127
        %v3916 = vsel %vm3913, %v3903, 0.0
        %vm3917 = vcmp.eq.s32.totalorder %v3915, 0
        %vm3918 = vcmask 7168
        %v3919 = vsel %vm3918, %v3916, 0.0
        %3920 = vadd.xlane.f32.xlu0 %v3919
        %v3921 = vpop.xlane.xlu0 %3920
        %v3922 = vrot.slane %v3921, 4
        %v3923 = vadd.f32 %v3921, %v3922
        %v3924 = vrot.slane %v3923, 2
        %v3925 = vadd.f32 %v3923, %v3924
        %v3926 = vrot.slane %v3925, 1
        %v3927 = vadd.f32 %v3925, %v3926
        %s3928 = vtos %v3927
        %v3929 = vstv %s3928
        %v3930 = vsel %vm3917, %v3929, 0.0
        %v3931 = vsel %vm3913, %v3905, 0.0
        %vm3932 = vcmp.eq.s32.totalorder %v3915, 1
        %v3933 = vsel %vm3918, %v3931, 0.0
        %3934 = vadd.xlane.f32.xlu0 %v3933
        %v3935 = vpop.xlane.xlu0 %3934
        %v3936 = vrot.slane %v3935, 4
        %v3937 = vadd.f32 %v3935, %v3936
        %v3938 = vrot.slane %v3937, 2
        %v3939 = vadd.f32 %v3937, %v3938
        %v3940 = vrot.slane %v3939, 1
        %v3941 = vadd.f32 %v3939, %v3940
        %s3942 = vtos %v3941
        %v3943 = vstv %s3942
        %v3944 = vsel %vm3932, %v3943, %v3930
        %v3945 = vsel %vm3913, %v3907, 0.0
        %vm3946 = vcmp.eq.s32.totalorder %v3915, 2
        %v3947 = vsel %vm3918, %v3945, 0.0
        %3948 = vadd.xlane.f32.xlu0 %v3947
        %v3949 = vpop.xlane.xlu0 %3948
        %v3950 = vrot.slane %v3949, 4
        %v3951 = vadd.f32 %v3949, %v3950
        %v3952 = vrot.slane %v3951, 2
        %v3953 = vadd.f32 %v3951, %v3952
        %v3954 = vrot.slane %v3953, 1
        %v3955 = vadd.f32 %v3953, %v3954
        %s3956 = vtos %v3955
        %v3957 = vstv %s3956
        %v3958 = vsel %vm3946, %v3957, %v3944
        %3959 = vst [vmem:[%s655] sm:$0xff] %v3958
        %s3960 = sand.u32 %s337, 1
        %s3961 = scalar_lea.sflag [#allocation4], %s3960
        %s3962 = sand.u32 %s337, 1
        %s3963 = smul.addr %s3962, 24
        %s3964 = scalar_lea.vmem [#allocation16], %s3963
        %s3965 = sand.u32 %s363, 1
        %s3966 = scalar_lea.sflag [#allocation18], %s3965
        %s3967 = sand.u32 %s363, 1
        %s3968 = smul.addr %s3967, 8
        %s3969 = scalar_lea.vmem [#allocation17], %s3968
        // Predicated region
        $region105: #{tpu_custom_call.1} parent=71 // pred_check
          %p3970 = pneg %p347
        $region106: #{tpu_custom_call.1} parent=71 // pred_check_branch
          %3972 = sbr.rel (%p3970) target = $region108
        $region107: #{tpu_custom_call.1} parent=71 // pred_region
          %3974 = vsyncadd %s3961, 0
          %s3975 = smul.addr %s41, 3
          %s3976 = smul.addr %s3975, 8
          %s3977 = scalar_lea.hbm %s13, %s3976
          %s3979 = sshll.u32 %s3964, 4
          %s3980 = int_to_ptr.vmem [resolvable:$true] %s3979
          %s3981 = sshll.u32 %s3977, 4
          %s3982 = int_to_ptr.hbm [resolvable:$true] %s3981
          %3984 = dma.vmem_to_hbm [thread:$0]  %s3980, 384, %s3982, %s3961
        $region108: #{tpu_custom_call.1} parent=71 // pred_fallthru
          _
        // Predicated region
        $region109: #{tpu_custom_call.1} parent=71 // pred_check
          %p3985 = pneg %p373
        $region110: #{tpu_custom_call.1} parent=71 // pred_check_branch
          %3987 = sbr.rel (%p3985) target = $region112
        $region111: #{tpu_custom_call.1} parent=71 // pred_region
          %3989 = vsyncadd %s3966, 0
          %s3990 = smul.addr %s41, 8
          %s3991 = scalar_lea.hbm %s14, %s3990
          %s3993 = sshll.u32 %s3969, 4
          %s3994 = int_to_ptr.vmem [resolvable:$true] %s3993
          %s3995 = sshll.u32 %s3991, 4
          %s3996 = int_to_ptr.hbm [resolvable:$true] %s3995
          %3998 = dma.vmem_to_hbm [thread:$0]  %s3994, 128, %s3996, %s3966
        $region112: #{tpu_custom_call.1} parent=71 // pred_fallthru
          _
      $region72: #{tpu_custom_call.1} parent=5 // pred_fallthru
        _
      %p3999 = scmp.le.s32.totalorder 2, %s36
      // Predicated region
      $region113: #{tpu_custom_call.1} parent=5 // pred_check
        %p4000 = pneg %p3999
      $region114: #{tpu_custom_call.1} parent=5 // pred_check_branch
        %4002 = sbr.rel (%p4000) target = $region116
      $region115: #{tpu_custom_call.1} parent=5 // pred_region
        %s4003 = ssub.s32 %s36, 2
        // Predicated region
        $region117: #{tpu_custom_call.1} parent=115 // pred_check
          %p4004 = pneg %p353
        $region118: #{tpu_custom_call.1} parent=115 // pred_check_branch
          %4006 = sbr.rel (%p4004) target = $region120
        $region119: #{tpu_custom_call.1} parent=115 // pred_region
          %s4007 = sand.u32 %s338, 1
          %s4008 = scalar_lea.sflag [#allocation4], %s4007
          %s4009 = sand.u32 %s338, 1
          %s4010 = smul.addr %s4009, 24
          %s4011 = scalar_lea.vmem [#allocation16], %s4010
          %4013 = dma.done %s4008, 384
        $region120: #{tpu_custom_call.1} parent=115 // pred_fallthru
          _
        // Predicated region
        $region121: #{tpu_custom_call.1} parent=115 // pred_check
          %p4014 = pneg %p379
        $region122: #{tpu_custom_call.1} parent=115 // pred_check_branch
          %4016 = sbr.rel (%p4014) target = $region124
        $region123: #{tpu_custom_call.1} parent=115 // pred_region
          %s4017 = sand.u32 %s364, 1
          %s4018 = scalar_lea.sflag [#allocation18], %s4017
          %s4019 = sand.u32 %s364, 1
          %s4020 = smul.addr %s4019, 8
          %s4021 = scalar_lea.vmem [#allocation17], %s4020
          %4023 = dma.done %s4018, 128
        $region124: #{tpu_custom_call.1} parent=115 // pred_fallthru
          _
      $region116: #{tpu_custom_call.1} parent=5 // pred_fallthru
        _
    $region6: #{tpu_custom_call.1} parent=1 // loop_footer
      %s40 = sadd.s32 1, %s36
    $region7: #{tpu_custom_call.1} parent=1 // loop_footer_branch
      %35 = sbr.rel target = $region3
    $region8: #{tpu_custom_call.1} parent=1 // loop_exit
      _
    %4024 = vsyncpa [#allocation3], 1
    %s4025 = scalar_lea.sflag [#allocation3], 1
    %4026 = vsyncpa %s4025, 1
    %4027 = vsyncpa [#allocation6], 1
    %s4028 = scalar_lea.sflag [#allocation6], 1
    %4029 = vsyncpa %s4028, 1
    %4030 = vsyncpa [#allocation9], 1
    %4031 = vsyncpa [#allocation12], 1
    %4032 = vsyncpa [#allocation15], 1
    %4033 = vsyncpa [#allocation4], 1
    %s4034 = scalar_lea.sflag [#allocation4], 1
    %4035 = vsyncpa %s4034, 1
    %4036 = vsyncpa [#allocation18], 1
    %s4037 = scalar_lea.sflag [#allocation18], 1
    %4038 = vsyncpa %s4037, 1

</llo_original>
